<compile_context>
chip_gen: v7x
topology: tpu7x:2x2x1
jax: 0.10.0
libtpu: 0.0.40
codegen_flags: <defaults>
</compile_context>

<pallas_src>
import functools
import math

import jax
import jax.numpy as jnp
import numpy as np
from jax.experimental import pallas as pl
from jax.experimental.pallas import tpu as pltpu

D_MODEL = 32
N_HEADS = 4
HEAD_DIM = D_MODEL // N_HEADS
D_FF = 64
N_LAYERS = 2
EPS = 1e-5
LANES = 128

# ---- packed-parameter slab layout (row offsets within one layer block) ------
#   rows   0: 32   wqkv (C, 3C)   lanes 0:96   (softmax scale folded into Q)
#   rows  32: 64   wo   (C, C)    lanes 0:32
#   rows  64: 96   w1   (C, Dff)  lanes 0:64
#   rows  96:160   w2   (Dff, C)  lanes 0:32
#   row  160       bqkv           lanes 0:96
#   row  161       bo             lanes 0:32
#   row  162       b1             lanes 0:64
#   row  163       b2             lanes 0:32
#   rows 164:168   ln: g1, be1, g2, be2   lanes 0:32
LAYER_ROWS = 168                       # multiple of 8 (sublane-aligned strides)
FINAL_ROWS = 8                         # final-norm gamma/beta (+ padding)
TOTAL_ROWS = N_LAYERS * LAYER_ROWS + FINAL_ROWS


def _layer_norm(x, gamma, beta):
    mu = jnp.mean(x, axis=-1, keepdims=True)
    var = jnp.mean((x - mu) ** 2, axis=-1, keepdims=True)
    return (x - mu) * jax.lax.rsqrt(var + EPS) * gamma + beta


def encoder_stack_kernel(n_batch, seq_len, x_ref, p_ref, o_ref):
    H, Dh, C = N_HEADS, HEAD_DIM, D_MODEL
    N, L = n_batch, seq_len
    R = N * L                 # all batch rows folded together for row-wise ops
    G = LANES // C            # lane groups in the packed (RP, 128) I/O slabs
    RP = R // G

    # ---- unpack lane-dense input slab (RP, 128) -> (R, C) -------------------
    xp = x_ref[...]
    x = jnp.concatenate([xp[:, k * C:(k + 1) * C] for k in range(G)],
                        axis=0).astype(jnp.float32)                     # (R, C)

    for l in range(N_LAYERS):                 # static unroll (N_LAYERS is tiny)
        base = l * LAYER_ROWS
        wqkv = p_ref[base + 0:base + 32, 0:3 * C]        # (C, 3C)
        wo = p_ref[base + 32:base + 64, 0:C]             # (C, C)
        w1 = p_ref[base + 64:base + 96, 0:D_FF]          # (C, Dff)
        w2 = p_ref[base + 96:base + 160, 0:C]            # (Dff, C)
        bqkv = p_ref[base + 160:base + 161, 0:3 * C]     # (1, 3C)
        bo = p_ref[base + 161:base + 162, 0:C]
        b1 = p_ref[base + 162:base + 163, 0:D_FF]
        b2 = p_ref[base + 163:base + 164, 0:C]
        g1 = p_ref[base + 164:base + 165, 0:C]
        be1 = p_ref[base + 165:base + 166, 0:C]
        g2 = p_ref[base + 166:base + 167, 0:C]
        be2 = p_ref[base + 167:base + 168, 0:C]

        # ---- QKV: one (R,C)@(C,3C) MXU matmul, head-major column layout -----
        qkv = jnp.dot(x, wqkv, preferred_element_type=jnp.float32) + bqkv

        # split heads into a head-batched (H*N, L, Dh) layout for attention
        def split(comp):
            parts = [qkv[:, h * 3 * Dh + comp * Dh: h * 3 * Dh + (comp + 1) * Dh]
                     .reshape(1, R, Dh) for h in range(H)]
            return jnp.concatenate(parts, axis=0).reshape(H * N, L, Dh)

        q, k, v = split(0), split(1), split(2)

        # scores / softmax / context (tiny batched dots; scale already in Wq)
        s = jnp.einsum("bld,bmd->blm", q, k, preferred_element_type=jnp.float32)
        s = s - jnp.max(s, axis=-1, keepdims=True)
        p = jnp.exp(s)
        p = p / jnp.sum(p, axis=-1, keepdims=True)       # exact divide
        ctx = jnp.einsum("blm,bmd->bld", p, v,
                         preferred_element_type=jnp.float32)           # (HN,L,Dh)

        # merge heads back into lanes and project with one (R,C)@(C,C) matmul
        ctx_h = ctx.reshape(H, R, Dh)
        ctx2d = jnp.concatenate([ctx_h[h] for h in range(H)], axis=-1)  # (R, C)
        attn = jnp.dot(ctx2d, wo, preferred_element_type=jnp.float32) + bo

        # ---- post-LN #1, FFN, post-LN #2 -------------------------------------
        y = _layer_norm(x + attn, g1, be1)
        h1 = jnp.maximum(
            jnp.dot(y, w1, preferred_element_type=jnp.float32) + b1, 0.0)
        h2 = jnp.dot(h1, w2, preferred_element_type=jnp.float32) + b2
        x = _layer_norm(y + h2, g2, be2)

    # ---- final norm (Encoder.norm) -------------------------------------------
    fbase = N_LAYERS * LAYER_ROWS
    out = _layer_norm(x, p_ref[fbase:fbase + 1, 0:C],
                      p_ref[fbase + 1:fbase + 2, 0:C])                  # (R, C)

    # ---- pack lane-dense output slab (R, C) -> (RP, 128) ---------------------
    o_ref[...] = jnp.concatenate(
        [out[k * RP:(k + 1) * RP, :] for k in range(G)],
        axis=-1).astype(o_ref.dtype)


def encoder_forward_pallas(x, params_slab):
    """x: (N, L, C).  params_slab: (TOTAL_ROWS, 128) packed parameter slab."""
    N, L, C = x.shape
    R = N * L
    G = LANES // C
    RP = R // G
    assert G * C == LANES and RP * G == R, "demo shapes must tile 128 lanes"

    # lane-dense input slab: packed[j, k*C+c] = x2d[k*RP + j, c]
    x2d = x.reshape(R, C)
    x_packed = x2d.reshape(G, RP, C).transpose(1, 0, 2).reshape(RP, LANES)

    out_packed = pl.pallas_call(
        functools.partial(encoder_stack_kernel, N, L),
        out_shape=jax.ShapeDtypeStruct((RP, LANES), x.dtype),
        grid=(1,),
        in_specs=[pl.BlockSpec((RP, LANES), lambda i: (0, 0)),
                  pl.BlockSpec(params_slab.shape, lambda i: (0, 0))],
        out_specs=pl.BlockSpec((RP, LANES), lambda i: (0, 0)),
        compiler_params=pltpu.CompilerParams(
            dimension_semantics=("arbitrary",)),
    )(x_packed, params_slab)

    # invert the lane-dense packing
    out2d = out_packed.reshape(RP, G, C).transpose(1, 0, 2).reshape(R, C)
    return out2d.reshape(N, L, C)


# ---------------- parameter construction & packing ---------------------------
def make_layer_params(key):
    """Logical (PyTorch-style) parameters for one encoder layer."""
    ks = jax.random.split(key, 10)
    s = 0.1
    wq = s * jax.random.normal(ks[0], (D_MODEL, D_MODEL), jnp.float32)
    wk = s * jax.random.normal(ks[1], (D_MODEL, D_MODEL), jnp.float32)
    wv = s * jax.random.normal(ks[2], (D_MODEL, D_MODEL), jnp.float32)
    wo = s * jax.random.normal(ks[3], (D_MODEL, D_MODEL), jnp.float32)
    w1 = s * jax.random.normal(ks[4], (D_MODEL, D_FF), jnp.float32)
    w2 = s * jax.random.normal(ks[5], (D_FF, D_MODEL), jnp.float32)
    bq = s * jax.random.normal(ks[6], (D_MODEL,), jnp.float32)
    bk = s * jax.random.normal(ks[7], (D_MODEL,), jnp.float32)
    bv = s * jax.random.normal(ks[8], (D_MODEL,), jnp.float32)
    bo = s * jax.random.normal(ks[9], (D_MODEL,), jnp.float32)
    b1 = jnp.zeros((D_FF,), jnp.float32)
    b2 = jnp.zeros((D_MODEL,), jnp.float32)
    g1 = jnp.ones((D_MODEL,), jnp.float32)
    be1 = jnp.zeros((D_MODEL,), jnp.float32)
    g2 = jnp.ones((D_MODEL,), jnp.float32)
    be2 = jnp.zeros((D_MODEL,), jnp.float32)
    return (wq, bq, wk, bk, wv, bv, wo, bo, w1, b1, w2, b2, g1, be1, g2, be2)


def pack_params(layer_params, norm_gamma, norm_beta):
    """One-time host-side packing into a single lane-padded (rows, 128) slab."""
    H, Dh, C = N_HEADS, HEAD_DIM, D_MODEL
    scale = 1.0 / math.sqrt(Dh)
    slab = np.zeros((TOTAL_ROWS, LANES), np.float32)
    for l, p in enumerate(layer_params):
        (wq, bq, wk, bk, wv, bv, wo, bo, w1, b1, w2, b2, g1, be1, g2, be2) = \
            [np.asarray(a, np.float32) for a in p]
        base = l * LAYER_ROWS
        # head-major packed QKV columns [q_h | k_h | v_h] per head; scale in Q
        wq_h = (wq * scale).reshape(C, H, Dh)
        wk_h = wk.reshape(C, H, Dh)
        wv_h = wv.reshape(C, H, Dh)
        wqkv = np.concatenate([wq_h, wk_h, wv_h], axis=-1).reshape(C, 3 * C)
        bqkv = np.concatenate([(bq * scale).reshape(H, Dh),
                               bk.reshape(H, Dh),
                               bv.reshape(H, Dh)], axis=-1).reshape(3 * C)
        slab[base + 0:base + 32, 0:3 * C] = wqkv
        slab[base + 32:base + 64, 0:C] = wo
        slab[base + 64:base + 96, 0:D_FF] = w1
        slab[base + 96:base + 160, 0:C] = w2
        slab[base + 160, 0:3 * C] = bqkv
        slab[base + 161, 0:C] = bo
        slab[base + 162, 0:D_FF] = b1
        slab[base + 163, 0:C] = b2
        slab[base + 164, 0:C] = g1
        slab[base + 165, 0:C] = be1
        slab[base + 166, 0:C] = g2
        slab[base + 167, 0:C] = be2
    fbase = N_LAYERS * LAYER_ROWS
    slab[fbase, 0:C] = np.asarray(norm_gamma, np.float32)
    slab[fbase + 1, 0:C] = np.asarray(norm_beta, np.float32)
    return jnp.asarray(slab)


# ---------------- pure-JAX reference (same math, logical params) -------------
def ref_layer(x, p):
    (wq, bq, wk, bk, wv, bv, wo, bo, w1, b1, w2, b2, g1, be1, g2, be2) = p
    q = x @ wq + bq
    k = x @ wk + bk
    v = x @ wv + bv
    N, L, C = x.shape
    qh = q.reshape(N, L, N_HEADS, HEAD_DIM)
    kh = k.reshape(N, L, N_HEADS, HEAD_DIM)
    vh = v.reshape(N, L, N_HEADS, HEAD_DIM)
    s = jnp.einsum("nlhd,nmhd->nhlm", qh, kh) / math.sqrt(HEAD_DIM)
    a = jax.nn.softmax(s, axis=-1)
    o = jnp.einsum("nhlm,nmhd->nlhd", a, vh).reshape(N, L, C)
    attn = o @ wo + bo
    y = _layer_norm(x + attn, g1, be1)
    h = jnp.maximum(y @ w1 + b1, 0.0) @ w2 + b2
    return _layer_norm(y + h, g2, be2)


def ref_forward(x, layer_params, g, b):
    for p in layer_params:
        x = ref_layer(x, p)
    return _layer_norm(x, g, b)


if __name__ == "__main__":
    N, L, C = 2, 8, D_MODEL
    root = jax.random.PRNGKey(0)
    kx, *kls = jax.random.split(root, 1 + N_LAYERS)
    x = jax.random.normal(kx, (N, L, C), jnp.float32)

    layer_params = tuple(make_layer_params(k) for k in kls)
    norm_gamma = jnp.ones((D_MODEL,), jnp.float32)
    norm_beta = jnp.zeros((D_MODEL,), jnp.float32)
    params_slab = pack_params(layer_params, norm_gamma, norm_beta)

    fwd = jax.jit(encoder_forward_pallas)
    out = jax.block_until_ready(fwd(x, params_slab))

    ref = ref_forward(x, layer_params, norm_gamma, norm_beta)
    assert out.shape == (N, L, C)
    assert jnp.allclose(out, ref, atol=1e-4, rtol=1e-4), "mismatch vs reference"

    print("KERNEL_OK")
</pallas_src>

<mosaic_0001>
module attributes {stable_mosaic.version = 11 : i64} {
  func.func @encoder_stack_kernel(%arg0: i32, %arg1: memref<4x128xf32, #tpu.memory_space<vmem>>, %arg2: memref<344x128xf32, #tpu.memory_space<vmem>>, %arg3: memref<4x128xf32, #tpu.memory_space<vmem>>) attributes {dimension_semantics = [#tpu.dimension_semantics<arbitrary>], iteration_bounds = array<i64: 1>, scalar_prefetch = 0 : i64, scratch_operands = 0 : i64, tpu.core_type = #tpu.core_type<tc>, window_params = [{pipeline_mode = #tpu.pipeline_mode<synchronous>, transform_indices = @transform_0, window_bounds = array<i64: 4, 128>}, {pipeline_mode = #tpu.pipeline_mode<synchronous>, transform_indices = @transform_1, window_bounds = array<i64: 344, 128>}, {pipeline_mode = #tpu.pipeline_mode<synchronous>, transform_indices = @transform_2, window_bounds = array<i64: 4, 128>}]} {
    %c0 = arith.constant 0 : index
    %c0_0 = arith.constant 0 : index
    %0 = vector.load %arg1[%c0, %c0_0] : memref<4x128xf32, #tpu.memory_space<vmem>>, vector<4x128xf32>
    %1 = vector.extract_strided_slice %0 {offsets = [0, 0], sizes = [4, 32], strides = [1, 1]} : vector<4x128xf32> to vector<4x32xf32>
    %2 = vector.extract_strided_slice %0 {offsets = [0, 32], sizes = [4, 32], strides = [1, 1]} : vector<4x128xf32> to vector<4x32xf32>
    %3 = vector.extract_strided_slice %0 {offsets = [0, 64], sizes = [4, 32], strides = [1, 1]} : vector<4x128xf32> to vector<4x32xf32>
    %4 = vector.extract_strided_slice %0 {offsets = [0, 96], sizes = [4, 32], strides = [1, 1]} : vector<4x128xf32> to vector<4x32xf32>
    %5 = tpu.concatenate %1, %2, %3, %4 in 0 : vector<4x32xf32>, vector<4x32xf32>, vector<4x32xf32>, vector<4x32xf32> -> vector<16x32xf32>
    %c0_1 = arith.constant 0 : index
    %c0_2 = arith.constant 0 : index
    %6 = vector.load %arg2[%c0_1, %c0_2] : memref<344x128xf32, #tpu.memory_space<vmem>>, vector<32x96xf32>
    %c32 = arith.constant 32 : index
    %c0_3 = arith.constant 0 : index
    %7 = vector.load %arg2[%c32, %c0_3] : memref<344x128xf32, #tpu.memory_space<vmem>>, vector<32x32xf32>
    %c64 = arith.constant 64 : index
    %c0_4 = arith.constant 0 : index
    %8 = vector.load %arg2[%c64, %c0_4] : memref<344x128xf32, #tpu.memory_space<vmem>>, vector<32x64xf32>
    %c96 = arith.constant 96 : index
    %c0_5 = arith.constant 0 : index
    %9 = vector.load %arg2[%c96, %c0_5] : memref<344x128xf32, #tpu.memory_space<vmem>>, vector<64x32xf32>
    %c160 = arith.constant 160 : index
    %c0_6 = arith.constant 0 : index
    %10 = vector.load %arg2[%c160, %c0_6] : memref<344x128xf32, #tpu.memory_space<vmem>>, vector<1x96xf32>
    %c161 = arith.constant 161 : index
    %c0_7 = arith.constant 0 : index
    %11 = vector.load %arg2[%c161, %c0_7] : memref<344x128xf32, #tpu.memory_space<vmem>>, vector<1x32xf32>
    %c162 = arith.constant 162 : index
    %c0_8 = arith.constant 0 : index
    %12 = vector.load %arg2[%c162, %c0_8] : memref<344x128xf32, #tpu.memory_space<vmem>>, vector<1x64xf32>
    %c163 = arith.constant 163 : index
    %c0_9 = arith.constant 0 : index
    %13 = vector.load %arg2[%c163, %c0_9] : memref<344x128xf32, #tpu.memory_space<vmem>>, vector<1x32xf32>
    %c164 = arith.constant 164 : index
    %c0_10 = arith.constant 0 : index
    %14 = vector.load %arg2[%c164, %c0_10] : memref<344x128xf32, #tpu.memory_space<vmem>>, vector<1x32xf32>
    %c165 = arith.constant 165 : index
    %c0_11 = arith.constant 0 : index
    %15 = vector.load %arg2[%c165, %c0_11] : memref<344x128xf32, #tpu.memory_space<vmem>>, vector<1x32xf32>
    %c166 = arith.constant 166 : index
    %c0_12 = arith.constant 0 : index
    %16 = vector.load %arg2[%c166, %c0_12] : memref<344x128xf32, #tpu.memory_space<vmem>>, vector<1x32xf32>
    %c167 = arith.constant 167 : index
    %c0_13 = arith.constant 0 : index
    %17 = vector.load %arg2[%c167, %c0_13] : memref<344x128xf32, #tpu.memory_space<vmem>>, vector<1x32xf32>
    %cst = arith.constant dense<0.000000e+00> : vector<16x96xf32>
    %18 = tpu.matmul %5, %6, %cst {dimension_numbers = #tpu.dot_dimension_numbers<[1], [0], [0], [1], [0, 0, 1, 1], [], []>} : vector<16x32xf32>, vector<32x96xf32>, vector<16x96xf32> -> vector<16x96xf32>
    %19 = vector.broadcast %10 : vector<1x96xf32> to vector<16x96xf32>
    %20 = arith.addf %18, %19 : vector<16x96xf32>
    %21 = vector.extract_strided_slice %20 {offsets = [0, 0], sizes = [16, 8], strides = [1, 1]} : vector<16x96xf32> to vector<16x8xf32>
    %22 = vector.shape_cast %21 : vector<16x8xf32> to vector<1x16x8xf32>
    %23 = vector.extract_strided_slice %20 {offsets = [0, 24], sizes = [16, 8], strides = [1, 1]} : vector<16x96xf32> to vector<16x8xf32>
    %24 = vector.shape_cast %23 : vector<16x8xf32> to vector<1x16x8xf32>
    %25 = vector.extract_strided_slice %20 {offsets = [0, 48], sizes = [16, 8], strides = [1, 1]} : vector<16x96xf32> to vector<16x8xf32>
    %26 = vector.shape_cast %25 : vector<16x8xf32> to vector<1x16x8xf32>
    %27 = vector.extract_strided_slice %20 {offsets = [0, 72], sizes = [16, 8], strides = [1, 1]} : vector<16x96xf32> to vector<16x8xf32>
    %28 = vector.shape_cast %27 : vector<16x8xf32> to vector<1x16x8xf32>
    %29 = tpu.concatenate %22, %24, %26, %28 in 0 : vector<1x16x8xf32>, vector<1x16x8xf32>, vector<1x16x8xf32>, vector<1x16x8xf32> -> vector<4x16x8xf32>
    %30 = vector.shape_cast %29 : vector<4x16x8xf32> to vector<8x8x8xf32>
    %31 = vector.extract_strided_slice %20 {offsets = [0, 8], sizes = [16, 8], strides = [1, 1]} : vector<16x96xf32> to vector<16x8xf32>
    %32 = vector.shape_cast %31 : vector<16x8xf32> to vector<1x16x8xf32>
    %33 = vector.extract_strided_slice %20 {offsets = [0, 32], sizes = [16, 8], strides = [1, 1]} : vector<16x96xf32> to vector<16x8xf32>
    %34 = vector.shape_cast %33 : vector<16x8xf32> to vector<1x16x8xf32>
    %35 = vector.extract_strided_slice %20 {offsets = [0, 56], sizes = [16, 8], strides = [1, 1]} : vector<16x96xf32> to vector<16x8xf32>
    %36 = vector.shape_cast %35 : vector<16x8xf32> to vector<1x16x8xf32>
    %37 = vector.extract_strided_slice %20 {offsets = [0, 80], sizes = [16, 8], strides = [1, 1]} : vector<16x96xf32> to vector<16x8xf32>
    %38 = vector.shape_cast %37 : vector<16x8xf32> to vector<1x16x8xf32>
    %39 = tpu.concatenate %32, %34, %36, %38 in 0 : vector<1x16x8xf32>, vector<1x16x8xf32>, vector<1x16x8xf32>, vector<1x16x8xf32> -> vector<4x16x8xf32>
    %40 = vector.shape_cast %39 : vector<4x16x8xf32> to vector<8x8x8xf32>
    %41 = vector.extract_strided_slice %20 {offsets = [0, 16], sizes = [16, 8], strides = [1, 1]} : vector<16x96xf32> to vector<16x8xf32>
    %42 = vector.shape_cast %41 : vector<16x8xf32> to vector<1x16x8xf32>
    %43 = vector.extract_strided_slice %20 {offsets = [0, 40], sizes = [16, 8], strides = [1, 1]} : vector<16x96xf32> to vector<16x8xf32>
    %44 = vector.shape_cast %43 : vector<16x8xf32> to vector<1x16x8xf32>
    %45 = vector.extract_strided_slice %20 {offsets = [0, 64], sizes = [16, 8], strides = [1, 1]} : vector<16x96xf32> to vector<16x8xf32>
    %46 = vector.shape_cast %45 : vector<16x8xf32> to vector<1x16x8xf32>
    %47 = vector.extract_strided_slice %20 {offsets = [0, 88], sizes = [16, 8], strides = [1, 1]} : vector<16x96xf32> to vector<16x8xf32>
    %48 = vector.shape_cast %47 : vector<16x8xf32> to vector<1x16x8xf32>
    %49 = tpu.concatenate %42, %44, %46, %48 in 0 : vector<1x16x8xf32>, vector<1x16x8xf32>, vector<1x16x8xf32>, vector<1x16x8xf32> -> vector<4x16x8xf32>
    %50 = vector.shape_cast %49 : vector<4x16x8xf32> to vector<8x8x8xf32>
    "tpu.trace_start"() <{level = 10 : i32, message = "bld,bmd->blm"}> : () -> ()
    %cst_14 = arith.constant dense<0.000000e+00> : vector<8x8x8xf32>
    %51 = tpu.matmul %30, %40, %cst_14 {dimension_numbers = #tpu.dot_dimension_numbers<[2], [2], [1], [1], [0, 0, 0, 1, 1, 1], [0], [0]>} : vector<8x8x8xf32>, vector<8x8x8xf32>, vector<8x8x8xf32> -> vector<8x8x8xf32>
    "tpu.trace_stop"() : () -> ()
    %cst_15 = arith.constant dense<0xFF800000> : vector<8x8xf32>
    %52 = vector.multi_reduction <maximumf>, %51, %cst_15 [2] : vector<8x8x8xf32> to vector<8x8xf32>
    %53 = vector.shape_cast %52 : vector<8x8xf32> to vector<8x8x1xf32>
    %54 = vector.broadcast %53 : vector<8x8x1xf32> to vector<8x8x8xf32>
    %55 = arith.subf %51, %54 : vector<8x8x8xf32>
    %56 = math.exp %55 : vector<8x8x8xf32>
    %cst_16 = arith.constant dense<0.000000e+00> : vector<8x8xf32>
    %57 = vector.multi_reduction <add>, %56, %cst_16 [2] : vector<8x8x8xf32> to vector<8x8xf32>
    %58 = vector.shape_cast %57 : vector<8x8xf32> to vector<8x8x1xf32>
    %59 = vector.broadcast %58 : vector<8x8x1xf32> to vector<8x8x8xf32>
    %60 = arith.divf %56, %59 : vector<8x8x8xf32>
    "tpu.trace_start"() <{level = 10 : i32, message = "blm,bmd->bld"}> : () -> ()
    %cst_17 = arith.constant dense<0.000000e+00> : vector<8x8x8xf32>
    %61 = tpu.matmul %60, %50, %cst_17 {dimension_numbers = #tpu.dot_dimension_numbers<[2], [1], [1], [2], [0, 0, 0, 1, 1, 2], [0], [0]>} : vector<8x8x8xf32>, vector<8x8x8xf32>, vector<8x8x8xf32> -> vector<8x8x8xf32>
    "tpu.trace_stop"() : () -> ()
    %62 = vector.shape_cast %61 : vector<8x8x8xf32> to vector<4x16x8xf32>
    %63 = vector.extract_strided_slice %62 {offsets = [0, 0, 0], sizes = [1, 16, 8], strides = [1, 1, 1]} : vector<4x16x8xf32> to vector<1x16x8xf32>
    %64 = vector.shape_cast %63 : vector<1x16x8xf32> to vector<16x8xf32>
    %65 = vector.extract_strided_slice %62 {offsets = [1, 0, 0], sizes = [1, 16, 8], strides = [1, 1, 1]} : vector<4x16x8xf32> to vector<1x16x8xf32>
    %66 = vector.shape_cast %65 : vector<1x16x8xf32> to vector<16x8xf32>
    %67 = vector.extract_strided_slice %62 {offsets = [2, 0, 0], sizes = [1, 16, 8], strides = [1, 1, 1]} : vector<4x16x8xf32> to vector<1x16x8xf32>
    %68 = vector.shape_cast %67 : vector<1x16x8xf32> to vector<16x8xf32>
    %69 = vector.extract_strided_slice %62 {offsets = [3, 0, 0], sizes = [1, 16, 8], strides = [1, 1, 1]} : vector<4x16x8xf32> to vector<1x16x8xf32>
    %70 = vector.shape_cast %69 : vector<1x16x8xf32> to vector<16x8xf32>
    %71 = tpu.concatenate %64, %66, %68, %70 in 1 : vector<16x8xf32>, vector<16x8xf32>, vector<16x8xf32>, vector<16x8xf32> -> vector<16x32xf32>
    %cst_18 = arith.constant dense<0.000000e+00> : vector<16x32xf32>
    %72 = tpu.matmul %71, %7, %cst_18 {dimension_numbers = #tpu.dot_dimension_numbers<[1], [0], [0], [1], [0, 0, 1, 1], [], []>} : vector<16x32xf32>, vector<32x32xf32>, vector<16x32xf32> -> vector<16x32xf32>
    %73 = vector.broadcast %11 : vector<1x32xf32> to vector<16x32xf32>
    %74 = arith.addf %72, %73 : vector<16x32xf32>
    %75 = arith.addf %5, %74 : vector<16x32xf32>
    %cst_19 = arith.constant dense<0.000000e+00> : vector<16xf32>
    %76 = vector.multi_reduction <add>, %75, %cst_19 [1] : vector<16x32xf32> to vector<16xf32>
    %77 = vector.shape_cast %76 : vector<16xf32> to vector<16x1xf32>
    %cst_20 = arith.constant 3.200000e+01 : f32
    %78 = vector.broadcast %cst_20 : f32 to vector<16x1xf32>
    %79 = arith.divf %77, %78 : vector<16x1xf32>
    %80 = vector.broadcast %79 : vector<16x1xf32> to vector<16x32xf32>
    %81 = arith.subf %75, %80 : vector<16x32xf32>
    %82 = arith.mulf %81, %81 : vector<16x32xf32>
    %cst_21 = arith.constant dense<0.000000e+00> : vector<16xf32>
    %83 = vector.multi_reduction <add>, %82, %cst_21 [1] : vector<16x32xf32> to vector<16xf32>
    %84 = vector.shape_cast %83 : vector<16xf32> to vector<16x1xf32>
    %cst_22 = arith.constant 3.200000e+01 : f32
    %85 = vector.broadcast %cst_22 : f32 to vector<16x1xf32>
    %86 = arith.divf %84, %85 : vector<16x1xf32>
    %87 = vector.broadcast %79 : vector<16x1xf32> to vector<16x32xf32>
    %88 = arith.subf %75, %87 : vector<16x32xf32>
    %cst_23 = arith.constant 9.99999974E-6 : f32
    %89 = vector.broadcast %cst_23 : f32 to vector<16x1xf32>
    %90 = arith.addf %86, %89 : vector<16x1xf32>
    %91 = math.rsqrt %90 : vector<16x1xf32>
    %92 = vector.broadcast %91 : vector<16x1xf32> to vector<16x32xf32>
    %93 = arith.mulf %88, %92 : vector<16x32xf32>
    %94 = vector.broadcast %14 : vector<1x32xf32> to vector<16x32xf32>
    %95 = arith.mulf %93, %94 : vector<16x32xf32>
    %96 = vector.broadcast %15 : vector<1x32xf32> to vector<16x32xf32>
    %97 = arith.addf %95, %96 : vector<16x32xf32>
    %cst_24 = arith.constant dense<0.000000e+00> : vector<16x64xf32>
    %98 = tpu.matmul %97, %8, %cst_24 {dimension_numbers = #tpu.dot_dimension_numbers<[1], [0], [0], [1], [0, 0, 1, 1], [], []>} : vector<16x32xf32>, vector<32x64xf32>, vector<16x64xf32> -> vector<16x64xf32>
    %99 = vector.broadcast %12 : vector<1x64xf32> to vector<16x64xf32>
    %100 = arith.addf %98, %99 : vector<16x64xf32>
    %cst_25 = arith.constant 0.000000e+00 : f32
    %101 = vector.broadcast %cst_25 : f32 to vector<16x64xf32>
    %102 = arith.maximumf %100, %101 : vector<16x64xf32>
    %cst_26 = arith.constant dense<0.000000e+00> : vector<16x32xf32>
    %103 = tpu.matmul %102, %9, %cst_26 {dimension_numbers = #tpu.dot_dimension_numbers<[1], [0], [0], [1], [0, 0, 1, 1], [], []>} : vector<16x64xf32>, vector<64x32xf32>, vector<16x32xf32> -> vector<16x32xf32>
    %104 = vector.broadcast %13 : vector<1x32xf32> to vector<16x32xf32>
    %105 = arith.addf %103, %104 : vector<16x32xf32>
    %106 = arith.addf %97, %105 : vector<16x32xf32>
    %cst_27 = arith.constant dense<0.000000e+00> : vector<16xf32>
    %107 = vector.multi_reduction <add>, %106, %cst_27 [1] : vector<16x32xf32> to vector<16xf32>
    %108 = vector.shape_cast %107 : vector<16xf32> to vector<16x1xf32>
    %cst_28 = arith.constant 3.200000e+01 : f32
    %109 = vector.broadcast %cst_28 : f32 to vector<16x1xf32>
    %110 = arith.divf %108, %109 : vector<16x1xf32>
    %111 = vector.broadcast %110 : vector<16x1xf32> to vector<16x32xf32>
    %112 = arith.subf %106, %111 : vector<16x32xf32>
    %113 = arith.mulf %112, %112 : vector<16x32xf32>
    %cst_29 = arith.constant dense<0.000000e+00> : vector<16xf32>
    %114 = vector.multi_reduction <add>, %113, %cst_29 [1] : vector<16x32xf32> to vector<16xf32>
    %115 = vector.shape_cast %114 : vector<16xf32> to vector<16x1xf32>
    %cst_30 = arith.constant 3.200000e+01 : f32
    %116 = vector.broadcast %cst_30 : f32 to vector<16x1xf32>
    %117 = arith.divf %115, %116 : vector<16x1xf32>
    %118 = vector.broadcast %110 : vector<16x1xf32> to vector<16x32xf32>
    %119 = arith.subf %106, %118 : vector<16x32xf32>
    %cst_31 = arith.constant 9.99999974E-6 : f32
    %120 = vector.broadcast %cst_31 : f32 to vector<16x1xf32>
    %121 = arith.addf %117, %120 : vector<16x1xf32>
    %122 = math.rsqrt %121 : vector<16x1xf32>
    %123 = vector.broadcast %122 : vector<16x1xf32> to vector<16x32xf32>
    %124 = arith.mulf %119, %123 : vector<16x32xf32>
    %125 = vector.broadcast %16 : vector<1x32xf32> to vector<16x32xf32>
    %126 = arith.mulf %124, %125 : vector<16x32xf32>
    %127 = vector.broadcast %17 : vector<1x32xf32> to vector<16x32xf32>
    %128 = arith.addf %126, %127 : vector<16x32xf32>
    %c168 = arith.constant 168 : index
    %c0_32 = arith.constant 0 : index
    %129 = vector.load %arg2[%c168, %c0_32] : memref<344x128xf32, #tpu.memory_space<vmem>>, vector<32x96xf32>
    %c200 = arith.constant 200 : index
    %c0_33 = arith.constant 0 : index
    %130 = vector.load %arg2[%c200, %c0_33] : memref<344x128xf32, #tpu.memory_space<vmem>>, vector<32x32xf32>
    %c232 = arith.constant 232 : index
    %c0_34 = arith.constant 0 : index
    %131 = vector.load %arg2[%c232, %c0_34] : memref<344x128xf32, #tpu.memory_space<vmem>>, vector<32x64xf32>
    %c264 = arith.constant 264 : index
    %c0_35 = arith.constant 0 : index
    %132 = vector.load %arg2[%c264, %c0_35] : memref<344x128xf32, #tpu.memory_space<vmem>>, vector<64x32xf32>
    %c328 = arith.constant 328 : index
    %c0_36 = arith.constant 0 : index
    %133 = vector.load %arg2[%c328, %c0_36] : memref<344x128xf32, #tpu.memory_space<vmem>>, vector<1x96xf32>
    %c329 = arith.constant 329 : index
    %c0_37 = arith.constant 0 : index
    %134 = vector.load %arg2[%c329, %c0_37] : memref<344x128xf32, #tpu.memory_space<vmem>>, vector<1x32xf32>
    %c330 = arith.constant 330 : index
    %c0_38 = arith.constant 0 : index
    %135 = vector.load %arg2[%c330, %c0_38] : memref<344x128xf32, #tpu.memory_space<vmem>>, vector<1x64xf32>
    %c331 = arith.constant 331 : index
    %c0_39 = arith.constant 0 : index
    %136 = vector.load %arg2[%c331, %c0_39] : memref<344x128xf32, #tpu.memory_space<vmem>>, vector<1x32xf32>
    %c332 = arith.constant 332 : index
    %c0_40 = arith.constant 0 : index
    %137 = vector.load %arg2[%c332, %c0_40] : memref<344x128xf32, #tpu.memory_space<vmem>>, vector<1x32xf32>
    %c333 = arith.constant 333 : index
    %c0_41 = arith.constant 0 : index
    %138 = vector.load %arg2[%c333, %c0_41] : memref<344x128xf32, #tpu.memory_space<vmem>>, vector<1x32xf32>
    %c334 = arith.constant 334 : index
    %c0_42 = arith.constant 0 : index
    %139 = vector.load %arg2[%c334, %c0_42] : memref<344x128xf32, #tpu.memory_space<vmem>>, vector<1x32xf32>
    %c335 = arith.constant 335 : index
    %c0_43 = arith.constant 0 : index
    %140 = vector.load %arg2[%c335, %c0_43] : memref<344x128xf32, #tpu.memory_space<vmem>>, vector<1x32xf32>
    %cst_44 = arith.constant dense<0.000000e+00> : vector<16x96xf32>
    %141 = tpu.matmul %128, %129, %cst_44 {dimension_numbers = #tpu.dot_dimension_numbers<[1], [0], [0], [1], [0, 0, 1, 1], [], []>} : vector<16x32xf32>, vector<32x96xf32>, vector<16x96xf32> -> vector<16x96xf32>
    %142 = vector.broadcast %133 : vector<1x96xf32> to vector<16x96xf32>
    %143 = arith.addf %141, %142 : vector<16x96xf32>
    %144 = vector.extract_strided_slice %143 {offsets = [0, 0], sizes = [16, 8], strides = [1, 1]} : vector<16x96xf32> to vector<16x8xf32>
    %145 = vector.shape_cast %144 : vector<16x8xf32> to vector<1x16x8xf32>
    %146 = vector.extract_strided_slice %143 {offsets = [0, 24], sizes = [16, 8], strides = [1, 1]} : vector<16x96xf32> to vector<16x8xf32>
    %147 = vector.shape_cast %146 : vector<16x8xf32> to vector<1x16x8xf32>
    %148 = vector.extract_strided_slice %143 {offsets = [0, 48], sizes = [16, 8], strides = [1, 1]} : vector<16x96xf32> to vector<16x8xf32>
    %149 = vector.shape_cast %148 : vector<16x8xf32> to vector<1x16x8xf32>
    %150 = vector.extract_strided_slice %143 {offsets = [0, 72], sizes = [16, 8], strides = [1, 1]} : vector<16x96xf32> to vector<16x8xf32>
    %151 = vector.shape_cast %150 : vector<16x8xf32> to vector<1x16x8xf32>
    %152 = tpu.concatenate %145, %147, %149, %151 in 0 : vector<1x16x8xf32>, vector<1x16x8xf32>, vector<1x16x8xf32>, vector<1x16x8xf32> -> vector<4x16x8xf32>
    %153 = vector.shape_cast %152 : vector<4x16x8xf32> to vector<8x8x8xf32>
    %154 = vector.extract_strided_slice %143 {offsets = [0, 8], sizes = [16, 8], strides = [1, 1]} : vector<16x96xf32> to vector<16x8xf32>
    %155 = vector.shape_cast %154 : vector<16x8xf32> to vector<1x16x8xf32>
    %156 = vector.extract_strided_slice %143 {offsets = [0, 32], sizes = [16, 8], strides = [1, 1]} : vector<16x96xf32> to vector<16x8xf32>
    %157 = vector.shape_cast %156 : vector<16x8xf32> to vector<1x16x8xf32>
    %158 = vector.extract_strided_slice %143 {offsets = [0, 56], sizes = [16, 8], strides = [1, 1]} : vector<16x96xf32> to vector<16x8xf32>
    %159 = vector.shape_cast %158 : vector<16x8xf32> to vector<1x16x8xf32>
    %160 = vector.extract_strided_slice %143 {offsets = [0, 80], sizes = [16, 8], strides = [1, 1]} : vector<16x96xf32> to vector<16x8xf32>
    %161 = vector.shape_cast %160 : vector<16x8xf32> to vector<1x16x8xf32>
    %162 = tpu.concatenate %155, %157, %159, %161 in 0 : vector<1x16x8xf32>, vector<1x16x8xf32>, vector<1x16x8xf32>, vector<1x16x8xf32> -> vector<4x16x8xf32>
    %163 = vector.shape_cast %162 : vector<4x16x8xf32> to vector<8x8x8xf32>
    %164 = vector.extract_strided_slice %143 {offsets = [0, 16], sizes = [16, 8], strides = [1, 1]} : vector<16x96xf32> to vector<16x8xf32>
    %165 = vector.shape_cast %164 : vector<16x8xf32> to vector<1x16x8xf32>
    %166 = vector.extract_strided_slice %143 {offsets = [0, 40], sizes = [16, 8], strides = [1, 1]} : vector<16x96xf32> to vector<16x8xf32>
    %167 = vector.shape_cast %166 : vector<16x8xf32> to vector<1x16x8xf32>
    %168 = vector.extract_strided_slice %143 {offsets = [0, 64], sizes = [16, 8], strides = [1, 1]} : vector<16x96xf32> to vector<16x8xf32>
    %169 = vector.shape_cast %168 : vector<16x8xf32> to vector<1x16x8xf32>
    %170 = vector.extract_strided_slice %143 {offsets = [0, 88], sizes = [16, 8], strides = [1, 1]} : vector<16x96xf32> to vector<16x8xf32>
    %171 = vector.shape_cast %170 : vector<16x8xf32> to vector<1x16x8xf32>
    %172 = tpu.concatenate %165, %167, %169, %171 in 0 : vector<1x16x8xf32>, vector<1x16x8xf32>, vector<1x16x8xf32>, vector<1x16x8xf32> -> vector<4x16x8xf32>
    %173 = vector.shape_cast %172 : vector<4x16x8xf32> to vector<8x8x8xf32>
    "tpu.trace_start"() <{level = 10 : i32, message = "bld,bmd->blm"}> : () -> ()
    %cst_45 = arith.constant dense<0.000000e+00> : vector<8x8x8xf32>
    %174 = tpu.matmul %153, %163, %cst_45 {dimension_numbers = #tpu.dot_dimension_numbers<[2], [2], [1], [1], [0, 0, 0, 1, 1, 1], [0], [0]>} : vector<8x8x8xf32>, vector<8x8x8xf32>, vector<8x8x8xf32> -> vector<8x8x8xf32>
    "tpu.trace_stop"() : () -> ()
    %cst_46 = arith.constant dense<0xFF800000> : vector<8x8xf32>
    %175 = vector.multi_reduction <maximumf>, %174, %cst_46 [2] : vector<8x8x8xf32> to vector<8x8xf32>
    %176 = vector.shape_cast %175 : vector<8x8xf32> to vector<8x8x1xf32>
    %177 = vector.broadcast %176 : vector<8x8x1xf32> to vector<8x8x8xf32>
    %178 = arith.subf %174, %177 : vector<8x8x8xf32>
    %179 = math.exp %178 : vector<8x8x8xf32>
    %cst_47 = arith.constant dense<0.000000e+00> : vector<8x8xf32>
    %180 = vector.multi_reduction <add>, %179, %cst_47 [2] : vector<8x8x8xf32> to vector<8x8xf32>
    %181 = vector.shape_cast %180 : vector<8x8xf32> to vector<8x8x1xf32>
    %182 = vector.broadcast %181 : vector<8x8x1xf32> to vector<8x8x8xf32>
    %183 = arith.divf %179, %182 : vector<8x8x8xf32>
    "tpu.trace_start"() <{level = 10 : i32, message = "blm,bmd->bld"}> : () -> ()
    %cst_48 = arith.constant dense<0.000000e+00> : vector<8x8x8xf32>
    %184 = tpu.matmul %183, %173, %cst_48 {dimension_numbers = #tpu.dot_dimension_numbers<[2], [1], [1], [2], [0, 0, 0, 1, 1, 2], [0], [0]>} : vector<8x8x8xf32>, vector<8x8x8xf32>, vector<8x8x8xf32> -> vector<8x8x8xf32>
    "tpu.trace_stop"() : () -> ()
    %185 = vector.shape_cast %184 : vector<8x8x8xf32> to vector<4x16x8xf32>
    %186 = vector.extract_strided_slice %185 {offsets = [0, 0, 0], sizes = [1, 16, 8], strides = [1, 1, 1]} : vector<4x16x8xf32> to vector<1x16x8xf32>
    %187 = vector.shape_cast %186 : vector<1x16x8xf32> to vector<16x8xf32>
    %188 = vector.extract_strided_slice %185 {offsets = [1, 0, 0], sizes = [1, 16, 8], strides = [1, 1, 1]} : vector<4x16x8xf32> to vector<1x16x8xf32>
    %189 = vector.shape_cast %188 : vector<1x16x8xf32> to vector<16x8xf32>
    %190 = vector.extract_strided_slice %185 {offsets = [2, 0, 0], sizes = [1, 16, 8], strides = [1, 1, 1]} : vector<4x16x8xf32> to vector<1x16x8xf32>
    %191 = vector.shape_cast %190 : vector<1x16x8xf32> to vector<16x8xf32>
    %192 = vector.extract_strided_slice %185 {offsets = [3, 0, 0], sizes = [1, 16, 8], strides = [1, 1, 1]} : vector<4x16x8xf32> to vector<1x16x8xf32>
    %193 = vector.shape_cast %192 : vector<1x16x8xf32> to vector<16x8xf32>
    %194 = tpu.concatenate %187, %189, %191, %193 in 1 : vector<16x8xf32>, vector<16x8xf32>, vector<16x8xf32>, vector<16x8xf32> -> vector<16x32xf32>
    %cst_49 = arith.constant dense<0.000000e+00> : vector<16x32xf32>
    %195 = tpu.matmul %194, %130, %cst_49 {dimension_numbers = #tpu.dot_dimension_numbers<[1], [0], [0], [1], [0, 0, 1, 1], [], []>} : vector<16x32xf32>, vector<32x32xf32>, vector<16x32xf32> -> vector<16x32xf32>
    %196 = vector.broadcast %134 : vector<1x32xf32> to vector<16x32xf32>
    %197 = arith.addf %195, %196 : vector<16x32xf32>
    %198 = arith.addf %128, %197 : vector<16x32xf32>
    %cst_50 = arith.constant dense<0.000000e+00> : vector<16xf32>
    %199 = vector.multi_reduction <add>, %198, %cst_50 [1] : vector<16x32xf32> to vector<16xf32>
    %200 = vector.shape_cast %199 : vector<16xf32> to vector<16x1xf32>
    %cst_51 = arith.constant 3.200000e+01 : f32
    %201 = vector.broadcast %cst_51 : f32 to vector<16x1xf32>
    %202 = arith.divf %200, %201 : vector<16x1xf32>
    %203 = vector.broadcast %202 : vector<16x1xf32> to vector<16x32xf32>
    %204 = arith.subf %198, %203 : vector<16x32xf32>
    %205 = arith.mulf %204, %204 : vector<16x32xf32>
    %cst_52 = arith.constant dense<0.000000e+00> : vector<16xf32>
    %206 = vector.multi_reduction <add>, %205, %cst_52 [1] : vector<16x32xf32> to vector<16xf32>
    %207 = vector.shape_cast %206 : vector<16xf32> to vector<16x1xf32>
    %cst_53 = arith.constant 3.200000e+01 : f32
    %208 = vector.broadcast %cst_53 : f32 to vector<16x1xf32>
    %209 = arith.divf %207, %208 : vector<16x1xf32>
    %210 = vector.broadcast %202 : vector<16x1xf32> to vector<16x32xf32>
    %211 = arith.subf %198, %210 : vector<16x32xf32>
    %cst_54 = arith.constant 9.99999974E-6 : f32
    %212 = vector.broadcast %cst_54 : f32 to vector<16x1xf32>
    %213 = arith.addf %209, %212 : vector<16x1xf32>
    %214 = math.rsqrt %213 : vector<16x1xf32>
    %215 = vector.broadcast %214 : vector<16x1xf32> to vector<16x32xf32>
    %216 = arith.mulf %211, %215 : vector<16x32xf32>
    %217 = vector.broadcast %137 : vector<1x32xf32> to vector<16x32xf32>
    %218 = arith.mulf %216, %217 : vector<16x32xf32>
    %219 = vector.broadcast %138 : vector<1x32xf32> to vector<16x32xf32>
    %220 = arith.addf %218, %219 : vector<16x32xf32>
    %cst_55 = arith.constant dense<0.000000e+00> : vector<16x64xf32>
    %221 = tpu.matmul %220, %131, %cst_55 {dimension_numbers = #tpu.dot_dimension_numbers<[1], [0], [0], [1], [0, 0, 1, 1], [], []>} : vector<16x32xf32>, vector<32x64xf32>, vector<16x64xf32> -> vector<16x64xf32>
    %222 = vector.broadcast %135 : vector<1x64xf32> to vector<16x64xf32>
    %223 = arith.addf %221, %222 : vector<16x64xf32>
    %cst_56 = arith.constant 0.000000e+00 : f32
    %224 = vector.broadcast %cst_56 : f32 to vector<16x64xf32>
    %225 = arith.maximumf %223, %224 : vector<16x64xf32>
    %cst_57 = arith.constant dense<0.000000e+00> : vector<16x32xf32>
    %226 = tpu.matmul %225, %132, %cst_57 {dimension_numbers = #tpu.dot_dimension_numbers<[1], [0], [0], [1], [0, 0, 1, 1], [], []>} : vector<16x64xf32>, vector<64x32xf32>, vector<16x32xf32> -> vector<16x32xf32>
    %227 = vector.broadcast %136 : vector<1x32xf32> to vector<16x32xf32>
    %228 = arith.addf %226, %227 : vector<16x32xf32>
    %229 = arith.addf %220, %228 : vector<16x32xf32>
    %cst_58 = arith.constant dense<0.000000e+00> : vector<16xf32>
    %230 = vector.multi_reduction <add>, %229, %cst_58 [1] : vector<16x32xf32> to vector<16xf32>
    %231 = vector.shape_cast %230 : vector<16xf32> to vector<16x1xf32>
    %cst_59 = arith.constant 3.200000e+01 : f32
    %232 = vector.broadcast %cst_59 : f32 to vector<16x1xf32>
    %233 = arith.divf %231, %232 : vector<16x1xf32>
    %234 = vector.broadcast %233 : vector<16x1xf32> to vector<16x32xf32>
    %235 = arith.subf %229, %234 : vector<16x32xf32>
    %236 = arith.mulf %235, %235 : vector<16x32xf32>
    %cst_60 = arith.constant dense<0.000000e+00> : vector<16xf32>
    %237 = vector.multi_reduction <add>, %236, %cst_60 [1] : vector<16x32xf32> to vector<16xf32>
    %238 = vector.shape_cast %237 : vector<16xf32> to vector<16x1xf32>
    %cst_61 = arith.constant 3.200000e+01 : f32
    %239 = vector.broadcast %cst_61 : f32 to vector<16x1xf32>
    %240 = arith.divf %238, %239 : vector<16x1xf32>
    %241 = vector.broadcast %233 : vector<16x1xf32> to vector<16x32xf32>
    %242 = arith.subf %229, %241 : vector<16x32xf32>
    %cst_62 = arith.constant 9.99999974E-6 : f32
    %243 = vector.broadcast %cst_62 : f32 to vector<16x1xf32>
    %244 = arith.addf %240, %243 : vector<16x1xf32>
    %245 = math.rsqrt %244 : vector<16x1xf32>
    %246 = vector.broadcast %245 : vector<16x1xf32> to vector<16x32xf32>
    %247 = arith.mulf %242, %246 : vector<16x32xf32>
    %248 = vector.broadcast %139 : vector<1x32xf32> to vector<16x32xf32>
    %249 = arith.mulf %247, %248 : vector<16x32xf32>
    %250 = vector.broadcast %140 : vector<1x32xf32> to vector<16x32xf32>
    %251 = arith.addf %249, %250 : vector<16x32xf32>
    %c336 = arith.constant 336 : index
    %c0_63 = arith.constant 0 : index
    %252 = vector.load %arg2[%c336, %c0_63] : memref<344x128xf32, #tpu.memory_space<vmem>>, vector<1x32xf32>
    %c337 = arith.constant 337 : index
    %c0_64 = arith.constant 0 : index
    %253 = vector.load %arg2[%c337, %c0_64] : memref<344x128xf32, #tpu.memory_space<vmem>>, vector<1x32xf32>
    %cst_65 = arith.constant dense<0.000000e+00> : vector<16xf32>
    %254 = vector.multi_reduction <add>, %251, %cst_65 [1] : vector<16x32xf32> to vector<16xf32>
    %255 = vector.shape_cast %254 : vector<16xf32> to vector<16x1xf32>
    %cst_66 = arith.constant 3.200000e+01 : f32
    %256 = vector.broadcast %cst_66 : f32 to vector<16x1xf32>
    %257 = arith.divf %255, %256 : vector<16x1xf32>
    %258 = vector.broadcast %257 : vector<16x1xf32> to vector<16x32xf32>
    %259 = arith.subf %251, %258 : vector<16x32xf32>
    %260 = arith.mulf %259, %259 : vector<16x32xf32>
    %cst_67 = arith.constant dense<0.000000e+00> : vector<16xf32>
    %261 = vector.multi_reduction <add>, %260, %cst_67 [1] : vector<16x32xf32> to vector<16xf32>
    %262 = vector.shape_cast %261 : vector<16xf32> to vector<16x1xf32>
    %cst_68 = arith.constant 3.200000e+01 : f32
    %263 = vector.broadcast %cst_68 : f32 to vector<16x1xf32>
    %264 = arith.divf %262, %263 : vector<16x1xf32>
    %265 = vector.broadcast %257 : vector<16x1xf32> to vector<16x32xf32>
    %266 = arith.subf %251, %265 : vector<16x32xf32>
    %cst_69 = arith.constant 9.99999974E-6 : f32
    %267 = vector.broadcast %cst_69 : f32 to vector<16x1xf32>
    %268 = arith.addf %264, %267 : vector<16x1xf32>
    %269 = math.rsqrt %268 : vector<16x1xf32>
    %270 = vector.broadcast %269 : vector<16x1xf32> to vector<16x32xf32>
    %271 = arith.mulf %266, %270 : vector<16x32xf32>
    %272 = vector.broadcast %252 : vector<1x32xf32> to vector<16x32xf32>
    %273 = arith.mulf %271, %272 : vector<16x32xf32>
    %274 = vector.broadcast %253 : vector<1x32xf32> to vector<16x32xf32>
    %275 = arith.addf %273, %274 : vector<16x32xf32>
    %276 = vector.extract_strided_slice %275 {offsets = [0, 0], sizes = [4, 32], strides = [1, 1]} : vector<16x32xf32> to vector<4x32xf32>
    %277 = vector.extract_strided_slice %275 {offsets = [4, 0], sizes = [4, 32], strides = [1, 1]} : vector<16x32xf32> to vector<4x32xf32>
    %278 = vector.extract_strided_slice %275 {offsets = [8, 0], sizes = [4, 32], strides = [1, 1]} : vector<16x32xf32> to vector<4x32xf32>
    %279 = vector.extract_strided_slice %275 {offsets = [12, 0], sizes = [4, 32], strides = [1, 1]} : vector<16x32xf32> to vector<4x32xf32>
    %280 = tpu.concatenate %276, %277, %278, %279 in 1 : vector<4x32xf32>, vector<4x32xf32>, vector<4x32xf32>, vector<4x32xf32> -> vector<4x128xf32>
    %c0_70 = arith.constant 0 : index
    %c0_71 = arith.constant 0 : index
    %281 = vector.load %arg3[%c0_70, %c0_71] : memref<4x128xf32, #tpu.memory_space<vmem>>, vector<4x128xf32>
    tpu.vector_store %arg3[%c0_70, %c0_71], %280 {strides = array<i32>} : memref<4x128xf32, #tpu.memory_space<vmem>>, vector<4x128xf32>,
    return
  }
  func.func @transform_0(%arg0: i32) -> (i32, i32) {
    %c0_i32 = arith.constant 0 : i32
    %c0_i32_0 = arith.constant 0 : i32
    %c0_i32_1 = arith.constant 0 : i32
    return %c0_i32, %c0_i32_0 : i32, i32
  }
  func.func @transform_1(%arg0: i32) -> (i32, i32) {
    %c0_i32 = arith.constant 0 : i32
    %c0_i32_0 = arith.constant 0 : i32
    %c0_i32_1 = arith.constant 0 : i32
    return %c0_i32, %c0_i32_0 : i32, i32
  }
  func.func @transform_2(%arg0: i32) -> (i32, i32) {
    %c0_i32 = arith.constant 0 : i32
    %c0_i32_0 = arith.constant 0 : i32
    %c0_i32_1 = arith.constant 0 : i32
    return %c0_i32, %c0_i32_0 : i32, i32
  }
}

</mosaic_0001>

<llo_original>
// kernel: encoder_forward_pallas.1
$region0: #{encoder_forward_pallas.1}
  #allocation0 [shape = 'u32[]', space=smem, size = 0x4, offset = 0x4, fixed_abs, tag = 'smem constant byte address 0x4 - core index']
  #allocation1 [shape = 'u32[144,128]{1,0:T(1,128)}', space=vmem, size = 0x12000, scoped, tag = 'internal scratch']
  %s0 = inlined_call_operand.vmem [shape: f32[4,128], index: 0, kind: input, shape index: {}]
  %s1 = inlined_call_operand.hbm [shape: f32[344,128], index: 1, kind: input, shape index: {}]
  %s2 = inlined_call_operand.vmem [shape: f32[4,128], index: 2, kind: output, shape index: {}]
  %s3 = sld [smem:[#allocation0]]
  $region22: #{encoder_forward_pallas.1} parent=0
    _
  %s5 = ssub.s32 1, %s3
  %s6 = scalar_select 0, %s5, %s3
  $region1: #{encoder_forward_pallas.1} parent=0
    #allocation2 [shape = 'u8[176128]{0}', space=vmem, size = 0x2b000, scoped, tag = 'input window, operand 1, single buffered']
    #allocation3 [shape = 's32[1]{0}', space=sflag, size = 0x4, scoped, tag = 'scoped memory for encoder_forward_pallas.1']
    %7 = vsyncpa [#allocation3], 0
    // Predicated region
    $region2: #{encoder_forward_pallas.1} parent=1 // pred_check
      _
    $region3: #{encoder_forward_pallas.1} parent=1 // pred_check_branch
      %9 = sbr.rel (0) target = $region5
    $region4: #{encoder_forward_pallas.1} parent=1 // pred_region
      _
    $region5: #{encoder_forward_pallas.1} parent=1 // pred_fallthru
      _
    // Predicated region
    $region6: #{encoder_forward_pallas.1} parent=1 // pred_check
      _
    $region7: #{encoder_forward_pallas.1} parent=1 // pred_check_branch
      %11 = sbr.rel (0) target = $region9
    $region8: #{encoder_forward_pallas.1} parent=1 // pred_region
      %s13 = ssub.s32 5504, 5504
      %14 = vsyncadd [#allocation3], %s13
      %s15 = sshll.u32 [#allocation2], 4
      %s16 = int_to_ptr.vmem [resolvable:$true] %s15
      %21 = dma.hbm_to_vmem [thread:$0]  %s1, 5504, %s16, [#allocation3], 128, 128, 8
    $region9: #{encoder_forward_pallas.1} parent=1 // pred_fallthru
      _
    // Predicated region
    $region10: #{encoder_forward_pallas.1} parent=1 // pred_check
      _
    $region11: #{encoder_forward_pallas.1} parent=1 // pred_check_branch
      %23 = sbr.rel (0) target = $region13
    $region12: #{encoder_forward_pallas.1} parent=1 // pred_region
      %24 = dma.done [#allocation3], 5504
    $region13: #{encoder_forward_pallas.1} parent=1 // pred_fallthru
      _
    %v25 = vld [vmem:[%s0] sm:$0xf]
    %v27 = vrot.slane %v25, 4
    %28 = vrot.lane.b32.xlu0 %v27, 96
    %v29 = vpop.permute.xlu0 %28
    %31 = vrot.lane.b32.xlu0 %v25, 64
    %v32 = vpop.permute.xlu0 %31
    %34 = vrot.lane.b32.xlu0 %v27, 32
    %v35 = vpop.permute.xlu0 %34
    %vm37 = vcmask 1043456
    %v38 = vsel %vm37, %v25, %v29
    %v39 = vsel %vm37, %v32, %v35
    %v40 = vld [vmem:[#allocation2] sm:$0xff]
    %v41 = vld [vmem:[#allocation2 + $0x8] sm:$0xff]
    %v42 = vld [vmem:[#allocation2 + $0x10] sm:$0xff]
    %v43 = vld [vmem:[#allocation2 + $0x18] sm:$0xff]
    %v44 = vld [vmem:[#allocation2 + $0x20] sm:$0xff]
    %v45 = vld [vmem:[#allocation2 + $0x28] sm:$0xff]
    %v46 = vld [vmem:[#allocation2 + $0x30] sm:$0xff]
    %v47 = vld [vmem:[#allocation2 + $0x38] sm:$0xff]
    %v48 = vld [vmem:[#allocation2 + $0x40] sm:$0xff]
    %v49 = vld [vmem:[#allocation2 + $0x48] sm:$0xff]
    %v50 = vld [vmem:[#allocation2 + $0x50] sm:$0xff]
    %v51 = vld [vmem:[#allocation2 + $0x58] sm:$0xff]
    %v52 = vld [vmem:[#allocation2 + $0x60] sm:$0xff]
    %v53 = vld [vmem:[#allocation2 + $0x68] sm:$0xff]
    %v54 = vld [vmem:[#allocation2 + $0x70] sm:$0xff]
    %v55 = vld [vmem:[#allocation2 + $0x78] sm:$0xff]
    %v56 = vld [vmem:[#allocation2 + $0x80] sm:$0xff]
    %v57 = vld [vmem:[#allocation2 + $0x88] sm:$0xff]
    %v58 = vld [vmem:[#allocation2 + $0x90] sm:$0xff]
    %v59 = vld [vmem:[#allocation2 + $0x98] sm:$0xff]
    %v60 = vld [vmem:[#allocation2 + $0xa0] sm:$0x1]
    %v61 = vld [vmem:[#allocation2 + $0xa1] sm:$0x1]
    %v62 = vld [vmem:[#allocation2 + $0xa2] sm:$0x1]
    %v63 = vld [vmem:[#allocation2 + $0xa3] sm:$0x1]
    %v64 = vld [vmem:[#allocation2 + $0xa4] sm:$0x1]
    %v65 = vld [vmem:[#allocation2 + $0xa5] sm:$0x1]
    %v66 = vld [vmem:[#allocation2 + $0xa6] sm:$0x1]
    %v67 = vld [vmem:[#allocation2 + $0xa7] sm:$0x1]
    %v68 = vlaneseq
    %v69 = vshrl.u32 %v68, 7
    %v70 = vsub.s32 0, %v69
    %v71 = vrot.slane %v60, %v70
    %vm72 = vcmask 261120
    %v74 = vsel %vm72, %v38, 0
    %v77 = vsel %vm72, %v39, 0
    %79 = vmatprep.subr.mxu0 0.0
    %80 = vmatpush1.msra.mxu0 %v40
    %81 = vmatprep.subr.mxu0 0.0
    %82 = vmatpush1.msra.mxu0 %v41
    %83 = vmatprep.subr.mxu0 0.0
    %84 = vmatpush1.msra.mxu0 %v42
    %85 = vmatprep.subr.mxu0 0.0
    %86 = vmatpush1.msra.mxu0 %v43
    %87 = vmatprep.subr.mxu0 0.0
    %88 = vmatpush1.msra.mxu0 0.0
    %89 = vmatprep.subr.mxu0 0.0
    %90 = vmatpush1.msra.mxu0 0.0
    %91 = vmatprep.subr.mxu0 0.0
    %92 = vmatpush1.msra.mxu0 0.0
    %93 = vmatprep.subr.mxu0 0.0
    %94 = vmatpush1.msra.mxu0 0.0
    %95 = vmatprep.subr.mxu0 0.0
    %96 = vmatpush1.msra.mxu0 0.0
    %97 = vmatprep.subr.mxu0 0.0
    %98 = vmatpush1.msra.mxu0 0.0
    %99 = vmatprep.subr.mxu0 0.0
    %100 = vmatpush1.msra.mxu0 0.0
    %101 = vmatprep.subr.mxu0 0.0
    %102 = vmatpush1.msra.mxu0 0.0
    %103 = vmatprep.subr.mxu0 0.0
    %104 = vmatpush1.msra.mxu0 0.0
    %105 = vmatprep.subr.mxu0 0.0
    %106 = vmatpush1.msra.mxu0 0.0
    %107 = vmatprep.subr.mxu0 0.0
    %108 = vmatpush1.msra.mxu0 0.0
    %109 = vmatprep.subr.mxu0 0.0
    %110 = vmatpush1.msra.mxu0 0.0
    %111 = vmatprep.subr.mxu0 0.0
    %112 = vmatpush1.msra.mxu0 0.0
    %113 = vmatprep.subr.mxu0 0.0
    %114 = vmatpush1.msra.mxu0 0.0
    %115 = vmatprep.subr.mxu0 0.0
    %116 = vmatpush1.msra.mxu0 0.0
    %117 = vmatprep.subr.mxu0 0.0
    %118 = vmatpush1.msra.mxu0 0.0
    %119 = vmatprep.subr.mxu0 0.0
    %120 = vmatpush1.msra.mxu0 0.0
    %121 = vmatprep.subr.mxu0 0.0
    %122 = vmatpush1.msra.mxu0 0.0
    %123 = vmatprep.subr.mxu0 0.0
    %124 = vmatpush1.msra.mxu0 0.0
    %125 = vmatprep.subr.mxu0 0.0
    %126 = vmatpush1.msra.mxu0 0.0
    %127 = vmatprep.subr.mxu0 0.0
    %128 = vmatpush1.msra.mxu0 0.0
    %129 = vmatprep.subr.mxu0 0.0
    %130 = vmatpush1.msra.mxu0 0.0
    %131 = vmatprep.subr.mxu0 0.0
    %132 = vmatpush1.msra.mxu0 0.0
    %133 = vmatprep.subr.mxu0 0.0
    %134 = vmatpush1.msra.mxu0 0.0
    %135 = vmatprep.subr.mxu0 0.0
    %136 = vmatpush1.msra.mxu0 0.0
    %137 = vmatprep.subr.mxu0 0.0
    %138 = vmatpush1.msra.mxu0 0.0
    %139 = vmatprep.subr.mxu0 0.0
    %140 = vmatpush1.msra.mxu0 0.0
    %141 = vmatprep.subr.mxu0 0.0
    %142 = vmatpush1.msra.mxu0 0.0
    %143 = vmatprep.mubr.f32.mxu0 0.0
    %144 = vmatmul.mubr.f32.gmra.mrb[0].mxu0 %v74
    %v145 = vpop.f32.mrb[0].mxu0
    %v146 = vadd.f32 %v71, %v145
    %v147 = vpop.f32.mrb[0].mxu0
    %148 = vmatprep.mubr.f32.mxu0 0.0
    %149 = vmatmul.mubr.f32.gmra.mrb[0].mxu0 %v77
    %v150 = vpop.f32.mrb[0].mxu0
    %v151 = vadd.f32 %v71, %v150
    %v152 = vpop.f32.mrb[0].mxu0
    %153 = vdwg.mxu0
    %156 = vrot.lane.b32.xlu0 %v146, 104
    %v157 = vpop.permute.xlu0 %156
    %158 = vrot.lane.b32.xlu0 %v151, 104
    %v159 = vpop.permute.xlu0 %158
    %160 = vrot.lane.b32.xlu0 %v146, 80
    %v161 = vpop.permute.xlu0 %160
    %162 = vrot.lane.b32.xlu0 %v151, 80
    %v163 = vpop.permute.xlu0 %162
    %164 = vrot.lane.b32.xlu0 %v146, 56
    %v165 = vpop.permute.xlu0 %164
    %166 = vrot.lane.b32.xlu0 %v151, 56
    %v167 = vpop.permute.xlu0 %166
    %168 = vrot.lane.b32.xlu0 %v146, 120
    %v169 = vpop.permute.xlu0 %168
    %vm170 = vcmask 64512
    %v171 = vsel %vm170, %v146, 0
    %v173 = vsel %vm170, %v169, 0
    %175 = vmatprep.subr.mxu0 0.0
    %176 = vmatpush1.xpose.msra.mxu0 %v173
    %177 = vmatprep.subr.mxu0 0.0
    %178 = vmatpush1.xpose.msra.mxu0 0.0
    %179 = vmatprep.subr.mxu0 0.0
    %180 = vmatpush1.xpose.msra.mxu0 0.0
    %181 = vmatprep.subr.mxu0 0.0
    %182 = vmatpush1.xpose.msra.mxu0 0.0
    %183 = vmatprep.subr.mxu0 0.0
    %184 = vmatpush1.xpose.msra.mxu0 0.0
    %185 = vmatprep.subr.mxu0 0.0
    %186 = vmatpush1.xpose.msra.mxu0 0.0
    %187 = vmatprep.subr.mxu0 0.0
    %188 = vmatpush1.xpose.msra.mxu0 0.0
    %189 = vmatprep.subr.mxu0 0.0
    %190 = vmatpush1.xpose.msra.mxu0 0.0
    %191 = vmatprep.subr.mxu0 0.0
    %192 = vmatpush1.xpose.msra.mxu0 0.0
    %193 = vmatprep.subr.mxu0 0.0
    %194 = vmatpush1.xpose.msra.mxu0 0.0
    %195 = vmatprep.subr.mxu0 0.0
    %196 = vmatpush1.xpose.msra.mxu0 0.0
    %197 = vmatprep.subr.mxu0 0.0
    %198 = vmatpush1.xpose.msra.mxu0 0.0
    %199 = vmatprep.subr.mxu0 0.0
    %200 = vmatpush1.xpose.msra.mxu0 0.0
    %201 = vmatprep.subr.mxu0 0.0
    %202 = vmatpush1.xpose.msra.mxu0 0.0
    %203 = vmatprep.subr.mxu0 0.0
    %204 = vmatpush1.xpose.msra.mxu0 0.0
    %205 = vmatprep.subr.mxu0 0.0
    %206 = vmatpush1.xpose.msra.mxu0 0.0
    %207 = vmatprep.subr.mxu0 0.0
    %208 = vmatpush1.xpose.msra.mxu0 0.0
    %209 = vmatprep.subr.mxu0 0.0
    %210 = vmatpush1.xpose.msra.mxu0 0.0
    %211 = vmatprep.subr.mxu0 0.0
    %212 = vmatpush1.xpose.msra.mxu0 0.0
    %213 = vmatprep.subr.mxu0 0.0
    %214 = vmatpush1.xpose.msra.mxu0 0.0
    %215 = vmatprep.subr.mxu0 0.0
    %216 = vmatpush1.xpose.msra.mxu0 0.0
    %217 = vmatprep.subr.mxu0 0.0
    %218 = vmatpush1.xpose.msra.mxu0 0.0
    %219 = vmatprep.subr.mxu0 0.0
    %220 = vmatpush1.xpose.msra.mxu0 0.0
    %221 = vmatprep.subr.mxu0 0.0
    %222 = vmatpush1.xpose.msra.mxu0 0.0
    %223 = vmatprep.subr.mxu0 0.0
    %224 = vmatpush1.xpose.msra.mxu0 0.0
    %225 = vmatprep.subr.mxu0 0.0
    %226 = vmatpush1.xpose.msra.mxu0 0.0
    %227 = vmatprep.subr.mxu0 0.0
    %228 = vmatpush1.xpose.msra.mxu0 0.0
    %229 = vmatprep.subr.mxu0 0.0
    %230 = vmatpush1.xpose.msra.mxu0 0.0
    %231 = vmatprep.subr.mxu0 0.0
    %232 = vmatpush1.xpose.msra.mxu0 0.0
    %233 = vmatprep.subr.mxu0 0.0
    %234 = vmatpush1.xpose.msra.mxu0 0.0
    %235 = vmatprep.subr.mxu0 0.0
    %236 = vmatpush1.xpose.msra.mxu0 0.0
    %237 = vmatprep.subr.mxu0 0.0
    %238 = vmatpush1.xpose.msra.mxu0 0.0
    %239 = vmatprep.mubr.f32.mxu0 0.0
    %240 = vmatmul.mubr.f32.gmra.mrb[0].mxu0 %v171
    %v241 = vpop.f32.mrb[0].mxu0
    %v242 = vadd.f32 0.0, %v241
    %v243 = vpop.f32.mrb[0].mxu0
    %244 = vdwg.mxu0
    %245 = vrot.lane.b32.xlu0 %v151, 120
    %v246 = vpop.permute.xlu0 %245
    %v247 = vsel %vm170, %v151, 0
    %v249 = vsel %vm170, %v246, 0
    %251 = vmatprep.subr.mxu0 0.0
    %252 = vmatpush1.xpose.msra.mxu0 %v249
    %253 = vmatprep.subr.mxu0 0.0
    %254 = vmatpush1.xpose.msra.mxu0 0.0
    %255 = vmatprep.subr.mxu0 0.0
    %256 = vmatpush1.xpose.msra.mxu0 0.0
    %257 = vmatprep.subr.mxu0 0.0
    %258 = vmatpush1.xpose.msra.mxu0 0.0
    %259 = vmatprep.subr.mxu0 0.0
    %260 = vmatpush1.xpose.msra.mxu0 0.0
    %261 = vmatprep.subr.mxu0 0.0
    %262 = vmatpush1.xpose.msra.mxu0 0.0
    %263 = vmatprep.subr.mxu0 0.0
    %264 = vmatpush1.xpose.msra.mxu0 0.0
    %265 = vmatprep.subr.mxu0 0.0
    %266 = vmatpush1.xpose.msra.mxu0 0.0
    %267 = vmatprep.subr.mxu0 0.0
    %268 = vmatpush1.xpose.msra.mxu0 0.0
    %269 = vmatprep.subr.mxu0 0.0
    %270 = vmatpush1.xpose.msra.mxu0 0.0
    %271 = vmatprep.subr.mxu0 0.0
    %272 = vmatpush1.xpose.msra.mxu0 0.0
    %273 = vmatprep.subr.mxu0 0.0
    %274 = vmatpush1.xpose.msra.mxu0 0.0
    %275 = vmatprep.subr.mxu0 0.0
    %276 = vmatpush1.xpose.msra.mxu0 0.0
    %277 = vmatprep.subr.mxu0 0.0
    %278 = vmatpush1.xpose.msra.mxu0 0.0
    %279 = vmatprep.subr.mxu0 0.0
    %280 = vmatpush1.xpose.msra.mxu0 0.0
    %281 = vmatprep.subr.mxu0 0.0
    %282 = vmatpush1.xpose.msra.mxu0 0.0
    %283 = vmatprep.subr.mxu0 0.0
    %284 = vmatpush1.xpose.msra.mxu0 0.0
    %285 = vmatprep.subr.mxu0 0.0
    %286 = vmatpush1.xpose.msra.mxu0 0.0
    %287 = vmatprep.subr.mxu0 0.0
    %288 = vmatpush1.xpose.msra.mxu0 0.0
    %289 = vmatprep.subr.mxu0 0.0
    %290 = vmatpush1.xpose.msra.mxu0 0.0
    %291 = vmatprep.subr.mxu0 0.0
    %292 = vmatpush1.xpose.msra.mxu0 0.0
    %293 = vmatprep.subr.mxu0 0.0
    %294 = vmatpush1.xpose.msra.mxu0 0.0
    %295 = vmatprep.subr.mxu0 0.0
    %296 = vmatpush1.xpose.msra.mxu0 0.0
    %297 = vmatprep.subr.mxu0 0.0
    %298 = vmatpush1.xpose.msra.mxu0 0.0
    %299 = vmatprep.subr.mxu0 0.0
    %300 = vmatpush1.xpose.msra.mxu0 0.0
    %301 = vmatprep.subr.mxu0 0.0
    %302 = vmatpush1.xpose.msra.mxu0 0.0
    %303 = vmatprep.subr.mxu0 0.0
    %304 = vmatpush1.xpose.msra.mxu0 0.0
    %305 = vmatprep.subr.mxu0 0.0
    %306 = vmatpush1.xpose.msra.mxu0 0.0
    %307 = vmatprep.subr.mxu0 0.0
    %308 = vmatpush1.xpose.msra.mxu0 0.0
    %309 = vmatprep.subr.mxu0 0.0
    %310 = vmatpush1.xpose.msra.mxu0 0.0
    %311 = vmatprep.subr.mxu0 0.0
    %312 = vmatpush1.xpose.msra.mxu0 0.0
    %313 = vmatprep.subr.mxu0 0.0
    %314 = vmatpush1.xpose.msra.mxu0 0.0
    %315 = vmatprep.mubr.f32.mxu0 0.0
    %316 = vmatmul.mubr.f32.gmra.mrb[0].mxu0 %v247
    %v317 = vpop.f32.mrb[0].mxu0
    %v318 = vadd.f32 0.0, %v317
    %v319 = vpop.f32.mrb[0].mxu0
    %320 = vdwg.mxu0
    %321 = vrot.lane.b32.xlu0 %v157, 120
    %v322 = vpop.permute.xlu0 %321
    %v323 = vsel %vm170, %v157, 0
    %v325 = vsel %vm170, %v322, 0
    %327 = vmatprep.subr.mxu0 0.0
    %328 = vmatpush1.xpose.msra.mxu0 %v325
    %329 = vmatprep.subr.mxu0 0.0
    %330 = vmatpush1.xpose.msra.mxu0 0.0
    %331 = vmatprep.subr.mxu0 0.0
    %332 = vmatpush1.xpose.msra.mxu0 0.0
    %333 = vmatprep.subr.mxu0 0.0
    %334 = vmatpush1.xpose.msra.mxu0 0.0
    %335 = vmatprep.subr.mxu0 0.0
    %336 = vmatpush1.xpose.msra.mxu0 0.0
    %337 = vmatprep.subr.mxu0 0.0
    %338 = vmatpush1.xpose.msra.mxu0 0.0
    %339 = vmatprep.subr.mxu0 0.0
    %340 = vmatpush1.xpose.msra.mxu0 0.0
    %341 = vmatprep.subr.mxu0 0.0
    %342 = vmatpush1.xpose.msra.mxu0 0.0
    %343 = vmatprep.subr.mxu0 0.0
    %344 = vmatpush1.xpose.msra.mxu0 0.0
    %345 = vmatprep.subr.mxu0 0.0
    %346 = vmatpush1.xpose.msra.mxu0 0.0
    %347 = vmatprep.subr.mxu0 0.0
    %348 = vmatpush1.xpose.msra.mxu0 0.0
    %349 = vmatprep.subr.mxu0 0.0
    %350 = vmatpush1.xpose.msra.mxu0 0.0
    %351 = vmatprep.subr.mxu0 0.0
    %352 = vmatpush1.xpose.msra.mxu0 0.0
    %353 = vmatprep.subr.mxu0 0.0
    %354 = vmatpush1.xpose.msra.mxu0 0.0
    %355 = vmatprep.subr.mxu0 0.0
    %356 = vmatpush1.xpose.msra.mxu0 0.0
    %357 = vmatprep.subr.mxu0 0.0
    %358 = vmatpush1.xpose.msra.mxu0 0.0
    %359 = vmatprep.subr.mxu0 0.0
    %360 = vmatpush1.xpose.msra.mxu0 0.0
    %361 = vmatprep.subr.mxu0 0.0
    %362 = vmatpush1.xpose.msra.mxu0 0.0
    %363 = vmatprep.subr.mxu0 0.0
    %364 = vmatpush1.xpose.msra.mxu0 0.0
    %365 = vmatprep.subr.mxu0 0.0
    %366 = vmatpush1.xpose.msra.mxu0 0.0
    %367 = vmatprep.subr.mxu0 0.0
    %368 = vmatpush1.xpose.msra.mxu0 0.0
    %369 = vmatprep.subr.mxu0 0.0
    %370 = vmatpush1.xpose.msra.mxu0 0.0
    %371 = vmatprep.subr.mxu0 0.0
    %372 = vmatpush1.xpose.msra.mxu0 0.0
    %373 = vmatprep.subr.mxu0 0.0
    %374 = vmatpush1.xpose.msra.mxu0 0.0
    %375 = vmatprep.subr.mxu0 0.0
    %376 = vmatpush1.xpose.msra.mxu0 0.0
    %377 = vmatprep.subr.mxu0 0.0
    %378 = vmatpush1.xpose.msra.mxu0 0.0
    %379 = vmatprep.subr.mxu0 0.0
    %380 = vmatpush1.xpose.msra.mxu0 0.0
    %381 = vmatprep.subr.mxu0 0.0
    %382 = vmatpush1.xpose.msra.mxu0 0.0
    %383 = vmatprep.subr.mxu0 0.0
    %384 = vmatpush1.xpose.msra.mxu0 0.0
    %385 = vmatprep.subr.mxu0 0.0
    %386 = vmatpush1.xpose.msra.mxu0 0.0
    %387 = vmatprep.subr.mxu0 0.0
    %388 = vmatpush1.xpose.msra.mxu0 0.0
    %389 = vmatprep.subr.mxu0 0.0
    %390 = vmatpush1.xpose.msra.mxu0 0.0
    %391 = vmatprep.mubr.f32.mxu0 0.0
    %392 = vmatmul.mubr.f32.gmra.mrb[0].mxu0 %v323
    %v393 = vpop.f32.mrb[0].mxu0
    %v394 = vadd.f32 0.0, %v393
    %v395 = vpop.f32.mrb[0].mxu0
    %396 = vdwg.mxu0
    %397 = vrot.lane.b32.xlu0 %v159, 120
    %v398 = vpop.permute.xlu0 %397
    %v399 = vsel %vm170, %v159, 0
    %v401 = vsel %vm170, %v398, 0
    %403 = vmatprep.subr.mxu0 0.0
    %404 = vmatpush1.xpose.msra.mxu0 %v401
    %405 = vmatprep.subr.mxu0 0.0
    %406 = vmatpush1.xpose.msra.mxu0 0.0
    %407 = vmatprep.subr.mxu0 0.0
    %408 = vmatpush1.xpose.msra.mxu0 0.0
    %409 = vmatprep.subr.mxu0 0.0
    %410 = vmatpush1.xpose.msra.mxu0 0.0
    %411 = vmatprep.subr.mxu0 0.0
    %412 = vmatpush1.xpose.msra.mxu0 0.0
    %413 = vmatprep.subr.mxu0 0.0
    %414 = vmatpush1.xpose.msra.mxu0 0.0
    %415 = vmatprep.subr.mxu0 0.0
    %416 = vmatpush1.xpose.msra.mxu0 0.0
    %417 = vmatprep.subr.mxu0 0.0
    %418 = vmatpush1.xpose.msra.mxu0 0.0
    %419 = vmatprep.subr.mxu0 0.0
    %420 = vmatpush1.xpose.msra.mxu0 0.0
    %421 = vmatprep.subr.mxu0 0.0
    %422 = vmatpush1.xpose.msra.mxu0 0.0
    %423 = vmatprep.subr.mxu0 0.0
    %424 = vmatpush1.xpose.msra.mxu0 0.0
    %425 = vmatprep.subr.mxu0 0.0
    %426 = vmatpush1.xpose.msra.mxu0 0.0
    %427 = vmatprep.subr.mxu0 0.0
    %428 = vmatpush1.xpose.msra.mxu0 0.0
    %429 = vmatprep.subr.mxu0 0.0
    %430 = vmatpush1.xpose.msra.mxu0 0.0
    %431 = vmatprep.subr.mxu0 0.0
    %432 = vmatpush1.xpose.msra.mxu0 0.0
    %433 = vmatprep.subr.mxu0 0.0
    %434 = vmatpush1.xpose.msra.mxu0 0.0
    %435 = vmatprep.subr.mxu0 0.0
    %436 = vmatpush1.xpose.msra.mxu0 0.0
    %437 = vmatprep.subr.mxu0 0.0
    %438 = vmatpush1.xpose.msra.mxu0 0.0
    %439 = vmatprep.subr.mxu0 0.0
    %440 = vmatpush1.xpose.msra.mxu0 0.0
    %441 = vmatprep.subr.mxu0 0.0
    %442 = vmatpush1.xpose.msra.mxu0 0.0
    %443 = vmatprep.subr.mxu0 0.0
    %444 = vmatpush1.xpose.msra.mxu0 0.0
    %445 = vmatprep.subr.mxu0 0.0
    %446 = vmatpush1.xpose.msra.mxu0 0.0
    %447 = vmatprep.subr.mxu0 0.0
    %448 = vmatpush1.xpose.msra.mxu0 0.0
    %449 = vmatprep.subr.mxu0 0.0
    %450 = vmatpush1.xpose.msra.mxu0 0.0
    %451 = vmatprep.subr.mxu0 0.0
    %452 = vmatpush1.xpose.msra.mxu0 0.0
    %453 = vmatprep.subr.mxu0 0.0
    %454 = vmatpush1.xpose.msra.mxu0 0.0
    %455 = vmatprep.subr.mxu0 0.0
    %456 = vmatpush1.xpose.msra.mxu0 0.0
    %457 = vmatprep.subr.mxu0 0.0
    %458 = vmatpush1.xpose.msra.mxu0 0.0
    %459 = vmatprep.subr.mxu0 0.0
    %460 = vmatpush1.xpose.msra.mxu0 0.0
    %461 = vmatprep.subr.mxu0 0.0
    %462 = vmatpush1.xpose.msra.mxu0 0.0
    %463 = vmatprep.subr.mxu0 0.0
    %464 = vmatpush1.xpose.msra.mxu0 0.0
    %465 = vmatprep.subr.mxu0 0.0
    %466 = vmatpush1.xpose.msra.mxu0 0.0
    %467 = vmatprep.mubr.f32.mxu0 0.0
    %468 = vmatmul.mubr.f32.gmra.mrb[0].mxu0 %v399
    %v469 = vpop.f32.mrb[0].mxu0
    %v470 = vadd.f32 0.0, %v469
    %v471 = vpop.f32.mrb[0].mxu0
    %472 = vdwg.mxu0
    %473 = vrot.lane.b32.xlu0 %v161, 120
    %v474 = vpop.permute.xlu0 %473
    %v475 = vsel %vm170, %v161, 0
    %v477 = vsel %vm170, %v474, 0
    %479 = vmatprep.subr.mxu0 0.0
    %480 = vmatpush1.xpose.msra.mxu0 %v477
    %481 = vmatprep.subr.mxu0 0.0
    %482 = vmatpush1.xpose.msra.mxu0 0.0
    %483 = vmatprep.subr.mxu0 0.0
    %484 = vmatpush1.xpose.msra.mxu0 0.0
    %485 = vmatprep.subr.mxu0 0.0
    %486 = vmatpush1.xpose.msra.mxu0 0.0
    %487 = vmatprep.subr.mxu0 0.0
    %488 = vmatpush1.xpose.msra.mxu0 0.0
    %489 = vmatprep.subr.mxu0 0.0
    %490 = vmatpush1.xpose.msra.mxu0 0.0
    %491 = vmatprep.subr.mxu0 0.0
    %492 = vmatpush1.xpose.msra.mxu0 0.0
    %493 = vmatprep.subr.mxu0 0.0
    %494 = vmatpush1.xpose.msra.mxu0 0.0
    %495 = vmatprep.subr.mxu0 0.0
    %496 = vmatpush1.xpose.msra.mxu0 0.0
    %497 = vmatprep.subr.mxu0 0.0
    %498 = vmatpush1.xpose.msra.mxu0 0.0
    %499 = vmatprep.subr.mxu0 0.0
    %500 = vmatpush1.xpose.msra.mxu0 0.0
    %501 = vmatprep.subr.mxu0 0.0
    %502 = vmatpush1.xpose.msra.mxu0 0.0
    %503 = vmatprep.subr.mxu0 0.0
    %504 = vmatpush1.xpose.msra.mxu0 0.0
    %505 = vmatprep.subr.mxu0 0.0
    %506 = vmatpush1.xpose.msra.mxu0 0.0
    %507 = vmatprep.subr.mxu0 0.0
    %508 = vmatpush1.xpose.msra.mxu0 0.0
    %509 = vmatprep.subr.mxu0 0.0
    %510 = vmatpush1.xpose.msra.mxu0 0.0
    %511 = vmatprep.subr.mxu0 0.0
    %512 = vmatpush1.xpose.msra.mxu0 0.0
    %513 = vmatprep.subr.mxu0 0.0
    %514 = vmatpush1.xpose.msra.mxu0 0.0
    %515 = vmatprep.subr.mxu0 0.0
    %516 = vmatpush1.xpose.msra.mxu0 0.0
    %517 = vmatprep.subr.mxu0 0.0
    %518 = vmatpush1.xpose.msra.mxu0 0.0
    %519 = vmatprep.subr.mxu0 0.0
    %520 = vmatpush1.xpose.msra.mxu0 0.0
    %521 = vmatprep.subr.mxu0 0.0
    %522 = vmatpush1.xpose.msra.mxu0 0.0
    %523 = vmatprep.subr.mxu0 0.0
    %524 = vmatpush1.xpose.msra.mxu0 0.0
    %525 = vmatprep.subr.mxu0 0.0
    %526 = vmatpush1.xpose.msra.mxu0 0.0
    %527 = vmatprep.subr.mxu0 0.0
    %528 = vmatpush1.xpose.msra.mxu0 0.0
    %529 = vmatprep.subr.mxu0 0.0
    %530 = vmatpush1.xpose.msra.mxu0 0.0
    %531 = vmatprep.subr.mxu0 0.0
    %532 = vmatpush1.xpose.msra.mxu0 0.0
    %533 = vmatprep.subr.mxu0 0.0
    %534 = vmatpush1.xpose.msra.mxu0 0.0
    %535 = vmatprep.subr.mxu0 0.0
    %536 = vmatpush1.xpose.msra.mxu0 0.0
    %537 = vmatprep.subr.mxu0 0.0
    %538 = vmatpush1.xpose.msra.mxu0 0.0
    %539 = vmatprep.subr.mxu0 0.0
    %540 = vmatpush1.xpose.msra.mxu0 0.0
    %541 = vmatprep.subr.mxu0 0.0
    %542 = vmatpush1.xpose.msra.mxu0 0.0
    %543 = vmatprep.mubr.f32.mxu0 0.0
    %544 = vmatmul.mubr.f32.gmra.mrb[0].mxu0 %v475
    %v545 = vpop.f32.mrb[0].mxu0
    %v546 = vadd.f32 0.0, %v545
    %v547 = vpop.f32.mrb[0].mxu0
    %548 = vdwg.mxu0
    %549 = vrot.lane.b32.xlu0 %v163, 120
    %v550 = vpop.permute.xlu0 %549
    %v551 = vsel %vm170, %v163, 0
    %v553 = vsel %vm170, %v550, 0
    %555 = vmatprep.subr.mxu0 0.0
    %556 = vmatpush1.xpose.msra.mxu0 %v553
    %557 = vmatprep.subr.mxu0 0.0
    %558 = vmatpush1.xpose.msra.mxu0 0.0
    %559 = vmatprep.subr.mxu0 0.0
    %560 = vmatpush1.xpose.msra.mxu0 0.0
    %561 = vmatprep.subr.mxu0 0.0
    %562 = vmatpush1.xpose.msra.mxu0 0.0
    %563 = vmatprep.subr.mxu0 0.0
    %564 = vmatpush1.xpose.msra.mxu0 0.0
    %565 = vmatprep.subr.mxu0 0.0
    %566 = vmatpush1.xpose.msra.mxu0 0.0
    %567 = vmatprep.subr.mxu0 0.0
    %568 = vmatpush1.xpose.msra.mxu0 0.0
    %569 = vmatprep.subr.mxu0 0.0
    %570 = vmatpush1.xpose.msra.mxu0 0.0
    %571 = vmatprep.subr.mxu0 0.0
    %572 = vmatpush1.xpose.msra.mxu0 0.0
    %573 = vmatprep.subr.mxu0 0.0
    %574 = vmatpush1.xpose.msra.mxu0 0.0
    %575 = vmatprep.subr.mxu0 0.0
    %576 = vmatpush1.xpose.msra.mxu0 0.0
    %577 = vmatprep.subr.mxu0 0.0
    %578 = vmatpush1.xpose.msra.mxu0 0.0
    %579 = vmatprep.subr.mxu0 0.0
    %580 = vmatpush1.xpose.msra.mxu0 0.0
    %581 = vmatprep.subr.mxu0 0.0
    %582 = vmatpush1.xpose.msra.mxu0 0.0
    %583 = vmatprep.subr.mxu0 0.0
    %584 = vmatpush1.xpose.msra.mxu0 0.0
    %585 = vmatprep.subr.mxu0 0.0
    %586 = vmatpush1.xpose.msra.mxu0 0.0
    %587 = vmatprep.subr.mxu0 0.0
    %588 = vmatpush1.xpose.msra.mxu0 0.0
    %589 = vmatprep.subr.mxu0 0.0
    %590 = vmatpush1.xpose.msra.mxu0 0.0
    %591 = vmatprep.subr.mxu0 0.0
    %592 = vmatpush1.xpose.msra.mxu0 0.0
    %593 = vmatprep.subr.mxu0 0.0
    %594 = vmatpush1.xpose.msra.mxu0 0.0
    %595 = vmatprep.subr.mxu0 0.0
    %596 = vmatpush1.xpose.msra.mxu0 0.0
    %597 = vmatprep.subr.mxu0 0.0
    %598 = vmatpush1.xpose.msra.mxu0 0.0
    %599 = vmatprep.subr.mxu0 0.0
    %600 = vmatpush1.xpose.msra.mxu0 0.0
    %601 = vmatprep.subr.mxu0 0.0
    %602 = vmatpush1.xpose.msra.mxu0 0.0
    %603 = vmatprep.subr.mxu0 0.0
    %604 = vmatpush1.xpose.msra.mxu0 0.0
    %605 = vmatprep.subr.mxu0 0.0
    %606 = vmatpush1.xpose.msra.mxu0 0.0
    %607 = vmatprep.subr.mxu0 0.0
    %608 = vmatpush1.xpose.msra.mxu0 0.0
    %609 = vmatprep.subr.mxu0 0.0
    %610 = vmatpush1.xpose.msra.mxu0 0.0
    %611 = vmatprep.subr.mxu0 0.0
    %612 = vmatpush1.xpose.msra.mxu0 0.0
    %613 = vmatprep.subr.mxu0 0.0
    %614 = vmatpush1.xpose.msra.mxu0 0.0
    %615 = vmatprep.subr.mxu0 0.0
    %616 = vmatpush1.xpose.msra.mxu0 0.0
    %617 = vmatprep.subr.mxu0 0.0
    %618 = vmatpush1.xpose.msra.mxu0 0.0
    %619 = vmatprep.mubr.f32.mxu0 0.0
    %620 = vmatmul.mubr.f32.gmra.mrb[0].mxu0 %v551
    %v621 = vpop.f32.mrb[0].mxu0
    %v622 = vadd.f32 0.0, %v621
    %v623 = vpop.f32.mrb[0].mxu0
    %624 = vdwg.mxu0
    %625 = vrot.lane.b32.xlu0 %v165, 120
    %v626 = vpop.permute.xlu0 %625
    %v627 = vsel %vm170, %v165, 0
    %v629 = vsel %vm170, %v626, 0
    %631 = vmatprep.subr.mxu0 0.0
    %632 = vmatpush1.xpose.msra.mxu0 %v629
    %633 = vmatprep.subr.mxu0 0.0
    %634 = vmatpush1.xpose.msra.mxu0 0.0
    %635 = vmatprep.subr.mxu0 0.0
    %636 = vmatpush1.xpose.msra.mxu0 0.0
    %637 = vmatprep.subr.mxu0 0.0
    %638 = vmatpush1.xpose.msra.mxu0 0.0
    %639 = vmatprep.subr.mxu0 0.0
    %640 = vmatpush1.xpose.msra.mxu0 0.0
    %641 = vmatprep.subr.mxu0 0.0
    %642 = vmatpush1.xpose.msra.mxu0 0.0
    %643 = vmatprep.subr.mxu0 0.0
    %644 = vmatpush1.xpose.msra.mxu0 0.0
    %645 = vmatprep.subr.mxu0 0.0
    %646 = vmatpush1.xpose.msra.mxu0 0.0
    %647 = vmatprep.subr.mxu0 0.0
    %648 = vmatpush1.xpose.msra.mxu0 0.0
    %649 = vmatprep.subr.mxu0 0.0
    %650 = vmatpush1.xpose.msra.mxu0 0.0
    %651 = vmatprep.subr.mxu0 0.0
    %652 = vmatpush1.xpose.msra.mxu0 0.0
    %653 = vmatprep.subr.mxu0 0.0
    %654 = vmatpush1.xpose.msra.mxu0 0.0
    %655 = vmatprep.subr.mxu0 0.0
    %656 = vmatpush1.xpose.msra.mxu0 0.0
    %657 = vmatprep.subr.mxu0 0.0
    %658 = vmatpush1.xpose.msra.mxu0 0.0
    %659 = vmatprep.subr.mxu0 0.0
    %660 = vmatpush1.xpose.msra.mxu0 0.0
    %661 = vmatprep.subr.mxu0 0.0
    %662 = vmatpush1.xpose.msra.mxu0 0.0
    %663 = vmatprep.subr.mxu0 0.0
    %664 = vmatpush1.xpose.msra.mxu0 0.0
    %665 = vmatprep.subr.mxu0 0.0
    %666 = vmatpush1.xpose.msra.mxu0 0.0
    %667 = vmatprep.subr.mxu0 0.0
    %668 = vmatpush1.xpose.msra.mxu0 0.0
    %669 = vmatprep.subr.mxu0 0.0
    %670 = vmatpush1.xpose.msra.mxu0 0.0
    %671 = vmatprep.subr.mxu0 0.0
    %672 = vmatpush1.xpose.msra.mxu0 0.0
    %673 = vmatprep.subr.mxu0 0.0
    %674 = vmatpush1.xpose.msra.mxu0 0.0
    %675 = vmatprep.subr.mxu0 0.0
    %676 = vmatpush1.xpose.msra.mxu0 0.0
    %677 = vmatprep.subr.mxu0 0.0
    %678 = vmatpush1.xpose.msra.mxu0 0.0
    %679 = vmatprep.subr.mxu0 0.0
    %680 = vmatpush1.xpose.msra.mxu0 0.0
    %681 = vmatprep.subr.mxu0 0.0
    %682 = vmatpush1.xpose.msra.mxu0 0.0
    %683 = vmatprep.subr.mxu0 0.0
    %684 = vmatpush1.xpose.msra.mxu0 0.0
    %685 = vmatprep.subr.mxu0 0.0
    %686 = vmatpush1.xpose.msra.mxu0 0.0
    %687 = vmatprep.subr.mxu0 0.0
    %688 = vmatpush1.xpose.msra.mxu0 0.0
    %689 = vmatprep.subr.mxu0 0.0
    %690 = vmatpush1.xpose.msra.mxu0 0.0
    %691 = vmatprep.subr.mxu0 0.0
    %692 = vmatpush1.xpose.msra.mxu0 0.0
    %693 = vmatprep.subr.mxu0 0.0
    %694 = vmatpush1.xpose.msra.mxu0 0.0
    %695 = vmatprep.mubr.f32.mxu0 0.0
    %696 = vmatmul.mubr.f32.gmra.mrb[0].mxu0 %v627
    %v697 = vpop.f32.mrb[0].mxu0
    %v698 = vadd.f32 0.0, %v697
    %v699 = vpop.f32.mrb[0].mxu0
    %700 = vdwg.mxu0
    %701 = vrot.lane.b32.xlu0 %v167, 120
    %v702 = vpop.permute.xlu0 %701
    %v703 = vsel %vm170, %v167, 0
    %v705 = vsel %vm170, %v702, 0
    %707 = vmatprep.subr.mxu0 0.0
    %708 = vmatpush1.xpose.msra.mxu0 %v705
    %709 = vmatprep.subr.mxu0 0.0
    %710 = vmatpush1.xpose.msra.mxu0 0.0
    %711 = vmatprep.subr.mxu0 0.0
    %712 = vmatpush1.xpose.msra.mxu0 0.0
    %713 = vmatprep.subr.mxu0 0.0
    %714 = vmatpush1.xpose.msra.mxu0 0.0
    %715 = vmatprep.subr.mxu0 0.0
    %716 = vmatpush1.xpose.msra.mxu0 0.0
    %717 = vmatprep.subr.mxu0 0.0
    %718 = vmatpush1.xpose.msra.mxu0 0.0
    %719 = vmatprep.subr.mxu0 0.0
    %720 = vmatpush1.xpose.msra.mxu0 0.0
    %721 = vmatprep.subr.mxu0 0.0
    %722 = vmatpush1.xpose.msra.mxu0 0.0
    %723 = vmatprep.subr.mxu0 0.0
    %724 = vmatpush1.xpose.msra.mxu0 0.0
    %725 = vmatprep.subr.mxu0 0.0
    %726 = vmatpush1.xpose.msra.mxu0 0.0
    %727 = vmatprep.subr.mxu0 0.0
    %728 = vmatpush1.xpose.msra.mxu0 0.0
    %729 = vmatprep.subr.mxu0 0.0
    %730 = vmatpush1.xpose.msra.mxu0 0.0
    %731 = vmatprep.subr.mxu0 0.0
    %732 = vmatpush1.xpose.msra.mxu0 0.0
    %733 = vmatprep.subr.mxu0 0.0
    %734 = vmatpush1.xpose.msra.mxu0 0.0
    %735 = vmatprep.subr.mxu0 0.0
    %736 = vmatpush1.xpose.msra.mxu0 0.0
    %737 = vmatprep.subr.mxu0 0.0
    %738 = vmatpush1.xpose.msra.mxu0 0.0
    %739 = vmatprep.subr.mxu0 0.0
    %740 = vmatpush1.xpose.msra.mxu0 0.0
    %741 = vmatprep.subr.mxu0 0.0
    %742 = vmatpush1.xpose.msra.mxu0 0.0
    %743 = vmatprep.subr.mxu0 0.0
    %744 = vmatpush1.xpose.msra.mxu0 0.0
    %745 = vmatprep.subr.mxu0 0.0
    %746 = vmatpush1.xpose.msra.mxu0 0.0
    %747 = vmatprep.subr.mxu0 0.0
    %748 = vmatpush1.xpose.msra.mxu0 0.0
    %749 = vmatprep.subr.mxu0 0.0
    %750 = vmatpush1.xpose.msra.mxu0 0.0
    %751 = vmatprep.subr.mxu0 0.0
    %752 = vmatpush1.xpose.msra.mxu0 0.0
    %753 = vmatprep.subr.mxu0 0.0
    %754 = vmatpush1.xpose.msra.mxu0 0.0
    %755 = vmatprep.subr.mxu0 0.0
    %756 = vmatpush1.xpose.msra.mxu0 0.0
    %757 = vmatprep.subr.mxu0 0.0
    %758 = vmatpush1.xpose.msra.mxu0 0.0
    %759 = vmatprep.subr.mxu0 0.0
    %760 = vmatpush1.xpose.msra.mxu0 0.0
    %761 = vmatprep.subr.mxu0 0.0
    %762 = vmatpush1.xpose.msra.mxu0 0.0
    %763 = vmatprep.subr.mxu0 0.0
    %764 = vmatpush1.xpose.msra.mxu0 0.0
    %765 = vmatprep.subr.mxu0 0.0
    %766 = vmatpush1.xpose.msra.mxu0 0.0
    %767 = vmatprep.subr.mxu0 0.0
    %768 = vmatpush1.xpose.msra.mxu0 0.0
    %769 = vmatprep.subr.mxu0 0.0
    %770 = vmatpush1.xpose.msra.mxu0 0.0
    %771 = vmatprep.mubr.f32.mxu0 0.0
    %772 = vmatmul.mubr.f32.gmra.mrb[0].mxu0 %v703
    %v773 = vpop.f32.mrb[0].mxu0
    %v774 = vadd.f32 0.0, %v773
    %v775 = vpop.f32.mrb[0].mxu0
    %776 = vdwg.mxu0
    %v777 = vsel %vm170, %v242, -inf
    %778 = vmax.xlane.f32.xlu0 %v777
    %v779 = vpop.xlane.xlu0 %778
    %v780 = vsel %vm170, %v318, -inf
    %781 = vmax.xlane.f32.xlu0 %v780
    %v782 = vpop.xlane.xlu0 %781
    %v783 = vsel %vm170, %v394, -inf
    %784 = vmax.xlane.f32.xlu0 %v783
    %v785 = vpop.xlane.xlu0 %784
    %v786 = vsel %vm170, %v470, -inf
    %787 = vmax.xlane.f32.xlu0 %v786
    %v788 = vpop.xlane.xlu0 %787
    %v789 = vsel %vm170, %v546, -inf
    %790 = vmax.xlane.f32.xlu0 %v789
    %v791 = vpop.xlane.xlu0 %790
    %v792 = vsel %vm170, %v622, -inf
    %793 = vmax.xlane.f32.xlu0 %v792
    %v794 = vpop.xlane.xlu0 %793
    %v795 = vsel %vm170, %v698, -inf
    %796 = vmax.xlane.f32.xlu0 %v795
    %v797 = vpop.xlane.xlu0 %796
    %v798 = vsel %vm170, %v774, -inf
    %799 = vmax.xlane.f32.xlu0 %v798
    %v800 = vpop.xlane.xlu0 %799
    %v801 = vsub.f32 %v242, %v779
    %v802 = vsub.f32 %v318, %v782
    %v803 = vsub.f32 %v394, %v785
    %v804 = vsub.f32 %v470, %v788
    %v805 = vsub.f32 %v546, %v791
    %v806 = vsub.f32 %v622, %v794
    %v807 = vsub.f32 %v698, %v797
    %v808 = vsub.f32 %v774, %v800
    %v809 = vmul.f32 %v801, 1.442695
    %v810 = vpow.pop %v809
    %v811 = vmul.f32 %v802, 1.442695
    %v812 = vpow.pop %v811
    %v813 = vmul.f32 %v803, 1.442695
    %v814 = vpow.pop %v813
    %v815 = vmul.f32 %v804, 1.442695
    %v816 = vpow.pop %v815
    %v817 = vmul.f32 %v805, 1.442695
    %v818 = vpow.pop %v817
    %v819 = vmul.f32 %v806, 1.442695
    %v820 = vpow.pop %v819
    %v821 = vmul.f32 %v807, 1.442695
    %v822 = vpow.pop %v821
    %v823 = vmul.f32 %v808, 1.442695
    %v824 = vpow.pop %v823
    %v825 = vsel %vm170, %v810, 0.0
    %826 = vadd.xlane.f32.xlu0 %v825
    %v827 = vpop.xlane.xlu0 %826
    %v828 = vsel %vm170, %v812, 0.0
    %829 = vadd.xlane.f32.xlu0 %v828
    %v830 = vpop.xlane.xlu0 %829
    %v831 = vsel %vm170, %v814, 0.0
    %832 = vadd.xlane.f32.xlu0 %v831
    %v833 = vpop.xlane.xlu0 %832
    %v834 = vsel %vm170, %v816, 0.0
    %835 = vadd.xlane.f32.xlu0 %v834
    %v836 = vpop.xlane.xlu0 %835
    %v837 = vsel %vm170, %v818, 0.0
    %838 = vadd.xlane.f32.xlu0 %v837
    %v839 = vpop.xlane.xlu0 %838
    %v840 = vsel %vm170, %v820, 0.0
    %841 = vadd.xlane.f32.xlu0 %v840
    %v842 = vpop.xlane.xlu0 %841
    %v843 = vsel %vm170, %v822, 0.0
    %844 = vadd.xlane.f32.xlu0 %v843
    %v845 = vpop.xlane.xlu0 %844
    %v846 = vsel %vm170, %v824, 0.0
    %847 = vadd.xlane.f32.xlu0 %v846
    %v848 = vpop.xlane.xlu0 %847
    %v849 = vrcp.pop %v827
    %v850 = vmul.f32 %v810, %v849
    %v851 = vrcp.pop %v830
    %v852 = vmul.f32 %v812, %v851
    %v853 = vrcp.pop %v833
    %v854 = vmul.f32 %v814, %v853
    %v855 = vrcp.pop %v836
    %v856 = vmul.f32 %v816, %v855
    %v857 = vrcp.pop %v839
    %v858 = vmul.f32 %v818, %v857
    %v859 = vrcp.pop %v842
    %v860 = vmul.f32 %v820, %v859
    %v861 = vrcp.pop %v845
    %v862 = vmul.f32 %v822, %v861
    %v863 = vrcp.pop %v848
    %v864 = vmul.f32 %v824, %v863
    %865 = vrot.lane.b32.xlu0 %v146, 112
    %v866 = vpop.permute.xlu0 %865
    %v869 = vsel %vm170, %v850, 0
    %871 = vmatprep.subr.mxu0 0.0
    %872 = vmatpush1.msra.mxu0 %v866
    %873 = vmatprep.subr.mxu0 0.0
    %874 = vmatpush1.msra.mxu0 0.0
    %875 = vmatprep.subr.mxu0 0.0
    %876 = vmatpush1.msra.mxu0 0.0
    %877 = vmatprep.subr.mxu0 0.0
    %878 = vmatpush1.msra.mxu0 0.0
    %879 = vmatprep.subr.mxu0 0.0
    %880 = vmatpush1.msra.mxu0 0.0
    %881 = vmatprep.subr.mxu0 0.0
    %882 = vmatpush1.msra.mxu0 0.0
    %883 = vmatprep.subr.mxu0 0.0
    %884 = vmatpush1.msra.mxu0 0.0
    %885 = vmatprep.subr.mxu0 0.0
    %886 = vmatpush1.msra.mxu0 0.0
    %887 = vmatprep.subr.mxu0 0.0
    %888 = vmatpush1.msra.mxu0 0.0
    %889 = vmatprep.subr.mxu0 0.0
    %890 = vmatpush1.msra.mxu0 0.0
    %891 = vmatprep.subr.mxu0 0.0
    %892 = vmatpush1.msra.mxu0 0.0
    %893 = vmatprep.subr.mxu0 0.0
    %894 = vmatpush1.msra.mxu0 0.0
    %895 = vmatprep.subr.mxu0 0.0
    %896 = vmatpush1.msra.mxu0 0.0
    %897 = vmatprep.subr.mxu0 0.0
    %898 = vmatpush1.msra.mxu0 0.0
    %899 = vmatprep.subr.mxu0 0.0
    %900 = vmatpush1.msra.mxu0 0.0
    %901 = vmatprep.subr.mxu0 0.0
    %902 = vmatpush1.msra.mxu0 0.0
    %903 = vmatprep.subr.mxu0 0.0
    %904 = vmatpush1.msra.mxu0 0.0
    %905 = vmatprep.subr.mxu0 0.0
    %906 = vmatpush1.msra.mxu0 0.0
    %907 = vmatprep.subr.mxu0 0.0
    %908 = vmatpush1.msra.mxu0 0.0
    %909 = vmatprep.subr.mxu0 0.0
    %910 = vmatpush1.msra.mxu0 0.0
    %911 = vmatprep.subr.mxu0 0.0
    %912 = vmatpush1.msra.mxu0 0.0
    %913 = vmatprep.subr.mxu0 0.0
    %914 = vmatpush1.msra.mxu0 0.0
    %915 = vmatprep.subr.mxu0 0.0
    %916 = vmatpush1.msra.mxu0 0.0
    %917 = vmatprep.subr.mxu0 0.0
    %918 = vmatpush1.msra.mxu0 0.0
    %919 = vmatprep.subr.mxu0 0.0
    %920 = vmatpush1.msra.mxu0 0.0
    %921 = vmatprep.subr.mxu0 0.0
    %922 = vmatpush1.msra.mxu0 0.0
    %923 = vmatprep.subr.mxu0 0.0
    %924 = vmatpush1.msra.mxu0 0.0
    %925 = vmatprep.subr.mxu0 0.0
    %926 = vmatpush1.msra.mxu0 0.0
    %927 = vmatprep.subr.mxu0 0.0
    %928 = vmatpush1.msra.mxu0 0.0
    %929 = vmatprep.subr.mxu0 0.0
    %930 = vmatpush1.msra.mxu0 0.0
    %931 = vmatprep.subr.mxu0 0.0
    %932 = vmatpush1.msra.mxu0 0.0
    %933 = vmatprep.subr.mxu0 0.0
    %934 = vmatpush1.msra.mxu0 0.0
    %935 = vmatprep.mubr.f32.mxu0 0.0
    %936 = vmatmul.mubr.f32.gmra.mrb[0].mxu0 %v869
    %v937 = vpop.f32.mrb[0].mxu0
    %v938 = vadd.f32 0.0, %v937
    %v939 = vpop.f32.mrb[0].mxu0
    %940 = vdwg.mxu0
    %941 = vrot.lane.b32.xlu0 %v151, 112
    %v942 = vpop.permute.xlu0 %941
    %v945 = vsel %vm170, %v852, 0
    %947 = vmatprep.subr.mxu0 0.0
    %948 = vmatpush1.msra.mxu0 %v942
    %949 = vmatprep.subr.mxu0 0.0
    %950 = vmatpush1.msra.mxu0 0.0
    %951 = vmatprep.subr.mxu0 0.0
    %952 = vmatpush1.msra.mxu0 0.0
    %953 = vmatprep.subr.mxu0 0.0
    %954 = vmatpush1.msra.mxu0 0.0
    %955 = vmatprep.subr.mxu0 0.0
    %956 = vmatpush1.msra.mxu0 0.0
    %957 = vmatprep.subr.mxu0 0.0
    %958 = vmatpush1.msra.mxu0 0.0
    %959 = vmatprep.subr.mxu0 0.0
    %960 = vmatpush1.msra.mxu0 0.0
    %961 = vmatprep.subr.mxu0 0.0
    %962 = vmatpush1.msra.mxu0 0.0
    %963 = vmatprep.subr.mxu0 0.0
    %964 = vmatpush1.msra.mxu0 0.0
    %965 = vmatprep.subr.mxu0 0.0
    %966 = vmatpush1.msra.mxu0 0.0
    %967 = vmatprep.subr.mxu0 0.0
    %968 = vmatpush1.msra.mxu0 0.0
    %969 = vmatprep.subr.mxu0 0.0
    %970 = vmatpush1.msra.mxu0 0.0
    %971 = vmatprep.subr.mxu0 0.0
    %972 = vmatpush1.msra.mxu0 0.0
    %973 = vmatprep.subr.mxu0 0.0
    %974 = vmatpush1.msra.mxu0 0.0
    %975 = vmatprep.subr.mxu0 0.0
    %976 = vmatpush1.msra.mxu0 0.0
    %977 = vmatprep.subr.mxu0 0.0
    %978 = vmatpush1.msra.mxu0 0.0
    %979 = vmatprep.subr.mxu0 0.0
    %980 = vmatpush1.msra.mxu0 0.0
    %981 = vmatprep.subr.mxu0 0.0
    %982 = vmatpush1.msra.mxu0 0.0
    %983 = vmatprep.subr.mxu0 0.0
    %984 = vmatpush1.msra.mxu0 0.0
    %985 = vmatprep.subr.mxu0 0.0
    %986 = vmatpush1.msra.mxu0 0.0
    %987 = vmatprep.subr.mxu0 0.0
    %988 = vmatpush1.msra.mxu0 0.0
    %989 = vmatprep.subr.mxu0 0.0
    %990 = vmatpush1.msra.mxu0 0.0
    %991 = vmatprep.subr.mxu0 0.0
    %992 = vmatpush1.msra.mxu0 0.0
    %993 = vmatprep.subr.mxu0 0.0
    %994 = vmatpush1.msra.mxu0 0.0
    %995 = vmatprep.subr.mxu0 0.0
    %996 = vmatpush1.msra.mxu0 0.0
    %997 = vmatprep.subr.mxu0 0.0
    %998 = vmatpush1.msra.mxu0 0.0
    %999 = vmatprep.subr.mxu0 0.0
    %1000 = vmatpush1.msra.mxu0 0.0
    %1001 = vmatprep.subr.mxu0 0.0
    %1002 = vmatpush1.msra.mxu0 0.0
    %1003 = vmatprep.subr.mxu0 0.0
    %1004 = vmatpush1.msra.mxu0 0.0
    %1005 = vmatprep.subr.mxu0 0.0
    %1006 = vmatpush1.msra.mxu0 0.0
    %1007 = vmatprep.subr.mxu0 0.0
    %1008 = vmatpush1.msra.mxu0 0.0
    %1009 = vmatprep.subr.mxu0 0.0
    %1010 = vmatpush1.msra.mxu0 0.0
    %1011 = vmatprep.mubr.f32.mxu0 0.0
    %1012 = vmatmul.mubr.f32.gmra.mrb[0].mxu0 %v945
    %v1013 = vpop.f32.mrb[0].mxu0
    %v1014 = vadd.f32 0.0, %v1013
    %v1015 = vpop.f32.mrb[0].mxu0
    %1016 = vdwg.mxu0
    %1017 = vrot.lane.b32.xlu0 %v157, 112
    %v1018 = vpop.permute.xlu0 %1017
    %v1021 = vsel %vm170, %v854, 0
    %1023 = vmatprep.subr.mxu0 0.0
    %1024 = vmatpush1.msra.mxu0 %v1018
    %1025 = vmatprep.subr.mxu0 0.0
    %1026 = vmatpush1.msra.mxu0 0.0
    %1027 = vmatprep.subr.mxu0 0.0
    %1028 = vmatpush1.msra.mxu0 0.0
    %1029 = vmatprep.subr.mxu0 0.0
    %1030 = vmatpush1.msra.mxu0 0.0
    %1031 = vmatprep.subr.mxu0 0.0
    %1032 = vmatpush1.msra.mxu0 0.0
    %1033 = vmatprep.subr.mxu0 0.0
    %1034 = vmatpush1.msra.mxu0 0.0
    %1035 = vmatprep.subr.mxu0 0.0
    %1036 = vmatpush1.msra.mxu0 0.0
    %1037 = vmatprep.subr.mxu0 0.0
    %1038 = vmatpush1.msra.mxu0 0.0
    %1039 = vmatprep.subr.mxu0 0.0
    %1040 = vmatpush1.msra.mxu0 0.0
    %1041 = vmatprep.subr.mxu0 0.0
    %1042 = vmatpush1.msra.mxu0 0.0
    %1043 = vmatprep.subr.mxu0 0.0
    %1044 = vmatpush1.msra.mxu0 0.0
    %1045 = vmatprep.subr.mxu0 0.0
    %1046 = vmatpush1.msra.mxu0 0.0
    %1047 = vmatprep.subr.mxu0 0.0
    %1048 = vmatpush1.msra.mxu0 0.0
    %1049 = vmatprep.subr.mxu0 0.0
    %1050 = vmatpush1.msra.mxu0 0.0
    %1051 = vmatprep.subr.mxu0 0.0
    %1052 = vmatpush1.msra.mxu0 0.0
    %1053 = vmatprep.subr.mxu0 0.0
    %1054 = vmatpush1.msra.mxu0 0.0
    %1055 = vmatprep.subr.mxu0 0.0
    %1056 = vmatpush1.msra.mxu0 0.0
    %1057 = vmatprep.subr.mxu0 0.0
    %1058 = vmatpush1.msra.mxu0 0.0
    %1059 = vmatprep.subr.mxu0 0.0
    %1060 = vmatpush1.msra.mxu0 0.0
    %1061 = vmatprep.subr.mxu0 0.0
    %1062 = vmatpush1.msra.mxu0 0.0
    %1063 = vmatprep.subr.mxu0 0.0
    %1064 = vmatpush1.msra.mxu0 0.0
    %1065 = vmatprep.subr.mxu0 0.0
    %1066 = vmatpush1.msra.mxu0 0.0
    %1067 = vmatprep.subr.mxu0 0.0
    %1068 = vmatpush1.msra.mxu0 0.0
    %1069 = vmatprep.subr.mxu0 0.0
    %1070 = vmatpush1.msra.mxu0 0.0
    %1071 = vmatprep.subr.mxu0 0.0
    %1072 = vmatpush1.msra.mxu0 0.0
    %1073 = vmatprep.subr.mxu0 0.0
    %1074 = vmatpush1.msra.mxu0 0.0
    %1075 = vmatprep.subr.mxu0 0.0
    %1076 = vmatpush1.msra.mxu0 0.0
    %1077 = vmatprep.subr.mxu0 0.0
    %1078 = vmatpush1.msra.mxu0 0.0
    %1079 = vmatprep.subr.mxu0 0.0
    %1080 = vmatpush1.msra.mxu0 0.0
    %1081 = vmatprep.subr.mxu0 0.0
    %1082 = vmatpush1.msra.mxu0 0.0
    %1083 = vmatprep.subr.mxu0 0.0
    %1084 = vmatpush1.msra.mxu0 0.0
    %1085 = vmatprep.subr.mxu0 0.0
    %1086 = vmatpush1.msra.mxu0 0.0
    %1087 = vmatprep.mubr.f32.mxu0 0.0
    %1088 = vmatmul.mubr.f32.gmra.mrb[0].mxu0 %v1021
    %v1089 = vpop.f32.mrb[0].mxu0
    %v1090 = vadd.f32 0.0, %v1089
    %v1091 = vpop.f32.mrb[0].mxu0
    %1092 = vdwg.mxu0
    %1093 = vrot.lane.b32.xlu0 %v159, 112
    %v1094 = vpop.permute.xlu0 %1093
    %v1097 = vsel %vm170, %v856, 0
    %1099 = vmatprep.subr.mxu0 0.0
    %1100 = vmatpush1.msra.mxu0 %v1094
    %1101 = vmatprep.subr.mxu0 0.0
    %1102 = vmatpush1.msra.mxu0 0.0
    %1103 = vmatprep.subr.mxu0 0.0
    %1104 = vmatpush1.msra.mxu0 0.0
    %1105 = vmatprep.subr.mxu0 0.0
    %1106 = vmatpush1.msra.mxu0 0.0
    %1107 = vmatprep.subr.mxu0 0.0
    %1108 = vmatpush1.msra.mxu0 0.0
    %1109 = vmatprep.subr.mxu0 0.0
    %1110 = vmatpush1.msra.mxu0 0.0
    %1111 = vmatprep.subr.mxu0 0.0
    %1112 = vmatpush1.msra.mxu0 0.0
    %1113 = vmatprep.subr.mxu0 0.0
    %1114 = vmatpush1.msra.mxu0 0.0
    %1115 = vmatprep.subr.mxu0 0.0
    %1116 = vmatpush1.msra.mxu0 0.0
    %1117 = vmatprep.subr.mxu0 0.0
    %1118 = vmatpush1.msra.mxu0 0.0
    %1119 = vmatprep.subr.mxu0 0.0
    %1120 = vmatpush1.msra.mxu0 0.0
    %1121 = vmatprep.subr.mxu0 0.0
    %1122 = vmatpush1.msra.mxu0 0.0
    %1123 = vmatprep.subr.mxu0 0.0
    %1124 = vmatpush1.msra.mxu0 0.0
    %1125 = vmatprep.subr.mxu0 0.0
    %1126 = vmatpush1.msra.mxu0 0.0
    %1127 = vmatprep.subr.mxu0 0.0
    %1128 = vmatpush1.msra.mxu0 0.0
    %1129 = vmatprep.subr.mxu0 0.0
    %1130 = vmatpush1.msra.mxu0 0.0
    %1131 = vmatprep.subr.mxu0 0.0
    %1132 = vmatpush1.msra.mxu0 0.0
    %1133 = vmatprep.subr.mxu0 0.0
    %1134 = vmatpush1.msra.mxu0 0.0
    %1135 = vmatprep.subr.mxu0 0.0
    %1136 = vmatpush1.msra.mxu0 0.0
    %1137 = vmatprep.subr.mxu0 0.0
    %1138 = vmatpush1.msra.mxu0 0.0
    %1139 = vmatprep.subr.mxu0 0.0
    %1140 = vmatpush1.msra.mxu0 0.0
    %1141 = vmatprep.subr.mxu0 0.0
    %1142 = vmatpush1.msra.mxu0 0.0
    %1143 = vmatprep.subr.mxu0 0.0
    %1144 = vmatpush1.msra.mxu0 0.0
    %1145 = vmatprep.subr.mxu0 0.0
    %1146 = vmatpush1.msra.mxu0 0.0
    %1147 = vmatprep.subr.mxu0 0.0
    %1148 = vmatpush1.msra.mxu0 0.0
    %1149 = vmatprep.subr.mxu0 0.0
    %1150 = vmatpush1.msra.mxu0 0.0
    %1151 = vmatprep.subr.mxu0 0.0
    %1152 = vmatpush1.msra.mxu0 0.0
    %1153 = vmatprep.subr.mxu0 0.0
    %1154 = vmatpush1.msra.mxu0 0.0
    %1155 = vmatprep.subr.mxu0 0.0
    %1156 = vmatpush1.msra.mxu0 0.0
    %1157 = vmatprep.subr.mxu0 0.0
    %1158 = vmatpush1.msra.mxu0 0.0
    %1159 = vmatprep.subr.mxu0 0.0
    %1160 = vmatpush1.msra.mxu0 0.0
    %1161 = vmatprep.subr.mxu0 0.0
    %1162 = vmatpush1.msra.mxu0 0.0
    %1163 = vmatprep.mubr.f32.mxu0 0.0
    %1164 = vmatmul.mubr.f32.gmra.mrb[0].mxu0 %v1097
    %v1165 = vpop.f32.mrb[0].mxu0
    %v1166 = vadd.f32 0.0, %v1165
    %v1167 = vpop.f32.mrb[0].mxu0
    %1168 = vdwg.mxu0
    %1169 = vrot.lane.b32.xlu0 %v161, 112
    %v1170 = vpop.permute.xlu0 %1169
    %v1173 = vsel %vm170, %v858, 0
    %1175 = vmatprep.subr.mxu0 0.0
    %1176 = vmatpush1.msra.mxu0 %v1170
    %1177 = vmatprep.subr.mxu0 0.0
    %1178 = vmatpush1.msra.mxu0 0.0
    %1179 = vmatprep.subr.mxu0 0.0
    %1180 = vmatpush1.msra.mxu0 0.0
    %1181 = vmatprep.subr.mxu0 0.0
    %1182 = vmatpush1.msra.mxu0 0.0
    %1183 = vmatprep.subr.mxu0 0.0
    %1184 = vmatpush1.msra.mxu0 0.0
    %1185 = vmatprep.subr.mxu0 0.0
    %1186 = vmatpush1.msra.mxu0 0.0
    %1187 = vmatprep.subr.mxu0 0.0
    %1188 = vmatpush1.msra.mxu0 0.0
    %1189 = vmatprep.subr.mxu0 0.0
    %1190 = vmatpush1.msra.mxu0 0.0
    %1191 = vmatprep.subr.mxu0 0.0
    %1192 = vmatpush1.msra.mxu0 0.0
    %1193 = vmatprep.subr.mxu0 0.0
    %1194 = vmatpush1.msra.mxu0 0.0
    %1195 = vmatprep.subr.mxu0 0.0
    %1196 = vmatpush1.msra.mxu0 0.0
    %1197 = vmatprep.subr.mxu0 0.0
    %1198 = vmatpush1.msra.mxu0 0.0
    %1199 = vmatprep.subr.mxu0 0.0
    %1200 = vmatpush1.msra.mxu0 0.0
    %1201 = vmatprep.subr.mxu0 0.0
    %1202 = vmatpush1.msra.mxu0 0.0
    %1203 = vmatprep.subr.mxu0 0.0
    %1204 = vmatpush1.msra.mxu0 0.0
    %1205 = vmatprep.subr.mxu0 0.0
    %1206 = vmatpush1.msra.mxu0 0.0
    %1207 = vmatprep.subr.mxu0 0.0
    %1208 = vmatpush1.msra.mxu0 0.0
    %1209 = vmatprep.subr.mxu0 0.0
    %1210 = vmatpush1.msra.mxu0 0.0
    %1211 = vmatprep.subr.mxu0 0.0
    %1212 = vmatpush1.msra.mxu0 0.0
    %1213 = vmatprep.subr.mxu0 0.0
    %1214 = vmatpush1.msra.mxu0 0.0
    %1215 = vmatprep.subr.mxu0 0.0
    %1216 = vmatpush1.msra.mxu0 0.0
    %1217 = vmatprep.subr.mxu0 0.0
    %1218 = vmatpush1.msra.mxu0 0.0
    %1219 = vmatprep.subr.mxu0 0.0
    %1220 = vmatpush1.msra.mxu0 0.0
    %1221 = vmatprep.subr.mxu0 0.0
    %1222 = vmatpush1.msra.mxu0 0.0
    %1223 = vmatprep.subr.mxu0 0.0
    %1224 = vmatpush1.msra.mxu0 0.0
    %1225 = vmatprep.subr.mxu0 0.0
    %1226 = vmatpush1.msra.mxu0 0.0
    %1227 = vmatprep.subr.mxu0 0.0
    %1228 = vmatpush1.msra.mxu0 0.0
    %1229 = vmatprep.subr.mxu0 0.0
    %1230 = vmatpush1.msra.mxu0 0.0
    %1231 = vmatprep.subr.mxu0 0.0
    %1232 = vmatpush1.msra.mxu0 0.0
    %1233 = vmatprep.subr.mxu0 0.0
    %1234 = vmatpush1.msra.mxu0 0.0
    %1235 = vmatprep.subr.mxu0 0.0
    %1236 = vmatpush1.msra.mxu0 0.0
    %1237 = vmatprep.subr.mxu0 0.0
    %1238 = vmatpush1.msra.mxu0 0.0
    %1239 = vmatprep.mubr.f32.mxu0 0.0
    %1240 = vmatmul.mubr.f32.gmra.mrb[0].mxu0 %v1173
    %v1241 = vpop.f32.mrb[0].mxu0
    %v1242 = vadd.f32 0.0, %v1241
    %v1243 = vpop.f32.mrb[0].mxu0
    %1244 = vdwg.mxu0
    %1245 = vrot.lane.b32.xlu0 %v163, 112
    %v1246 = vpop.permute.xlu0 %1245
    %v1249 = vsel %vm170, %v860, 0
    %1251 = vmatprep.subr.mxu0 0.0
    %1252 = vmatpush1.msra.mxu0 %v1246
    %1253 = vmatprep.subr.mxu0 0.0
    %1254 = vmatpush1.msra.mxu0 0.0
    %1255 = vmatprep.subr.mxu0 0.0
    %1256 = vmatpush1.msra.mxu0 0.0
    %1257 = vmatprep.subr.mxu0 0.0
    %1258 = vmatpush1.msra.mxu0 0.0
    %1259 = vmatprep.subr.mxu0 0.0
    %1260 = vmatpush1.msra.mxu0 0.0
    %1261 = vmatprep.subr.mxu0 0.0
    %1262 = vmatpush1.msra.mxu0 0.0
    %1263 = vmatprep.subr.mxu0 0.0
    %1264 = vmatpush1.msra.mxu0 0.0
    %1265 = vmatprep.subr.mxu0 0.0
    %1266 = vmatpush1.msra.mxu0 0.0
    %1267 = vmatprep.subr.mxu0 0.0
    %1268 = vmatpush1.msra.mxu0 0.0
    %1269 = vmatprep.subr.mxu0 0.0
    %1270 = vmatpush1.msra.mxu0 0.0
    %1271 = vmatprep.subr.mxu0 0.0
    %1272 = vmatpush1.msra.mxu0 0.0
    %1273 = vmatprep.subr.mxu0 0.0
    %1274 = vmatpush1.msra.mxu0 0.0
    %1275 = vmatprep.subr.mxu0 0.0
    %1276 = vmatpush1.msra.mxu0 0.0
    %1277 = vmatprep.subr.mxu0 0.0
    %1278 = vmatpush1.msra.mxu0 0.0
    %1279 = vmatprep.subr.mxu0 0.0
    %1280 = vmatpush1.msra.mxu0 0.0
    %1281 = vmatprep.subr.mxu0 0.0
    %1282 = vmatpush1.msra.mxu0 0.0
    %1283 = vmatprep.subr.mxu0 0.0
    %1284 = vmatpush1.msra.mxu0 0.0
    %1285 = vmatprep.subr.mxu0 0.0
    %1286 = vmatpush1.msra.mxu0 0.0
    %1287 = vmatprep.subr.mxu0 0.0
    %1288 = vmatpush1.msra.mxu0 0.0
    %1289 = vmatprep.subr.mxu0 0.0
    %1290 = vmatpush1.msra.mxu0 0.0
    %1291 = vmatprep.subr.mxu0 0.0
    %1292 = vmatpush1.msra.mxu0 0.0
    %1293 = vmatprep.subr.mxu0 0.0
    %1294 = vmatpush1.msra.mxu0 0.0
    %1295 = vmatprep.subr.mxu0 0.0
    %1296 = vmatpush1.msra.mxu0 0.0
    %1297 = vmatprep.subr.mxu0 0.0
    %1298 = vmatpush1.msra.mxu0 0.0
    %1299 = vmatprep.subr.mxu0 0.0
    %1300 = vmatpush1.msra.mxu0 0.0
    %1301 = vmatprep.subr.mxu0 0.0
    %1302 = vmatpush1.msra.mxu0 0.0
    %1303 = vmatprep.subr.mxu0 0.0
    %1304 = vmatpush1.msra.mxu0 0.0
    %1305 = vmatprep.subr.mxu0 0.0
    %1306 = vmatpush1.msra.mxu0 0.0
    %1307 = vmatprep.subr.mxu0 0.0
    %1308 = vmatpush1.msra.mxu0 0.0
    %1309 = vmatprep.subr.mxu0 0.0
    %1310 = vmatpush1.msra.mxu0 0.0
    %1311 = vmatprep.subr.mxu0 0.0
    %1312 = vmatpush1.msra.mxu0 0.0
    %1313 = vmatprep.subr.mxu0 0.0
    %1314 = vmatpush1.msra.mxu0 0.0
    %1315 = vmatprep.mubr.f32.mxu0 0.0
    %1316 = vmatmul.mubr.f32.gmra.mrb[0].mxu0 %v1249
    %v1317 = vpop.f32.mrb[0].mxu0
    %v1318 = vadd.f32 0.0, %v1317
    %v1319 = vpop.f32.mrb[0].mxu0
    %1320 = vdwg.mxu0
    %1321 = vrot.lane.b32.xlu0 %v165, 112
    %v1322 = vpop.permute.xlu0 %1321
    %v1325 = vsel %vm170, %v862, 0
    %1327 = vmatprep.subr.mxu0 0.0
    %1328 = vmatpush1.msra.mxu0 %v1322
    %1329 = vmatprep.subr.mxu0 0.0
    %1330 = vmatpush1.msra.mxu0 0.0
    %1331 = vmatprep.subr.mxu0 0.0
    %1332 = vmatpush1.msra.mxu0 0.0
    %1333 = vmatprep.subr.mxu0 0.0
    %1334 = vmatpush1.msra.mxu0 0.0
    %1335 = vmatprep.subr.mxu0 0.0
    %1336 = vmatpush1.msra.mxu0 0.0
    %1337 = vmatprep.subr.mxu0 0.0
    %1338 = vmatpush1.msra.mxu0 0.0
    %1339 = vmatprep.subr.mxu0 0.0
    %1340 = vmatpush1.msra.mxu0 0.0
    %1341 = vmatprep.subr.mxu0 0.0
    %1342 = vmatpush1.msra.mxu0 0.0
    %1343 = vmatprep.subr.mxu0 0.0
    %1344 = vmatpush1.msra.mxu0 0.0
    %1345 = vmatprep.subr.mxu0 0.0
    %1346 = vmatpush1.msra.mxu0 0.0
    %1347 = vmatprep.subr.mxu0 0.0
    %1348 = vmatpush1.msra.mxu0 0.0
    %1349 = vmatprep.subr.mxu0 0.0
    %1350 = vmatpush1.msra.mxu0 0.0
    %1351 = vmatprep.subr.mxu0 0.0
    %1352 = vmatpush1.msra.mxu0 0.0
    %1353 = vmatprep.subr.mxu0 0.0
    %1354 = vmatpush1.msra.mxu0 0.0
    %1355 = vmatprep.subr.mxu0 0.0
    %1356 = vmatpush1.msra.mxu0 0.0
    %1357 = vmatprep.subr.mxu0 0.0
    %1358 = vmatpush1.msra.mxu0 0.0
    %1359 = vmatprep.subr.mxu0 0.0
    %1360 = vmatpush1.msra.mxu0 0.0
    %1361 = vmatprep.subr.mxu0 0.0
    %1362 = vmatpush1.msra.mxu0 0.0
    %1363 = vmatprep.subr.mxu0 0.0
    %1364 = vmatpush1.msra.mxu0 0.0
    %1365 = vmatprep.subr.mxu0 0.0
    %1366 = vmatpush1.msra.mxu0 0.0
    %1367 = vmatprep.subr.mxu0 0.0
    %1368 = vmatpush1.msra.mxu0 0.0
    %1369 = vmatprep.subr.mxu0 0.0
    %1370 = vmatpush1.msra.mxu0 0.0
    %1371 = vmatprep.subr.mxu0 0.0
    %1372 = vmatpush1.msra.mxu0 0.0
    %1373 = vmatprep.subr.mxu0 0.0
    %1374 = vmatpush1.msra.mxu0 0.0
    %1375 = vmatprep.subr.mxu0 0.0
    %1376 = vmatpush1.msra.mxu0 0.0
    %1377 = vmatprep.subr.mxu0 0.0
    %1378 = vmatpush1.msra.mxu0 0.0
    %1379 = vmatprep.subr.mxu0 0.0
    %1380 = vmatpush1.msra.mxu0 0.0
    %1381 = vmatprep.subr.mxu0 0.0
    %1382 = vmatpush1.msra.mxu0 0.0
    %1383 = vmatprep.subr.mxu0 0.0
    %1384 = vmatpush1.msra.mxu0 0.0
    %1385 = vmatprep.subr.mxu0 0.0
    %1386 = vmatpush1.msra.mxu0 0.0
    %1387 = vmatprep.subr.mxu0 0.0
    %1388 = vmatpush1.msra.mxu0 0.0
    %1389 = vmatprep.subr.mxu0 0.0
    %1390 = vmatpush1.msra.mxu0 0.0
    %1391 = vmatprep.mubr.f32.mxu0 0.0
    %1392 = vmatmul.mubr.f32.gmra.mrb[0].mxu0 %v1325
    %v1393 = vpop.f32.mrb[0].mxu0
    %v1394 = vadd.f32 0.0, %v1393
    %v1395 = vpop.f32.mrb[0].mxu0
    %1396 = vdwg.mxu0
    %1397 = vrot.lane.b32.xlu0 %v167, 112
    %v1398 = vpop.permute.xlu0 %1397
    %v1401 = vsel %vm170, %v864, 0
    %1403 = vmatprep.subr.mxu0 0.0
    %1404 = vmatpush1.msra.mxu0 %v1398
    %1405 = vmatprep.subr.mxu0 0.0
    %1406 = vmatpush1.msra.mxu0 0.0
    %1407 = vmatprep.subr.mxu0 0.0
    %1408 = vmatpush1.msra.mxu0 0.0
    %1409 = vmatprep.subr.mxu0 0.0
    %1410 = vmatpush1.msra.mxu0 0.0
    %1411 = vmatprep.subr.mxu0 0.0
    %1412 = vmatpush1.msra.mxu0 0.0
    %1413 = vmatprep.subr.mxu0 0.0
    %1414 = vmatpush1.msra.mxu0 0.0
    %1415 = vmatprep.subr.mxu0 0.0
    %1416 = vmatpush1.msra.mxu0 0.0
    %1417 = vmatprep.subr.mxu0 0.0
    %1418 = vmatpush1.msra.mxu0 0.0
    %1419 = vmatprep.subr.mxu0 0.0
    %1420 = vmatpush1.msra.mxu0 0.0
    %1421 = vmatprep.subr.mxu0 0.0
    %1422 = vmatpush1.msra.mxu0 0.0
    %1423 = vmatprep.subr.mxu0 0.0
    %1424 = vmatpush1.msra.mxu0 0.0
    %1425 = vmatprep.subr.mxu0 0.0
    %1426 = vmatpush1.msra.mxu0 0.0
    %1427 = vmatprep.subr.mxu0 0.0
    %1428 = vmatpush1.msra.mxu0 0.0
    %1429 = vmatprep.subr.mxu0 0.0
    %1430 = vmatpush1.msra.mxu0 0.0
    %1431 = vmatprep.subr.mxu0 0.0
    %1432 = vmatpush1.msra.mxu0 0.0
    %1433 = vmatprep.subr.mxu0 0.0
    %1434 = vmatpush1.msra.mxu0 0.0
    %1435 = vmatprep.subr.mxu0 0.0
    %1436 = vmatpush1.msra.mxu0 0.0
    %1437 = vmatprep.subr.mxu0 0.0
    %1438 = vmatpush1.msra.mxu0 0.0
    %1439 = vmatprep.subr.mxu0 0.0
    %1440 = vmatpush1.msra.mxu0 0.0
    %1441 = vmatprep.subr.mxu0 0.0
    %1442 = vmatpush1.msra.mxu0 0.0
    %1443 = vmatprep.subr.mxu0 0.0
    %1444 = vmatpush1.msra.mxu0 0.0
    %1445 = vmatprep.subr.mxu0 0.0
    %1446 = vmatpush1.msra.mxu0 0.0
    %1447 = vmatprep.subr.mxu0 0.0
    %1448 = vmatpush1.msra.mxu0 0.0
    %1449 = vmatprep.subr.mxu0 0.0
    %1450 = vmatpush1.msra.mxu0 0.0
    %1451 = vmatprep.subr.mxu0 0.0
    %1452 = vmatpush1.msra.mxu0 0.0
    %1453 = vmatprep.subr.mxu0 0.0
    %1454 = vmatpush1.msra.mxu0 0.0
    %1455 = vmatprep.subr.mxu0 0.0
    %1456 = vmatpush1.msra.mxu0 0.0
    %1457 = vmatprep.subr.mxu0 0.0
    %1458 = vmatpush1.msra.mxu0 0.0
    %1459 = vmatprep.subr.mxu0 0.0
    %1460 = vmatpush1.msra.mxu0 0.0
    %1461 = vmatprep.subr.mxu0 0.0
    %1462 = vmatpush1.msra.mxu0 0.0
    %1463 = vmatprep.subr.mxu0 0.0
    %1464 = vmatpush1.msra.mxu0 0.0
    %1465 = vmatprep.subr.mxu0 0.0
    %1466 = vmatpush1.msra.mxu0 0.0
    %1467 = vmatprep.mubr.f32.mxu0 0.0
    %1468 = vmatmul.mubr.f32.gmra.mrb[0].mxu0 %v1401
    %v1469 = vpop.f32.mrb[0].mxu0
    %v1470 = vadd.f32 0.0, %v1469
    %v1471 = vpop.f32.mrb[0].mxu0
    %1472 = vdwg.mxu0
    %1475 = vrot.lane.b32.xlu0 %v1090, 8
    %v1476 = vpop.permute.xlu0 %1475
    %1477 = vrot.lane.b32.xlu0 %v1166, 8
    %v1478 = vpop.permute.xlu0 %1477
    %1483 = vrot.lane.b32.xlu0 %v1242, 16
    %v1484 = vpop.permute.xlu0 %1483
    %1485 = vrot.lane.b32.xlu0 %v1318, 16
    %v1486 = vpop.permute.xlu0 %1485
    %1491 = vrot.lane.b32.xlu0 %v1394, 24
    %v1492 = vpop.permute.xlu0 %1491
    %1493 = vrot.lane.b32.xlu0 %v1470, 24
    %v1494 = vpop.permute.xlu0 %1493
    %v1497 = vsel %vm170, %v938, %v1476
    %v1498 = vsel %vm170, %v1014, %v1478
    %vm1499 = vcmask 130048
    %v1500 = vsel %vm1499, %v1497, %v1484
    %v1501 = vsel %vm1499, %v1498, %v1486
    %vm1502 = vcmask 195584
    %v1503 = vsel %vm1502, %v1500, %v1492
    %v1504 = vsel %vm1502, %v1501, %v1494
    %v1505 = vlaneseq
    %v1506 = vshrl.u32 %v1505, 7
    %v1507 = vsub.s32 0, %v1506
    %v1508 = vrot.slane %v61, %v1507
    %v1510 = vsel %vm72, %v1503, 0
    %v1513 = vsel %vm72, %v1504, 0
    %1515 = vmatprep.subr.mxu0 0.0
    %1516 = vmatpush1.msra.mxu0 %v44
    %1517 = vmatprep.subr.mxu0 0.0
    %1518 = vmatpush1.msra.mxu0 %v45
    %1519 = vmatprep.subr.mxu0 0.0
    %1520 = vmatpush1.msra.mxu0 %v46
    %1521 = vmatprep.subr.mxu0 0.0
    %1522 = vmatpush1.msra.mxu0 %v47
    %1523 = vmatprep.subr.mxu0 0.0
    %1524 = vmatpush1.msra.mxu0 0.0
    %1525 = vmatprep.subr.mxu0 0.0
    %1526 = vmatpush1.msra.mxu0 0.0
    %1527 = vmatprep.subr.mxu0 0.0
    %1528 = vmatpush1.msra.mxu0 0.0
    %1529 = vmatprep.subr.mxu0 0.0
    %1530 = vmatpush1.msra.mxu0 0.0
    %1531 = vmatprep.subr.mxu0 0.0
    %1532 = vmatpush1.msra.mxu0 0.0
    %1533 = vmatprep.subr.mxu0 0.0
    %1534 = vmatpush1.msra.mxu0 0.0
    %1535 = vmatprep.subr.mxu0 0.0
    %1536 = vmatpush1.msra.mxu0 0.0
    %1537 = vmatprep.subr.mxu0 0.0
    %1538 = vmatpush1.msra.mxu0 0.0
    %1539 = vmatprep.subr.mxu0 0.0
    %1540 = vmatpush1.msra.mxu0 0.0
    %1541 = vmatprep.subr.mxu0 0.0
    %1542 = vmatpush1.msra.mxu0 0.0
    %1543 = vmatprep.subr.mxu0 0.0
    %1544 = vmatpush1.msra.mxu0 0.0
    %1545 = vmatprep.subr.mxu0 0.0
    %1546 = vmatpush1.msra.mxu0 0.0
    %1547 = vmatprep.subr.mxu0 0.0
    %1548 = vmatpush1.msra.mxu0 0.0
    %1549 = vmatprep.subr.mxu0 0.0
    %1550 = vmatpush1.msra.mxu0 0.0
    %1551 = vmatprep.subr.mxu0 0.0
    %1552 = vmatpush1.msra.mxu0 0.0
    %1553 = vmatprep.subr.mxu0 0.0
    %1554 = vmatpush1.msra.mxu0 0.0
    %1555 = vmatprep.subr.mxu0 0.0
    %1556 = vmatpush1.msra.mxu0 0.0
    %1557 = vmatprep.subr.mxu0 0.0
    %1558 = vmatpush1.msra.mxu0 0.0
    %1559 = vmatprep.subr.mxu0 0.0
    %1560 = vmatpush1.msra.mxu0 0.0
    %1561 = vmatprep.subr.mxu0 0.0
    %1562 = vmatpush1.msra.mxu0 0.0
    %1563 = vmatprep.subr.mxu0 0.0
    %1564 = vmatpush1.msra.mxu0 0.0
    %1565 = vmatprep.subr.mxu0 0.0
    %1566 = vmatpush1.msra.mxu0 0.0
    %1567 = vmatprep.subr.mxu0 0.0
    %1568 = vmatpush1.msra.mxu0 0.0
    %1569 = vmatprep.subr.mxu0 0.0
    %1570 = vmatpush1.msra.mxu0 0.0
    %1571 = vmatprep.subr.mxu0 0.0
    %1572 = vmatpush1.msra.mxu0 0.0
    %1573 = vmatprep.subr.mxu0 0.0
    %1574 = vmatpush1.msra.mxu0 0.0
    %1575 = vmatprep.subr.mxu0 0.0
    %1576 = vmatpush1.msra.mxu0 0.0
    %1577 = vmatprep.subr.mxu0 0.0
    %1578 = vmatpush1.msra.mxu0 0.0
    %1579 = vmatprep.mubr.f32.mxu0 0.0
    %1580 = vmatmul.mubr.f32.gmra.mrb[0].mxu0 %v1510
    %v1581 = vpop.f32.mrb[0].mxu0
    %v1582 = vadd.f32 %v1508, %v1581
    %v1583 = vpop.f32.mrb[0].mxu0
    %1584 = vmatprep.mubr.f32.mxu0 0.0
    %1585 = vmatmul.mubr.f32.gmra.mrb[0].mxu0 %v1513
    %v1586 = vpop.f32.mrb[0].mxu0
    %v1587 = vadd.f32 %v1508, %v1586
    %v1588 = vpop.f32.mrb[0].mxu0
    %1589 = vdwg.mxu0
    %v1590 = vadd.f32 %v38, %v1582
    %v1591 = vadd.f32 %v39, %v1587
    %v1592 = vsel %vm72, %v1590, 0.0
    %1593 = vadd.xlane.f32.xlu0 %v1592
    %v1594 = vpop.xlane.xlu0 %1593
    %v1595 = vsel %vm72, %v1591, 0.0
    %1596 = vadd.xlane.f32.xlu0 %v1595
    %v1597 = vpop.xlane.xlu0 %1596
    %v1598 = vrcp.pop 32.0
    %v1599 = vmul.f32 %v1594, %v1598
    %v1600 = vmul.f32 %v1597, %v1598
    %v1601 = vsub.f32 %v1590, %v1599
    %v1602 = vsub.f32 %v1591, %v1600
    %v1603 = vmul.f32 %v1601, %v1601
    %v1604 = vmul.f32 %v1602, %v1602
    %v1605 = vsel %vm72, %v1603, 0.0
    %1606 = vadd.xlane.f32.xlu0 %v1605
    %v1607 = vpop.xlane.xlu0 %1606
    %v1608 = vsel %vm72, %v1604, 0.0
    %1609 = vadd.xlane.f32.xlu0 %v1608
    %v1610 = vpop.xlane.xlu0 %1609
    %v1611 = vmul.f32 %v1607, %v1598
    %v1612 = vmul.f32 %v1610, %v1598
    %v1613 = vadd.f32 %v1611, 1e-05
    %v1614 = vadd.f32 %v1612, 1e-05
    %v1615 = vrsqrt.pop %v1613
    %v1616 = vrsqrt.pop %v1614
    %v1617 = vmul.f32 %v1601, %v1615
    %v1618 = vmul.f32 %v1602, %v1616
    %v1619 = vlaneseq
    %v1620 = vshrl.u32 %v1619, 7
    %v1621 = vsub.s32 0, %v1620
    %v1622 = vrot.slane %v64, %v1621
    %v1623 = vmul.f32 %v1617, %v1622
    %v1624 = vmul.f32 %v1618, %v1622
    %v1625 = vlaneseq
    %v1626 = vshrl.u32 %v1625, 7
    %v1627 = vsub.s32 0, %v1626
    %v1628 = vrot.slane %v65, %v1627
    %v1629 = vadd.f32 %v1623, %v1628
    %v1630 = vadd.f32 %v1624, %v1628
    %v1631 = vlaneseq
    %v1632 = vshrl.u32 %v1631, 7
    %v1633 = vsub.s32 0, %v1632
    %v1634 = vrot.slane %v62, %v1633
    %v1636 = vsel %vm72, %v1629, 0
    %v1639 = vsel %vm72, %v1630, 0
    %1641 = vmatprep.subr.mxu0 0.0
    %1642 = vmatpush1.msra.mxu0 %v48
    %1643 = vmatprep.subr.mxu0 0.0
    %1644 = vmatpush1.msra.mxu0 %v49
    %1645 = vmatprep.subr.mxu0 0.0
    %1646 = vmatpush1.msra.mxu0 %v50
    %1647 = vmatprep.subr.mxu0 0.0
    %1648 = vmatpush1.msra.mxu0 %v51
    %1649 = vmatprep.subr.mxu0 0.0
    %1650 = vmatpush1.msra.mxu0 0.0
    %1651 = vmatprep.subr.mxu0 0.0
    %1652 = vmatpush1.msra.mxu0 0.0
    %1653 = vmatprep.subr.mxu0 0.0
    %1654 = vmatpush1.msra.mxu0 0.0
    %1655 = vmatprep.subr.mxu0 0.0
    %1656 = vmatpush1.msra.mxu0 0.0
    %1657 = vmatprep.subr.mxu0 0.0
    %1658 = vmatpush1.msra.mxu0 0.0
    %1659 = vmatprep.subr.mxu0 0.0
    %1660 = vmatpush1.msra.mxu0 0.0
    %1661 = vmatprep.subr.mxu0 0.0
    %1662 = vmatpush1.msra.mxu0 0.0
    %1663 = vmatprep.subr.mxu0 0.0
    %1664 = vmatpush1.msra.mxu0 0.0
    %1665 = vmatprep.subr.mxu0 0.0
    %1666 = vmatpush1.msra.mxu0 0.0
    %1667 = vmatprep.subr.mxu0 0.0
    %1668 = vmatpush1.msra.mxu0 0.0
    %1669 = vmatprep.subr.mxu0 0.0
    %1670 = vmatpush1.msra.mxu0 0.0
    %1671 = vmatprep.subr.mxu0 0.0
    %1672 = vmatpush1.msra.mxu0 0.0
    %1673 = vmatprep.subr.mxu0 0.0
    %1674 = vmatpush1.msra.mxu0 0.0
    %1675 = vmatprep.subr.mxu0 0.0
    %1676 = vmatpush1.msra.mxu0 0.0
    %1677 = vmatprep.subr.mxu0 0.0
    %1678 = vmatpush1.msra.mxu0 0.0
    %1679 = vmatprep.subr.mxu0 0.0
    %1680 = vmatpush1.msra.mxu0 0.0
    %1681 = vmatprep.subr.mxu0 0.0
    %1682 = vmatpush1.msra.mxu0 0.0
    %1683 = vmatprep.subr.mxu0 0.0
    %1684 = vmatpush1.msra.mxu0 0.0
    %1685 = vmatprep.subr.mxu0 0.0
    %1686 = vmatpush1.msra.mxu0 0.0
    %1687 = vmatprep.subr.mxu0 0.0
    %1688 = vmatpush1.msra.mxu0 0.0
    %1689 = vmatprep.subr.mxu0 0.0
    %1690 = vmatpush1.msra.mxu0 0.0
    %1691 = vmatprep.subr.mxu0 0.0
    %1692 = vmatpush1.msra.mxu0 0.0
    %1693 = vmatprep.subr.mxu0 0.0
    %1694 = vmatpush1.msra.mxu0 0.0
    %1695 = vmatprep.subr.mxu0 0.0
    %1696 = vmatpush1.msra.mxu0 0.0
    %1697 = vmatprep.subr.mxu0 0.0
    %1698 = vmatpush1.msra.mxu0 0.0
    %1699 = vmatprep.subr.mxu0 0.0
    %1700 = vmatpush1.msra.mxu0 0.0
    %1701 = vmatprep.subr.mxu0 0.0
    %1702 = vmatpush1.msra.mxu0 0.0
    %1703 = vmatprep.subr.mxu0 0.0
    %1704 = vmatpush1.msra.mxu0 0.0
    %1705 = vmatprep.mubr.f32.mxu0 0.0
    %1706 = vmatmul.mubr.f32.gmra.mrb[0].mxu0 %v1636
    %v1707 = vpop.f32.mrb[0].mxu0
    %v1708 = vadd.f32 %v1634, %v1707
    %v1709 = vpop.f32.mrb[0].mxu0
    %1710 = vmatprep.mubr.f32.mxu0 0.0
    %1711 = vmatmul.mubr.f32.gmra.mrb[0].mxu0 %v1639
    %v1712 = vpop.f32.mrb[0].mxu0
    %v1713 = vadd.f32 %v1634, %v1712
    %v1714 = vpop.f32.mrb[0].mxu0
    %1715 = vdwg.mxu0
    %v1716 = vmax.f32 %v1708, 0.0
    %v1717 = vmax.f32 %v1713, 0.0
    %v1718 = vlaneseq
    %v1719 = vshrl.u32 %v1718, 7
    %v1720 = vsub.s32 0, %v1719
    %v1721 = vrot.slane %v63, %v1720
    %vm1722 = vcmask 523264
    %v1724 = vsel %vm1722, %v1716, 0
    %v1727 = vsel %vm1722, %v1717, 0
    %1729 = vmatprep.subr.mxu0 0.0
    %1730 = vmatpush1.msra.mxu0 %v52
    %1731 = vmatprep.subr.mxu0 0.0
    %1732 = vmatpush1.msra.mxu0 %v53
    %1733 = vmatprep.subr.mxu0 0.0
    %1734 = vmatpush1.msra.mxu0 %v54
    %1735 = vmatprep.subr.mxu0 0.0
    %1736 = vmatpush1.msra.mxu0 %v55
    %1737 = vmatprep.subr.mxu0 0.0
    %1738 = vmatpush1.msra.mxu0 %v56
    %1739 = vmatprep.subr.mxu0 0.0
    %1740 = vmatpush1.msra.mxu0 %v57
    %1741 = vmatprep.subr.mxu0 0.0
    %1742 = vmatpush1.msra.mxu0 %v58
    %1743 = vmatprep.subr.mxu0 0.0
    %1744 = vmatpush1.msra.mxu0 %v59
    %1745 = vmatprep.subr.mxu0 0.0
    %1746 = vmatpush1.msra.mxu0 0.0
    %1747 = vmatprep.subr.mxu0 0.0
    %1748 = vmatpush1.msra.mxu0 0.0
    %1749 = vmatprep.subr.mxu0 0.0
    %1750 = vmatpush1.msra.mxu0 0.0
    %1751 = vmatprep.subr.mxu0 0.0
    %1752 = vmatpush1.msra.mxu0 0.0
    %1753 = vmatprep.subr.mxu0 0.0
    %1754 = vmatpush1.msra.mxu0 0.0
    %1755 = vmatprep.subr.mxu0 0.0
    %1756 = vmatpush1.msra.mxu0 0.0
    %1757 = vmatprep.subr.mxu0 0.0
    %1758 = vmatpush1.msra.mxu0 0.0
    %1759 = vmatprep.subr.mxu0 0.0
    %1760 = vmatpush1.msra.mxu0 0.0
    %1761 = vmatprep.subr.mxu0 0.0
    %1762 = vmatpush1.msra.mxu0 0.0
    %1763 = vmatprep.subr.mxu0 0.0
    %1764 = vmatpush1.msra.mxu0 0.0
    %1765 = vmatprep.subr.mxu0 0.0
    %1766 = vmatpush1.msra.mxu0 0.0
    %1767 = vmatprep.subr.mxu0 0.0
    %1768 = vmatpush1.msra.mxu0 0.0
    %1769 = vmatprep.subr.mxu0 0.0
    %1770 = vmatpush1.msra.mxu0 0.0
    %1771 = vmatprep.subr.mxu0 0.0
    %1772 = vmatpush1.msra.mxu0 0.0
    %1773 = vmatprep.subr.mxu0 0.0
    %1774 = vmatpush1.msra.mxu0 0.0
    %1775 = vmatprep.subr.mxu0 0.0
    %1776 = vmatpush1.msra.mxu0 0.0
    %1777 = vmatprep.subr.mxu0 0.0
    %1778 = vmatpush1.msra.mxu0 0.0
    %1779 = vmatprep.subr.mxu0 0.0
    %1780 = vmatpush1.msra.mxu0 0.0
    %1781 = vmatprep.subr.mxu0 0.0
    %1782 = vmatpush1.msra.mxu0 0.0
    %1783 = vmatprep.subr.mxu0 0.0
    %1784 = vmatpush1.msra.mxu0 0.0
    %1785 = vmatprep.subr.mxu0 0.0
    %1786 = vmatpush1.msra.mxu0 0.0
    %1787 = vmatprep.subr.mxu0 0.0
    %1788 = vmatpush1.msra.mxu0 0.0
    %1789 = vmatprep.subr.mxu0 0.0
    %1790 = vmatpush1.msra.mxu0 0.0
    %1791 = vmatprep.subr.mxu0 0.0
    %1792 = vmatpush1.msra.mxu0 0.0
    %1793 = vmatprep.mubr.f32.mxu0 0.0
    %1794 = vmatmul.mubr.f32.gmra.mrb[0].mxu0 %v1724
    %v1795 = vpop.f32.mrb[0].mxu0
    %v1796 = vadd.f32 %v1721, %v1795
    %v1797 = vpop.f32.mrb[0].mxu0
    %1798 = vmatprep.mubr.f32.mxu0 0.0
    %1799 = vmatmul.mubr.f32.gmra.mrb[0].mxu0 %v1727
    %v1800 = vpop.f32.mrb[0].mxu0
    %v1801 = vadd.f32 %v1721, %v1800
    %v1802 = vpop.f32.mrb[0].mxu0
    %1803 = vdwg.mxu0
    %v1804 = vadd.f32 %v1629, %v1796
    %v1805 = vadd.f32 %v1630, %v1801
    %v1806 = vsel %vm72, %v1804, 0.0
    %1807 = vadd.xlane.f32.xlu0 %v1806
    %v1808 = vpop.xlane.xlu0 %1807
    %v1809 = vsel %vm72, %v1805, 0.0
    %1810 = vadd.xlane.f32.xlu0 %v1809
    %v1811 = vpop.xlane.xlu0 %1810
    %v1812 = vmul.f32 %v1808, %v1598
    %v1813 = vmul.f32 %v1811, %v1598
    %v1814 = vsub.f32 %v1804, %v1812
    %v1815 = vsub.f32 %v1805, %v1813
    %v1816 = vmul.f32 %v1814, %v1814
    %v1817 = vmul.f32 %v1815, %v1815
    %v1818 = vsel %vm72, %v1816, 0.0
    %1819 = vadd.xlane.f32.xlu0 %v1818
    %v1820 = vpop.xlane.xlu0 %1819
    %v1821 = vsel %vm72, %v1817, 0.0
    %1822 = vadd.xlane.f32.xlu0 %v1821
    %v1823 = vpop.xlane.xlu0 %1822
    %v1824 = vmul.f32 %v1820, %v1598
    %v1825 = vmul.f32 %v1823, %v1598
    %v1826 = vadd.f32 %v1824, 1e-05
    %v1827 = vadd.f32 %v1825, 1e-05
    %v1828 = vrsqrt.pop %v1826
    %v1829 = vrsqrt.pop %v1827
    %v1830 = vmul.f32 %v1814, %v1828
    %v1831 = vmul.f32 %v1815, %v1829
    %v1832 = vlaneseq
    %v1833 = vshrl.u32 %v1832, 7
    %v1834 = vsub.s32 0, %v1833
    %v1835 = vrot.slane %v66, %v1834
    %v1836 = vmul.f32 %v1830, %v1835
    %v1837 = vmul.f32 %v1831, %v1835
    %v1838 = vlaneseq
    %v1839 = vshrl.u32 %v1838, 7
    %v1840 = vsub.s32 0, %v1839
    %v1841 = vrot.slane %v67, %v1840
    %v1842 = vadd.f32 %v1836, %v1841
    %v1843 = vadd.f32 %v1837, %v1841
    %v1844 = vld [vmem:[#allocation2 + $0xa8] sm:$0xff]
    %v1845 = vld [vmem:[#allocation2 + $0xb0] sm:$0xff]
    %v1846 = vld [vmem:[#allocation2 + $0xb8] sm:$0xff]
    %v1847 = vld [vmem:[#allocation2 + $0xc0] sm:$0xff]
    %v1848 = vld [vmem:[#allocation2 + $0xc8] sm:$0xff]
    %v1849 = vld [vmem:[#allocation2 + $0xd0] sm:$0xff]
    %v1850 = vld [vmem:[#allocation2 + $0xd8] sm:$0xff]
    %v1851 = vld [vmem:[#allocation2 + $0xe0] sm:$0xff]
    %v1852 = vld [vmem:[#allocation2 + $0xe8] sm:$0xff]
    %v1853 = vld [vmem:[#allocation2 + $0xf0] sm:$0xff]
    %v1854 = vld [vmem:[#allocation2 + $0xf8] sm:$0xff]
    %v1855 = vld [vmem:[#allocation2 + $0x100] sm:$0xff]
    %v1856 = vld [vmem:[#allocation2 + $0x108] sm:$0xff]
    %v1857 = vld [vmem:[#allocation2 + $0x110] sm:$0xff]
    %v1858 = vld [vmem:[#allocation2 + $0x118] sm:$0xff]
    %v1859 = vld [vmem:[#allocation2 + $0x120] sm:$0xff]
    %v1860 = vld [vmem:[#allocation2 + $0x128] sm:$0xff]
    %v1861 = vld [vmem:[#allocation2 + $0x130] sm:$0xff]
    %v1862 = vld [vmem:[#allocation2 + $0x138] sm:$0xff]
    %v1863 = vld [vmem:[#allocation2 + $0x140] sm:$0xff]
    %v1864 = vld [vmem:[#allocation2 + $0x148] sm:$0x1]
    %v1865 = vld [vmem:[#allocation2 + $0x149] sm:$0x1]
    %v1866 = vld [vmem:[#allocation2 + $0x14a] sm:$0x1]
    %v1867 = vld [vmem:[#allocation2 + $0x14b] sm:$0x1]
    %v1868 = vld [vmem:[#allocation2 + $0x14c] sm:$0x1]
    %v1869 = vld [vmem:[#allocation2 + $0x14d] sm:$0x1]
    %v1870 = vld [vmem:[#allocation2 + $0x14e] sm:$0x1]
    %v1871 = vld [vmem:[#allocation2 + $0x14f] sm:$0x1]
    %v1872 = vlaneseq
    %v1873 = vshrl.u32 %v1872, 7
    %v1874 = vsub.s32 0, %v1873
    %v1875 = vrot.slane %v1864, %v1874
    %v1877 = vsel %vm72, %v1842, 0
    %v1880 = vsel %vm72, %v1843, 0
    %1882 = vmatprep.subr.mxu0 0.0
    %1883 = vmatpush1.msra.mxu0 %v1844
    %1884 = vmatprep.subr.mxu0 0.0
    %1885 = vmatpush1.msra.mxu0 %v1845
    %1886 = vmatprep.subr.mxu0 0.0
    %1887 = vmatpush1.msra.mxu0 %v1846
    %1888 = vmatprep.subr.mxu0 0.0
    %1889 = vmatpush1.msra.mxu0 %v1847
    %1890 = vmatprep.subr.mxu0 0.0
    %1891 = vmatpush1.msra.mxu0 0.0
    %1892 = vmatprep.subr.mxu0 0.0
    %1893 = vmatpush1.msra.mxu0 0.0
    %1894 = vmatprep.subr.mxu0 0.0
    %1895 = vmatpush1.msra.mxu0 0.0
    %1896 = vmatprep.subr.mxu0 0.0
    %1897 = vmatpush1.msra.mxu0 0.0
    %1898 = vmatprep.subr.mxu0 0.0
    %1899 = vmatpush1.msra.mxu0 0.0
    %1900 = vmatprep.subr.mxu0 0.0
    %1901 = vmatpush1.msra.mxu0 0.0
    %1902 = vmatprep.subr.mxu0 0.0
    %1903 = vmatpush1.msra.mxu0 0.0
    %1904 = vmatprep.subr.mxu0 0.0
    %1905 = vmatpush1.msra.mxu0 0.0
    %1906 = vmatprep.subr.mxu0 0.0
    %1907 = vmatpush1.msra.mxu0 0.0
    %1908 = vmatprep.subr.mxu0 0.0
    %1909 = vmatpush1.msra.mxu0 0.0
    %1910 = vmatprep.subr.mxu0 0.0
    %1911 = vmatpush1.msra.mxu0 0.0
    %1912 = vmatprep.subr.mxu0 0.0
    %1913 = vmatpush1.msra.mxu0 0.0
    %1914 = vmatprep.subr.mxu0 0.0
    %1915 = vmatpush1.msra.mxu0 0.0
    %1916 = vmatprep.subr.mxu0 0.0
    %1917 = vmatpush1.msra.mxu0 0.0
    %1918 = vmatprep.subr.mxu0 0.0
    %1919 = vmatpush1.msra.mxu0 0.0
    %1920 = vmatprep.subr.mxu0 0.0
    %1921 = vmatpush1.msra.mxu0 0.0
    %1922 = vmatprep.subr.mxu0 0.0
    %1923 = vmatpush1.msra.mxu0 0.0
    %1924 = vmatprep.subr.mxu0 0.0
    %1925 = vmatpush1.msra.mxu0 0.0
    %1926 = vmatprep.subr.mxu0 0.0
    %1927 = vmatpush1.msra.mxu0 0.0
    %1928 = vmatprep.subr.mxu0 0.0
    %1929 = vmatpush1.msra.mxu0 0.0
    %1930 = vmatprep.subr.mxu0 0.0
    %1931 = vmatpush1.msra.mxu0 0.0
    %1932 = vmatprep.subr.mxu0 0.0
    %1933 = vmatpush1.msra.mxu0 0.0
    %1934 = vmatprep.subr.mxu0 0.0
    %1935 = vmatpush1.msra.mxu0 0.0
    %1936 = vmatprep.subr.mxu0 0.0
    %1937 = vmatpush1.msra.mxu0 0.0
    %1938 = vmatprep.subr.mxu0 0.0
    %1939 = vmatpush1.msra.mxu0 0.0
    %1940 = vmatprep.subr.mxu0 0.0
    %1941 = vmatpush1.msra.mxu0 0.0
    %1942 = vmatprep.subr.mxu0 0.0
    %1943 = vmatpush1.msra.mxu0 0.0
    %1944 = vmatprep.subr.mxu0 0.0
    %1945 = vmatpush1.msra.mxu0 0.0
    %1946 = vmatprep.mubr.f32.mxu0 0.0
    %1947 = vmatmul.mubr.f32.gmra.mrb[0].mxu0 %v1877
    %v1948 = vpop.f32.mrb[0].mxu0
    %v1949 = vadd.f32 %v1875, %v1948
    %v1950 = vpop.f32.mrb[0].mxu0
    %1951 = vmatprep.mubr.f32.mxu0 0.0
    %1952 = vmatmul.mubr.f32.gmra.mrb[0].mxu0 %v1880
    %v1953 = vpop.f32.mrb[0].mxu0
    %v1954 = vadd.f32 %v1875, %v1953
    %v1955 = vpop.f32.mrb[0].mxu0
    %1956 = vdwg.mxu0
    %1959 = vrot.lane.b32.xlu0 %v1949, 104
    %v1960 = vpop.permute.xlu0 %1959
    %1961 = vrot.lane.b32.xlu0 %v1954, 104
    %v1962 = vpop.permute.xlu0 %1961
    %1963 = vrot.lane.b32.xlu0 %v1949, 80
    %v1964 = vpop.permute.xlu0 %1963
    %1965 = vrot.lane.b32.xlu0 %v1954, 80
    %v1966 = vpop.permute.xlu0 %1965
    %1967 = vrot.lane.b32.xlu0 %v1949, 56
    %v1968 = vpop.permute.xlu0 %1967
    %1969 = vrot.lane.b32.xlu0 %v1954, 56
    %v1970 = vpop.permute.xlu0 %1969
    %1971 = vrot.lane.b32.xlu0 %v1949, 120
    %v1972 = vpop.permute.xlu0 %1971
    %v1973 = vsel %vm170, %v1949, 0
    %v1975 = vsel %vm170, %v1972, 0
    %1977 = vmatprep.subr.mxu0 0.0
    %1978 = vmatpush1.xpose.msra.mxu0 %v1975
    %1979 = vmatprep.subr.mxu0 0.0
    %1980 = vmatpush1.xpose.msra.mxu0 0.0
    %1981 = vmatprep.subr.mxu0 0.0
    %1982 = vmatpush1.xpose.msra.mxu0 0.0
    %1983 = vmatprep.subr.mxu0 0.0
    %1984 = vmatpush1.xpose.msra.mxu0 0.0
    %1985 = vmatprep.subr.mxu0 0.0
    %1986 = vmatpush1.xpose.msra.mxu0 0.0
    %1987 = vmatprep.subr.mxu0 0.0
    %1988 = vmatpush1.xpose.msra.mxu0 0.0
    %1989 = vmatprep.subr.mxu0 0.0
    %1990 = vmatpush1.xpose.msra.mxu0 0.0
    %1991 = vmatprep.subr.mxu0 0.0
    %1992 = vmatpush1.xpose.msra.mxu0 0.0
    %1993 = vmatprep.subr.mxu0 0.0
    %1994 = vmatpush1.xpose.msra.mxu0 0.0
    %1995 = vmatprep.subr.mxu0 0.0
    %1996 = vmatpush1.xpose.msra.mxu0 0.0
    %1997 = vmatprep.subr.mxu0 0.0
    %1998 = vmatpush1.xpose.msra.mxu0 0.0
    %1999 = vmatprep.subr.mxu0 0.0
    %2000 = vmatpush1.xpose.msra.mxu0 0.0
    %2001 = vmatprep.subr.mxu0 0.0
    %2002 = vmatpush1.xpose.msra.mxu0 0.0
    %2003 = vmatprep.subr.mxu0 0.0
    %2004 = vmatpush1.xpose.msra.mxu0 0.0
    %2005 = vmatprep.subr.mxu0 0.0
    %2006 = vmatpush1.xpose.msra.mxu0 0.0
    %2007 = vmatprep.subr.mxu0 0.0
    %2008 = vmatpush1.xpose.msra.mxu0 0.0
    %2009 = vmatprep.subr.mxu0 0.0
    %2010 = vmatpush1.xpose.msra.mxu0 0.0
    %2011 = vmatprep.subr.mxu0 0.0
    %2012 = vmatpush1.xpose.msra.mxu0 0.0
    %2013 = vmatprep.subr.mxu0 0.0
    %2014 = vmatpush1.xpose.msra.mxu0 0.0
    %2015 = vmatprep.subr.mxu0 0.0
    %2016 = vmatpush1.xpose.msra.mxu0 0.0
    %2017 = vmatprep.subr.mxu0 0.0
    %2018 = vmatpush1.xpose.msra.mxu0 0.0
    %2019 = vmatprep.subr.mxu0 0.0
    %2020 = vmatpush1.xpose.msra.mxu0 0.0
    %2021 = vmatprep.subr.mxu0 0.0
    %2022 = vmatpush1.xpose.msra.mxu0 0.0
    %2023 = vmatprep.subr.mxu0 0.0
    %2024 = vmatpush1.xpose.msra.mxu0 0.0
    %2025 = vmatprep.subr.mxu0 0.0
    %2026 = vmatpush1.xpose.msra.mxu0 0.0
    %2027 = vmatprep.subr.mxu0 0.0
    %2028 = vmatpush1.xpose.msra.mxu0 0.0
    %2029 = vmatprep.subr.mxu0 0.0
    %2030 = vmatpush1.xpose.msra.mxu0 0.0
    %2031 = vmatprep.subr.mxu0 0.0
    %2032 = vmatpush1.xpose.msra.mxu0 0.0
    %2033 = vmatprep.subr.mxu0 0.0
    %2034 = vmatpush1.xpose.msra.mxu0 0.0
    %2035 = vmatprep.subr.mxu0 0.0
    %2036 = vmatpush1.xpose.msra.mxu0 0.0
    %2037 = vmatprep.subr.mxu0 0.0
    %2038 = vmatpush1.xpose.msra.mxu0 0.0
    %2039 = vmatprep.subr.mxu0 0.0
    %2040 = vmatpush1.xpose.msra.mxu0 0.0
    %2041 = vmatprep.mubr.f32.mxu0 0.0
    %2042 = vmatmul.mubr.f32.gmra.mrb[0].mxu0 %v1973
    %v2043 = vpop.f32.mrb[0].mxu0
    %v2044 = vadd.f32 0.0, %v2043
    %v2045 = vpop.f32.mrb[0].mxu0
    %2046 = vdwg.mxu0
    %2047 = vrot.lane.b32.xlu0 %v1954, 120
    %v2048 = vpop.permute.xlu0 %2047
    %v2049 = vsel %vm170, %v1954, 0
    %v2051 = vsel %vm170, %v2048, 0
    %2053 = vmatprep.subr.mxu0 0.0
    %2054 = vmatpush1.xpose.msra.mxu0 %v2051
    %2055 = vmatprep.subr.mxu0 0.0
    %2056 = vmatpush1.xpose.msra.mxu0 0.0
    %2057 = vmatprep.subr.mxu0 0.0
    %2058 = vmatpush1.xpose.msra.mxu0 0.0
    %2059 = vmatprep.subr.mxu0 0.0
    %2060 = vmatpush1.xpose.msra.mxu0 0.0
    %2061 = vmatprep.subr.mxu0 0.0
    %2062 = vmatpush1.xpose.msra.mxu0 0.0
    %2063 = vmatprep.subr.mxu0 0.0
    %2064 = vmatpush1.xpose.msra.mxu0 0.0
    %2065 = vmatprep.subr.mxu0 0.0
    %2066 = vmatpush1.xpose.msra.mxu0 0.0
    %2067 = vmatprep.subr.mxu0 0.0
    %2068 = vmatpush1.xpose.msra.mxu0 0.0
    %2069 = vmatprep.subr.mxu0 0.0
    %2070 = vmatpush1.xpose.msra.mxu0 0.0
    %2071 = vmatprep.subr.mxu0 0.0
    %2072 = vmatpush1.xpose.msra.mxu0 0.0
    %2073 = vmatprep.subr.mxu0 0.0
    %2074 = vmatpush1.xpose.msra.mxu0 0.0
    %2075 = vmatprep.subr.mxu0 0.0
    %2076 = vmatpush1.xpose.msra.mxu0 0.0
    %2077 = vmatprep.subr.mxu0 0.0
    %2078 = vmatpush1.xpose.msra.mxu0 0.0
    %2079 = vmatprep.subr.mxu0 0.0
    %2080 = vmatpush1.xpose.msra.mxu0 0.0
    %2081 = vmatprep.subr.mxu0 0.0
    %2082 = vmatpush1.xpose.msra.mxu0 0.0
    %2083 = vmatprep.subr.mxu0 0.0
    %2084 = vmatpush1.xpose.msra.mxu0 0.0
    %2085 = vmatprep.subr.mxu0 0.0
    %2086 = vmatpush1.xpose.msra.mxu0 0.0
    %2087 = vmatprep.subr.mxu0 0.0
    %2088 = vmatpush1.xpose.msra.mxu0 0.0
    %2089 = vmatprep.subr.mxu0 0.0
    %2090 = vmatpush1.xpose.msra.mxu0 0.0
    %2091 = vmatprep.subr.mxu0 0.0
    %2092 = vmatpush1.xpose.msra.mxu0 0.0
    %2093 = vmatprep.subr.mxu0 0.0
    %2094 = vmatpush1.xpose.msra.mxu0 0.0
    %2095 = vmatprep.subr.mxu0 0.0
    %2096 = vmatpush1.xpose.msra.mxu0 0.0
    %2097 = vmatprep.subr.mxu0 0.0
    %2098 = vmatpush1.xpose.msra.mxu0 0.0
    %2099 = vmatprep.subr.mxu0 0.0
    %2100 = vmatpush1.xpose.msra.mxu0 0.0
    %2101 = vmatprep.subr.mxu0 0.0
    %2102 = vmatpush1.xpose.msra.mxu0 0.0
    %2103 = vmatprep.subr.mxu0 0.0
    %2104 = vmatpush1.xpose.msra.mxu0 0.0
    %2105 = vmatprep.subr.mxu0 0.0
    %2106 = vmatpush1.xpose.msra.mxu0 0.0
    %2107 = vmatprep.subr.mxu0 0.0
    %2108 = vmatpush1.xpose.msra.mxu0 0.0
    %2109 = vmatprep.subr.mxu0 0.0
    %2110 = vmatpush1.xpose.msra.mxu0 0.0
    %2111 = vmatprep.subr.mxu0 0.0
    %2112 = vmatpush1.xpose.msra.mxu0 0.0
    %2113 = vmatprep.subr.mxu0 0.0
    %2114 = vmatpush1.xpose.msra.mxu0 0.0
    %2115 = vmatprep.subr.mxu0 0.0
    %2116 = vmatpush1.xpose.msra.mxu0 0.0
    %2117 = vmatprep.mubr.f32.mxu0 0.0
    %2118 = vmatmul.mubr.f32.gmra.mrb[0].mxu0 %v2049
    %v2119 = vpop.f32.mrb[0].mxu0
    %v2120 = vadd.f32 0.0, %v2119
    %v2121 = vpop.f32.mrb[0].mxu0
    %2122 = vdwg.mxu0
    %2123 = vrot.lane.b32.xlu0 %v1960, 120
    %v2124 = vpop.permute.xlu0 %2123
    %v2125 = vsel %vm170, %v1960, 0
    %v2127 = vsel %vm170, %v2124, 0
    %2129 = vmatprep.subr.mxu0 0.0
    %2130 = vmatpush1.xpose.msra.mxu0 %v2127
    %2131 = vmatprep.subr.mxu0 0.0
    %2132 = vmatpush1.xpose.msra.mxu0 0.0
    %2133 = vmatprep.subr.mxu0 0.0
    %2134 = vmatpush1.xpose.msra.mxu0 0.0
    %2135 = vmatprep.subr.mxu0 0.0
    %2136 = vmatpush1.xpose.msra.mxu0 0.0
    %2137 = vmatprep.subr.mxu0 0.0
    %2138 = vmatpush1.xpose.msra.mxu0 0.0
    %2139 = vmatprep.subr.mxu0 0.0
    %2140 = vmatpush1.xpose.msra.mxu0 0.0
    %2141 = vmatprep.subr.mxu0 0.0
    %2142 = vmatpush1.xpose.msra.mxu0 0.0
    %2143 = vmatprep.subr.mxu0 0.0
    %2144 = vmatpush1.xpose.msra.mxu0 0.0
    %2145 = vmatprep.subr.mxu0 0.0
    %2146 = vmatpush1.xpose.msra.mxu0 0.0
    %2147 = vmatprep.subr.mxu0 0.0
    %2148 = vmatpush1.xpose.msra.mxu0 0.0
    %2149 = vmatprep.subr.mxu0 0.0
    %2150 = vmatpush1.xpose.msra.mxu0 0.0
    %2151 = vmatprep.subr.mxu0 0.0
    %2152 = vmatpush1.xpose.msra.mxu0 0.0
    %2153 = vmatprep.subr.mxu0 0.0
    %2154 = vmatpush1.xpose.msra.mxu0 0.0
    %2155 = vmatprep.subr.mxu0 0.0
    %2156 = vmatpush1.xpose.msra.mxu0 0.0
    %2157 = vmatprep.subr.mxu0 0.0
    %2158 = vmatpush1.xpose.msra.mxu0 0.0
    %2159 = vmatprep.subr.mxu0 0.0
    %2160 = vmatpush1.xpose.msra.mxu0 0.0
    %2161 = vmatprep.subr.mxu0 0.0
    %2162 = vmatpush1.xpose.msra.mxu0 0.0
    %2163 = vmatprep.subr.mxu0 0.0
    %2164 = vmatpush1.xpose.msra.mxu0 0.0
    %2165 = vmatprep.subr.mxu0 0.0
    %2166 = vmatpush1.xpose.msra.mxu0 0.0
    %2167 = vmatprep.subr.mxu0 0.0
    %2168 = vmatpush1.xpose.msra.mxu0 0.0
    %2169 = vmatprep.subr.mxu0 0.0
    %2170 = vmatpush1.xpose.msra.mxu0 0.0
    %2171 = vmatprep.subr.mxu0 0.0
    %2172 = vmatpush1.xpose.msra.mxu0 0.0
    %2173 = vmatprep.subr.mxu0 0.0
    %2174 = vmatpush1.xpose.msra.mxu0 0.0
    %2175 = vmatprep.subr.mxu0 0.0
    %2176 = vmatpush1.xpose.msra.mxu0 0.0
    %2177 = vmatprep.subr.mxu0 0.0
    %2178 = vmatpush1.xpose.msra.mxu0 0.0
    %2179 = vmatprep.subr.mxu0 0.0
    %2180 = vmatpush1.xpose.msra.mxu0 0.0
    %2181 = vmatprep.subr.mxu0 0.0
    %2182 = vmatpush1.xpose.msra.mxu0 0.0
    %2183 = vmatprep.subr.mxu0 0.0
    %2184 = vmatpush1.xpose.msra.mxu0 0.0
    %2185 = vmatprep.subr.mxu0 0.0
    %2186 = vmatpush1.xpose.msra.mxu0 0.0
    %2187 = vmatprep.subr.mxu0 0.0
    %2188 = vmatpush1.xpose.msra.mxu0 0.0
    %2189 = vmatprep.subr.mxu0 0.0
    %2190 = vmatpush1.xpose.msra.mxu0 0.0
    %2191 = vmatprep.subr.mxu0 0.0
    %2192 = vmatpush1.xpose.msra.mxu0 0.0
    %2193 = vmatprep.mubr.f32.mxu0 0.0
    %2194 = vmatmul.mubr.f32.gmra.mrb[0].mxu0 %v2125
    %v2195 = vpop.f32.mrb[0].mxu0
    %v2196 = vadd.f32 0.0, %v2195
    %v2197 = vpop.f32.mrb[0].mxu0
    %2198 = vdwg.mxu0
    %2199 = vrot.lane.b32.xlu0 %v1962, 120
    %v2200 = vpop.permute.xlu0 %2199
    %v2201 = vsel %vm170, %v1962, 0
    %v2203 = vsel %vm170, %v2200, 0
    %2205 = vmatprep.subr.mxu0 0.0
    %2206 = vmatpush1.xpose.msra.mxu0 %v2203
    %2207 = vmatprep.subr.mxu0 0.0
    %2208 = vmatpush1.xpose.msra.mxu0 0.0
    %2209 = vmatprep.subr.mxu0 0.0
    %2210 = vmatpush1.xpose.msra.mxu0 0.0
    %2211 = vmatprep.subr.mxu0 0.0
    %2212 = vmatpush1.xpose.msra.mxu0 0.0
    %2213 = vmatprep.subr.mxu0 0.0
    %2214 = vmatpush1.xpose.msra.mxu0 0.0
    %2215 = vmatprep.subr.mxu0 0.0
    %2216 = vmatpush1.xpose.msra.mxu0 0.0
    %2217 = vmatprep.subr.mxu0 0.0
    %2218 = vmatpush1.xpose.msra.mxu0 0.0
    %2219 = vmatprep.subr.mxu0 0.0
    %2220 = vmatpush1.xpose.msra.mxu0 0.0
    %2221 = vmatprep.subr.mxu0 0.0
    %2222 = vmatpush1.xpose.msra.mxu0 0.0
    %2223 = vmatprep.subr.mxu0 0.0
    %2224 = vmatpush1.xpose.msra.mxu0 0.0
    %2225 = vmatprep.subr.mxu0 0.0
    %2226 = vmatpush1.xpose.msra.mxu0 0.0
    %2227 = vmatprep.subr.mxu0 0.0
    %2228 = vmatpush1.xpose.msra.mxu0 0.0
    %2229 = vmatprep.subr.mxu0 0.0
    %2230 = vmatpush1.xpose.msra.mxu0 0.0
    %2231 = vmatprep.subr.mxu0 0.0
    %2232 = vmatpush1.xpose.msra.mxu0 0.0
    %2233 = vmatprep.subr.mxu0 0.0
    %2234 = vmatpush1.xpose.msra.mxu0 0.0
    %2235 = vmatprep.subr.mxu0 0.0
    %2236 = vmatpush1.xpose.msra.mxu0 0.0
    %2237 = vmatprep.subr.mxu0 0.0
    %2238 = vmatpush1.xpose.msra.mxu0 0.0
    %2239 = vmatprep.subr.mxu0 0.0
    %2240 = vmatpush1.xpose.msra.mxu0 0.0
    %2241 = vmatprep.subr.mxu0 0.0
    %2242 = vmatpush1.xpose.msra.mxu0 0.0
    %2243 = vmatprep.subr.mxu0 0.0
    %2244 = vmatpush1.xpose.msra.mxu0 0.0
    %2245 = vmatprep.subr.mxu0 0.0
    %2246 = vmatpush1.xpose.msra.mxu0 0.0
    %2247 = vmatprep.subr.mxu0 0.0
    %2248 = vmatpush1.xpose.msra.mxu0 0.0
    %2249 = vmatprep.subr.mxu0 0.0
    %2250 = vmatpush1.xpose.msra.mxu0 0.0
    %2251 = vmatprep.subr.mxu0 0.0
    %2252 = vmatpush1.xpose.msra.mxu0 0.0
    %2253 = vmatprep.subr.mxu0 0.0
    %2254 = vmatpush1.xpose.msra.mxu0 0.0
    %2255 = vmatprep.subr.mxu0 0.0
    %2256 = vmatpush1.xpose.msra.mxu0 0.0
    %2257 = vmatprep.subr.mxu0 0.0
    %2258 = vmatpush1.xpose.msra.mxu0 0.0
    %2259 = vmatprep.subr.mxu0 0.0
    %2260 = vmatpush1.xpose.msra.mxu0 0.0
    %2261 = vmatprep.subr.mxu0 0.0
    %2262 = vmatpush1.xpose.msra.mxu0 0.0
    %2263 = vmatprep.subr.mxu0 0.0
    %2264 = vmatpush1.xpose.msra.mxu0 0.0
    %2265 = vmatprep.subr.mxu0 0.0
    %2266 = vmatpush1.xpose.msra.mxu0 0.0
    %2267 = vmatprep.subr.mxu0 0.0
    %2268 = vmatpush1.xpose.msra.mxu0 0.0
    %2269 = vmatprep.mubr.f32.mxu0 0.0
    %2270 = vmatmul.mubr.f32.gmra.mrb[0].mxu0 %v2201
    %v2271 = vpop.f32.mrb[0].mxu0
    %v2272 = vadd.f32 0.0, %v2271
    %v2273 = vpop.f32.mrb[0].mxu0
    %2274 = vdwg.mxu0
    %2275 = vrot.lane.b32.xlu0 %v1964, 120
    %v2276 = vpop.permute.xlu0 %2275
    %v2277 = vsel %vm170, %v1964, 0
    %v2279 = vsel %vm170, %v2276, 0
    %2281 = vmatprep.subr.mxu0 0.0
    %2282 = vmatpush1.xpose.msra.mxu0 %v2279
    %2283 = vmatprep.subr.mxu0 0.0
    %2284 = vmatpush1.xpose.msra.mxu0 0.0
    %2285 = vmatprep.subr.mxu0 0.0
    %2286 = vmatpush1.xpose.msra.mxu0 0.0
    %2287 = vmatprep.subr.mxu0 0.0
    %2288 = vmatpush1.xpose.msra.mxu0 0.0
    %2289 = vmatprep.subr.mxu0 0.0
    %2290 = vmatpush1.xpose.msra.mxu0 0.0
    %2291 = vmatprep.subr.mxu0 0.0
    %2292 = vmatpush1.xpose.msra.mxu0 0.0
    %2293 = vmatprep.subr.mxu0 0.0
    %2294 = vmatpush1.xpose.msra.mxu0 0.0
    %2295 = vmatprep.subr.mxu0 0.0
    %2296 = vmatpush1.xpose.msra.mxu0 0.0
    %2297 = vmatprep.subr.mxu0 0.0
    %2298 = vmatpush1.xpose.msra.mxu0 0.0
    %2299 = vmatprep.subr.mxu0 0.0
    %2300 = vmatpush1.xpose.msra.mxu0 0.0
    %2301 = vmatprep.subr.mxu0 0.0
    %2302 = vmatpush1.xpose.msra.mxu0 0.0
    %2303 = vmatprep.subr.mxu0 0.0
    %2304 = vmatpush1.xpose.msra.mxu0 0.0
    %2305 = vmatprep.subr.mxu0 0.0
    %2306 = vmatpush1.xpose.msra.mxu0 0.0
    %2307 = vmatprep.subr.mxu0 0.0
    %2308 = vmatpush1.xpose.msra.mxu0 0.0
    %2309 = vmatprep.subr.mxu0 0.0
    %2310 = vmatpush1.xpose.msra.mxu0 0.0
    %2311 = vmatprep.subr.mxu0 0.0
    %2312 = vmatpush1.xpose.msra.mxu0 0.0
    %2313 = vmatprep.subr.mxu0 0.0
    %2314 = vmatpush1.xpose.msra.mxu0 0.0
    %2315 = vmatprep.subr.mxu0 0.0
    %2316 = vmatpush1.xpose.msra.mxu0 0.0
    %2317 = vmatprep.subr.mxu0 0.0
    %2318 = vmatpush1.xpose.msra.mxu0 0.0
    %2319 = vmatprep.subr.mxu0 0.0
    %2320 = vmatpush1.xpose.msra.mxu0 0.0
    %2321 = vmatprep.subr.mxu0 0.0
    %2322 = vmatpush1.xpose.msra.mxu0 0.0
    %2323 = vmatprep.subr.mxu0 0.0
    %2324 = vmatpush1.xpose.msra.mxu0 0.0
    %2325 = vmatprep.subr.mxu0 0.0
    %2326 = vmatpush1.xpose.msra.mxu0 0.0
    %2327 = vmatprep.subr.mxu0 0.0
    %2328 = vmatpush1.xpose.msra.mxu0 0.0
    %2329 = vmatprep.subr.mxu0 0.0
    %2330 = vmatpush1.xpose.msra.mxu0 0.0
    %2331 = vmatprep.subr.mxu0 0.0
    %2332 = vmatpush1.xpose.msra.mxu0 0.0
    %2333 = vmatprep.subr.mxu0 0.0
    %2334 = vmatpush1.xpose.msra.mxu0 0.0
    %2335 = vmatprep.subr.mxu0 0.0
    %2336 = vmatpush1.xpose.msra.mxu0 0.0
    %2337 = vmatprep.subr.mxu0 0.0
    %2338 = vmatpush1.xpose.msra.mxu0 0.0
    %2339 = vmatprep.subr.mxu0 0.0
    %2340 = vmatpush1.xpose.msra.mxu0 0.0
    %2341 = vmatprep.subr.mxu0 0.0
    %2342 = vmatpush1.xpose.msra.mxu0 0.0
    %2343 = vmatprep.subr.mxu0 0.0
    %2344 = vmatpush1.xpose.msra.mxu0 0.0
    %2345 = vmatprep.mubr.f32.mxu0 0.0
    %2346 = vmatmul.mubr.f32.gmra.mrb[0].mxu0 %v2277
    %v2347 = vpop.f32.mrb[0].mxu0
    %v2348 = vadd.f32 0.0, %v2347
    %v2349 = vpop.f32.mrb[0].mxu0
    %2350 = vdwg.mxu0
    %2351 = vrot.lane.b32.xlu0 %v1966, 120
    %v2352 = vpop.permute.xlu0 %2351
    %v2353 = vsel %vm170, %v1966, 0
    %v2355 = vsel %vm170, %v2352, 0
    %2357 = vmatprep.subr.mxu0 0.0
    %2358 = vmatpush1.xpose.msra.mxu0 %v2355
    %2359 = vmatprep.subr.mxu0 0.0
    %2360 = vmatpush1.xpose.msra.mxu0 0.0
    %2361 = vmatprep.subr.mxu0 0.0
    %2362 = vmatpush1.xpose.msra.mxu0 0.0
    %2363 = vmatprep.subr.mxu0 0.0
    %2364 = vmatpush1.xpose.msra.mxu0 0.0
    %2365 = vmatprep.subr.mxu0 0.0
    %2366 = vmatpush1.xpose.msra.mxu0 0.0
    %2367 = vmatprep.subr.mxu0 0.0
    %2368 = vmatpush1.xpose.msra.mxu0 0.0
    %2369 = vmatprep.subr.mxu0 0.0
    %2370 = vmatpush1.xpose.msra.mxu0 0.0
    %2371 = vmatprep.subr.mxu0 0.0
    %2372 = vmatpush1.xpose.msra.mxu0 0.0
    %2373 = vmatprep.subr.mxu0 0.0
    %2374 = vmatpush1.xpose.msra.mxu0 0.0
    %2375 = vmatprep.subr.mxu0 0.0
    %2376 = vmatpush1.xpose.msra.mxu0 0.0
    %2377 = vmatprep.subr.mxu0 0.0
    %2378 = vmatpush1.xpose.msra.mxu0 0.0
    %2379 = vmatprep.subr.mxu0 0.0
    %2380 = vmatpush1.xpose.msra.mxu0 0.0
    %2381 = vmatprep.subr.mxu0 0.0
    %2382 = vmatpush1.xpose.msra.mxu0 0.0
    %2383 = vmatprep.subr.mxu0 0.0
    %2384 = vmatpush1.xpose.msra.mxu0 0.0
    %2385 = vmatprep.subr.mxu0 0.0
    %2386 = vmatpush1.xpose.msra.mxu0 0.0
    %2387 = vmatprep.subr.mxu0 0.0
    %2388 = vmatpush1.xpose.msra.mxu0 0.0
    %2389 = vmatprep.subr.mxu0 0.0
    %2390 = vmatpush1.xpose.msra.mxu0 0.0
    %2391 = vmatprep.subr.mxu0 0.0
    %2392 = vmatpush1.xpose.msra.mxu0 0.0
    %2393 = vmatprep.subr.mxu0 0.0
    %2394 = vmatpush1.xpose.msra.mxu0 0.0
    %2395 = vmatprep.subr.mxu0 0.0
    %2396 = vmatpush1.xpose.msra.mxu0 0.0
    %2397 = vmatprep.subr.mxu0 0.0
    %2398 = vmatpush1.xpose.msra.mxu0 0.0
    %2399 = vmatprep.subr.mxu0 0.0
    %2400 = vmatpush1.xpose.msra.mxu0 0.0
    %2401 = vmatprep.subr.mxu0 0.0
    %2402 = vmatpush1.xpose.msra.mxu0 0.0
    %2403 = vmatprep.subr.mxu0 0.0
    %2404 = vmatpush1.xpose.msra.mxu0 0.0
    %2405 = vmatprep.subr.mxu0 0.0
    %2406 = vmatpush1.xpose.msra.mxu0 0.0
    %2407 = vmatprep.subr.mxu0 0.0
    %2408 = vmatpush1.xpose.msra.mxu0 0.0
    %2409 = vmatprep.subr.mxu0 0.0
    %2410 = vmatpush1.xpose.msra.mxu0 0.0
    %2411 = vmatprep.subr.mxu0 0.0
    %2412 = vmatpush1.xpose.msra.mxu0 0.0
    %2413 = vmatprep.subr.mxu0 0.0
    %2414 = vmatpush1.xpose.msra.mxu0 0.0
    %2415 = vmatprep.subr.mxu0 0.0
    %2416 = vmatpush1.xpose.msra.mxu0 0.0
    %2417 = vmatprep.subr.mxu0 0.0
    %2418 = vmatpush1.xpose.msra.mxu0 0.0
    %2419 = vmatprep.subr.mxu0 0.0
    %2420 = vmatpush1.xpose.msra.mxu0 0.0
    %2421 = vmatprep.mubr.f32.mxu0 0.0
    %2422 = vmatmul.mubr.f32.gmra.mrb[0].mxu0 %v2353
    %v2423 = vpop.f32.mrb[0].mxu0
    %v2424 = vadd.f32 0.0, %v2423
    %v2425 = vpop.f32.mrb[0].mxu0
    %2426 = vdwg.mxu0
    %2427 = vrot.lane.b32.xlu0 %v1968, 120
    %v2428 = vpop.permute.xlu0 %2427
    %v2429 = vsel %vm170, %v1968, 0
    %v2431 = vsel %vm170, %v2428, 0
    %2433 = vmatprep.subr.mxu0 0.0
    %2434 = vmatpush1.xpose.msra.mxu0 %v2431
    %2435 = vmatprep.subr.mxu0 0.0
    %2436 = vmatpush1.xpose.msra.mxu0 0.0
    %2437 = vmatprep.subr.mxu0 0.0
    %2438 = vmatpush1.xpose.msra.mxu0 0.0
    %2439 = vmatprep.subr.mxu0 0.0
    %2440 = vmatpush1.xpose.msra.mxu0 0.0
    %2441 = vmatprep.subr.mxu0 0.0
    %2442 = vmatpush1.xpose.msra.mxu0 0.0
    %2443 = vmatprep.subr.mxu0 0.0
    %2444 = vmatpush1.xpose.msra.mxu0 0.0
    %2445 = vmatprep.subr.mxu0 0.0
    %2446 = vmatpush1.xpose.msra.mxu0 0.0
    %2447 = vmatprep.subr.mxu0 0.0
    %2448 = vmatpush1.xpose.msra.mxu0 0.0
    %2449 = vmatprep.subr.mxu0 0.0
    %2450 = vmatpush1.xpose.msra.mxu0 0.0
    %2451 = vmatprep.subr.mxu0 0.0
    %2452 = vmatpush1.xpose.msra.mxu0 0.0
    %2453 = vmatprep.subr.mxu0 0.0
    %2454 = vmatpush1.xpose.msra.mxu0 0.0
    %2455 = vmatprep.subr.mxu0 0.0
    %2456 = vmatpush1.xpose.msra.mxu0 0.0
    %2457 = vmatprep.subr.mxu0 0.0
    %2458 = vmatpush1.xpose.msra.mxu0 0.0
    %2459 = vmatprep.subr.mxu0 0.0
    %2460 = vmatpush1.xpose.msra.mxu0 0.0
    %2461 = vmatprep.subr.mxu0 0.0
    %2462 = vmatpush1.xpose.msra.mxu0 0.0
    %2463 = vmatprep.subr.mxu0 0.0
    %2464 = vmatpush1.xpose.msra.mxu0 0.0
    %2465 = vmatprep.subr.mxu0 0.0
    %2466 = vmatpush1.xpose.msra.mxu0 0.0
    %2467 = vmatprep.subr.mxu0 0.0
    %2468 = vmatpush1.xpose.msra.mxu0 0.0
    %2469 = vmatprep.subr.mxu0 0.0
    %2470 = vmatpush1.xpose.msra.mxu0 0.0
    %2471 = vmatprep.subr.mxu0 0.0
    %2472 = vmatpush1.xpose.msra.mxu0 0.0
    %2473 = vmatprep.subr.mxu0 0.0
    %2474 = vmatpush1.xpose.msra.mxu0 0.0
    %2475 = vmatprep.subr.mxu0 0.0
    %2476 = vmatpush1.xpose.msra.mxu0 0.0
    %2477 = vmatprep.subr.mxu0 0.0
    %2478 = vmatpush1.xpose.msra.mxu0 0.0
    %2479 = vmatprep.subr.mxu0 0.0
    %2480 = vmatpush1.xpose.msra.mxu0 0.0
    %2481 = vmatprep.subr.mxu0 0.0
    %2482 = vmatpush1.xpose.msra.mxu0 0.0
    %2483 = vmatprep.subr.mxu0 0.0
    %2484 = vmatpush1.xpose.msra.mxu0 0.0
    %2485 = vmatprep.subr.mxu0 0.0
    %2486 = vmatpush1.xpose.msra.mxu0 0.0
    %2487 = vmatprep.subr.mxu0 0.0
    %2488 = vmatpush1.xpose.msra.mxu0 0.0
    %2489 = vmatprep.subr.mxu0 0.0
    %2490 = vmatpush1.xpose.msra.mxu0 0.0
    %2491 = vmatprep.subr.mxu0 0.0
    %2492 = vmatpush1.xpose.msra.mxu0 0.0
    %2493 = vmatprep.subr.mxu0 0.0
    %2494 = vmatpush1.xpose.msra.mxu0 0.0
    %2495 = vmatprep.subr.mxu0 0.0
    %2496 = vmatpush1.xpose.msra.mxu0 0.0
    %2497 = vmatprep.mubr.f32.mxu0 0.0
    %2498 = vmatmul.mubr.f32.gmra.mrb[0].mxu0 %v2429
    %v2499 = vpop.f32.mrb[0].mxu0
    %v2500 = vadd.f32 0.0, %v2499
    %v2501 = vpop.f32.mrb[0].mxu0
    %2502 = vdwg.mxu0
    %2503 = vrot.lane.b32.xlu0 %v1970, 120
    %v2504 = vpop.permute.xlu0 %2503
    %v2505 = vsel %vm170, %v1970, 0
    %v2507 = vsel %vm170, %v2504, 0
    %2509 = vmatprep.subr.mxu0 0.0
    %2510 = vmatpush1.xpose.msra.mxu0 %v2507
    %2511 = vmatprep.subr.mxu0 0.0
    %2512 = vmatpush1.xpose.msra.mxu0 0.0
    %2513 = vmatprep.subr.mxu0 0.0
    %2514 = vmatpush1.xpose.msra.mxu0 0.0
    %2515 = vmatprep.subr.mxu0 0.0
    %2516 = vmatpush1.xpose.msra.mxu0 0.0
    %2517 = vmatprep.subr.mxu0 0.0
    %2518 = vmatpush1.xpose.msra.mxu0 0.0
    %2519 = vmatprep.subr.mxu0 0.0
    %2520 = vmatpush1.xpose.msra.mxu0 0.0
    %2521 = vmatprep.subr.mxu0 0.0
    %2522 = vmatpush1.xpose.msra.mxu0 0.0
    %2523 = vmatprep.subr.mxu0 0.0
    %2524 = vmatpush1.xpose.msra.mxu0 0.0
    %2525 = vmatprep.subr.mxu0 0.0
    %2526 = vmatpush1.xpose.msra.mxu0 0.0
    %2527 = vmatprep.subr.mxu0 0.0
    %2528 = vmatpush1.xpose.msra.mxu0 0.0
    %2529 = vmatprep.subr.mxu0 0.0
    %2530 = vmatpush1.xpose.msra.mxu0 0.0
    %2531 = vmatprep.subr.mxu0 0.0
    %2532 = vmatpush1.xpose.msra.mxu0 0.0
    %2533 = vmatprep.subr.mxu0 0.0
    %2534 = vmatpush1.xpose.msra.mxu0 0.0
    %2535 = vmatprep.subr.mxu0 0.0
    %2536 = vmatpush1.xpose.msra.mxu0 0.0
    %2537 = vmatprep.subr.mxu0 0.0
    %2538 = vmatpush1.xpose.msra.mxu0 0.0
    %2539 = vmatprep.subr.mxu0 0.0
    %2540 = vmatpush1.xpose.msra.mxu0 0.0
    %2541 = vmatprep.subr.mxu0 0.0
    %2542 = vmatpush1.xpose.msra.mxu0 0.0
    %2543 = vmatprep.subr.mxu0 0.0
    %2544 = vmatpush1.xpose.msra.mxu0 0.0
    %2545 = vmatprep.subr.mxu0 0.0
    %2546 = vmatpush1.xpose.msra.mxu0 0.0
    %2547 = vmatprep.subr.mxu0 0.0
    %2548 = vmatpush1.xpose.msra.mxu0 0.0
    %2549 = vmatprep.subr.mxu0 0.0
    %2550 = vmatpush1.xpose.msra.mxu0 0.0
    %2551 = vmatprep.subr.mxu0 0.0
    %2552 = vmatpush1.xpose.msra.mxu0 0.0
    %2553 = vmatprep.subr.mxu0 0.0
    %2554 = vmatpush1.xpose.msra.mxu0 0.0
    %2555 = vmatprep.subr.mxu0 0.0
    %2556 = vmatpush1.xpose.msra.mxu0 0.0
    %2557 = vmatprep.subr.mxu0 0.0
    %2558 = vmatpush1.xpose.msra.mxu0 0.0
    %2559 = vmatprep.subr.mxu0 0.0
    %2560 = vmatpush1.xpose.msra.mxu0 0.0
    %2561 = vmatprep.subr.mxu0 0.0
    %2562 = vmatpush1.xpose.msra.mxu0 0.0
    %2563 = vmatprep.subr.mxu0 0.0
    %2564 = vmatpush1.xpose.msra.mxu0 0.0
    %2565 = vmatprep.subr.mxu0 0.0
    %2566 = vmatpush1.xpose.msra.mxu0 0.0
    %2567 = vmatprep.subr.mxu0 0.0
    %2568 = vmatpush1.xpose.msra.mxu0 0.0
    %2569 = vmatprep.subr.mxu0 0.0
    %2570 = vmatpush1.xpose.msra.mxu0 0.0
    %2571 = vmatprep.subr.mxu0 0.0
    %2572 = vmatpush1.xpose.msra.mxu0 0.0
    %2573 = vmatprep.mubr.f32.mxu0 0.0
    %2574 = vmatmul.mubr.f32.gmra.mrb[0].mxu0 %v2505
    %v2575 = vpop.f32.mrb[0].mxu0
    %v2576 = vadd.f32 0.0, %v2575
    %v2577 = vpop.f32.mrb[0].mxu0
    %2578 = vdwg.mxu0
    %v2579 = vsel %vm170, %v2044, -inf
    %2580 = vmax.xlane.f32.xlu0 %v2579
    %v2581 = vpop.xlane.xlu0 %2580
    %v2582 = vsel %vm170, %v2120, -inf
    %2583 = vmax.xlane.f32.xlu0 %v2582
    %v2584 = vpop.xlane.xlu0 %2583
    %v2585 = vsel %vm170, %v2196, -inf
    %2586 = vmax.xlane.f32.xlu0 %v2585
    %v2587 = vpop.xlane.xlu0 %2586
    %v2588 = vsel %vm170, %v2272, -inf
    %2589 = vmax.xlane.f32.xlu0 %v2588
    %v2590 = vpop.xlane.xlu0 %2589
    %v2591 = vsel %vm170, %v2348, -inf
    %2592 = vmax.xlane.f32.xlu0 %v2591
    %v2593 = vpop.xlane.xlu0 %2592
    %v2594 = vsel %vm170, %v2424, -inf
    %2595 = vmax.xlane.f32.xlu0 %v2594
    %v2596 = vpop.xlane.xlu0 %2595
    %v2597 = vsel %vm170, %v2500, -inf
    %2598 = vmax.xlane.f32.xlu0 %v2597
    %v2599 = vpop.xlane.xlu0 %2598
    %v2600 = vsel %vm170, %v2576, -inf
    %2601 = vmax.xlane.f32.xlu0 %v2600
    %v2602 = vpop.xlane.xlu0 %2601
    %v2603 = vsub.f32 %v2044, %v2581
    %v2604 = vsub.f32 %v2120, %v2584
    %v2605 = vsub.f32 %v2196, %v2587
    %v2606 = vsub.f32 %v2272, %v2590
    %v2607 = vsub.f32 %v2348, %v2593
    %v2608 = vsub.f32 %v2424, %v2596
    %v2609 = vsub.f32 %v2500, %v2599
    %v2610 = vsub.f32 %v2576, %v2602
    %v2611 = vmul.f32 %v2603, 1.442695
    %v2612 = vpow.pop %v2611
    %v2613 = vmul.f32 %v2604, 1.442695
    %v2614 = vpow.pop %v2613
    %v2615 = vmul.f32 %v2605, 1.442695
    %v2616 = vpow.pop %v2615
    %v2617 = vmul.f32 %v2606, 1.442695
    %v2618 = vpow.pop %v2617
    %v2619 = vmul.f32 %v2607, 1.442695
    %v2620 = vpow.pop %v2619
    %v2621 = vmul.f32 %v2608, 1.442695
    %v2622 = vpow.pop %v2621
    %v2623 = vmul.f32 %v2609, 1.442695
    %v2624 = vpow.pop %v2623
    %v2625 = vmul.f32 %v2610, 1.442695
    %v2626 = vpow.pop %v2625
    %v2627 = vsel %vm170, %v2612, 0.0
    %2628 = vadd.xlane.f32.xlu0 %v2627
    %v2629 = vpop.xlane.xlu0 %2628
    %v2630 = vsel %vm170, %v2614, 0.0
    %2631 = vadd.xlane.f32.xlu0 %v2630
    %v2632 = vpop.xlane.xlu0 %2631
    %v2633 = vsel %vm170, %v2616, 0.0
    %2634 = vadd.xlane.f32.xlu0 %v2633
    %v2635 = vpop.xlane.xlu0 %2634
    %v2636 = vsel %vm170, %v2618, 0.0
    %2637 = vadd.xlane.f32.xlu0 %v2636
    %v2638 = vpop.xlane.xlu0 %2637
    %v2639 = vsel %vm170, %v2620, 0.0
    %2640 = vadd.xlane.f32.xlu0 %v2639
    %v2641 = vpop.xlane.xlu0 %2640
    %v2642 = vsel %vm170, %v2622, 0.0
    %2643 = vadd.xlane.f32.xlu0 %v2642
    %v2644 = vpop.xlane.xlu0 %2643
    %v2645 = vsel %vm170, %v2624, 0.0
    %2646 = vadd.xlane.f32.xlu0 %v2645
    %v2647 = vpop.xlane.xlu0 %2646
    %v2648 = vsel %vm170, %v2626, 0.0
    %2649 = vadd.xlane.f32.xlu0 %v2648
    %v2650 = vpop.xlane.xlu0 %2649
    %v2651 = vrcp.pop %v2629
    %v2652 = vmul.f32 %v2612, %v2651
    %v2653 = vrcp.pop %v2632
    %v2654 = vmul.f32 %v2614, %v2653
    %v2655 = vrcp.pop %v2635
    %v2656 = vmul.f32 %v2616, %v2655
    %v2657 = vrcp.pop %v2638
    %v2658 = vmul.f32 %v2618, %v2657
    %v2659 = vrcp.pop %v2641
    %v2660 = vmul.f32 %v2620, %v2659
    %v2661 = vrcp.pop %v2644
    %v2662 = vmul.f32 %v2622, %v2661
    %v2663 = vrcp.pop %v2647
    %v2664 = vmul.f32 %v2624, %v2663
    %v2665 = vrcp.pop %v2650
    %v2666 = vmul.f32 %v2626, %v2665
    %2667 = vrot.lane.b32.xlu0 %v1949, 112
    %v2668 = vpop.permute.xlu0 %2667
    %v2671 = vsel %vm170, %v2652, 0
    %2673 = vmatprep.subr.mxu0 0.0
    %2674 = vmatpush1.msra.mxu0 %v2668
    %2675 = vmatprep.subr.mxu0 0.0
    %2676 = vmatpush1.msra.mxu0 0.0
    %2677 = vmatprep.subr.mxu0 0.0
    %2678 = vmatpush1.msra.mxu0 0.0
    %2679 = vmatprep.subr.mxu0 0.0
    %2680 = vmatpush1.msra.mxu0 0.0
    %2681 = vmatprep.subr.mxu0 0.0
    %2682 = vmatpush1.msra.mxu0 0.0
    %2683 = vmatprep.subr.mxu0 0.0
    %2684 = vmatpush1.msra.mxu0 0.0
    %2685 = vmatprep.subr.mxu0 0.0
    %2686 = vmatpush1.msra.mxu0 0.0
    %2687 = vmatprep.subr.mxu0 0.0
    %2688 = vmatpush1.msra.mxu0 0.0
    %2689 = vmatprep.subr.mxu0 0.0
    %2690 = vmatpush1.msra.mxu0 0.0
    %2691 = vmatprep.subr.mxu0 0.0
    %2692 = vmatpush1.msra.mxu0 0.0
    %2693 = vmatprep.subr.mxu0 0.0
    %2694 = vmatpush1.msra.mxu0 0.0
    %2695 = vmatprep.subr.mxu0 0.0
    %2696 = vmatpush1.msra.mxu0 0.0
    %2697 = vmatprep.subr.mxu0 0.0
    %2698 = vmatpush1.msra.mxu0 0.0
    %2699 = vmatprep.subr.mxu0 0.0
    %2700 = vmatpush1.msra.mxu0 0.0
    %2701 = vmatprep.subr.mxu0 0.0
    %2702 = vmatpush1.msra.mxu0 0.0
    %2703 = vmatprep.subr.mxu0 0.0
    %2704 = vmatpush1.msra.mxu0 0.0
    %2705 = vmatprep.subr.mxu0 0.0
    %2706 = vmatpush1.msra.mxu0 0.0
    %2707 = vmatprep.subr.mxu0 0.0
    %2708 = vmatpush1.msra.mxu0 0.0
    %2709 = vmatprep.subr.mxu0 0.0
    %2710 = vmatpush1.msra.mxu0 0.0
    %2711 = vmatprep.subr.mxu0 0.0
    %2712 = vmatpush1.msra.mxu0 0.0
    %2713 = vmatprep.subr.mxu0 0.0
    %2714 = vmatpush1.msra.mxu0 0.0
    %2715 = vmatprep.subr.mxu0 0.0
    %2716 = vmatpush1.msra.mxu0 0.0
    %2717 = vmatprep.subr.mxu0 0.0
    %2718 = vmatpush1.msra.mxu0 0.0
    %2719 = vmatprep.subr.mxu0 0.0
    %2720 = vmatpush1.msra.mxu0 0.0
    %2721 = vmatprep.subr.mxu0 0.0
    %2722 = vmatpush1.msra.mxu0 0.0
    %2723 = vmatprep.subr.mxu0 0.0
    %2724 = vmatpush1.msra.mxu0 0.0
    %2725 = vmatprep.subr.mxu0 0.0
    %2726 = vmatpush1.msra.mxu0 0.0
    %2727 = vmatprep.subr.mxu0 0.0
    %2728 = vmatpush1.msra.mxu0 0.0
    %2729 = vmatprep.subr.mxu0 0.0
    %2730 = vmatpush1.msra.mxu0 0.0
    %2731 = vmatprep.subr.mxu0 0.0
    %2732 = vmatpush1.msra.mxu0 0.0
    %2733 = vmatprep.subr.mxu0 0.0
    %2734 = vmatpush1.msra.mxu0 0.0
    %2735 = vmatprep.subr.mxu0 0.0
    %2736 = vmatpush1.msra.mxu0 0.0
    %2737 = vmatprep.mubr.f32.mxu0 0.0
    %2738 = vmatmul.mubr.f32.gmra.mrb[0].mxu0 %v2671
    %v2739 = vpop.f32.mrb[0].mxu0
    %v2740 = vadd.f32 0.0, %v2739
    %v2741 = vpop.f32.mrb[0].mxu0
    %2742 = vdwg.mxu0
    %2743 = vrot.lane.b32.xlu0 %v1954, 112
    %v2744 = vpop.permute.xlu0 %2743
    %v2747 = vsel %vm170, %v2654, 0
    %2749 = vmatprep.subr.mxu0 0.0
    %2750 = vmatpush1.msra.mxu0 %v2744
    %2751 = vmatprep.subr.mxu0 0.0
    %2752 = vmatpush1.msra.mxu0 0.0
    %2753 = vmatprep.subr.mxu0 0.0
    %2754 = vmatpush1.msra.mxu0 0.0
    %2755 = vmatprep.subr.mxu0 0.0
    %2756 = vmatpush1.msra.mxu0 0.0
    %2757 = vmatprep.subr.mxu0 0.0
    %2758 = vmatpush1.msra.mxu0 0.0
    %2759 = vmatprep.subr.mxu0 0.0
    %2760 = vmatpush1.msra.mxu0 0.0
    %2761 = vmatprep.subr.mxu0 0.0
    %2762 = vmatpush1.msra.mxu0 0.0
    %2763 = vmatprep.subr.mxu0 0.0
    %2764 = vmatpush1.msra.mxu0 0.0
    %2765 = vmatprep.subr.mxu0 0.0
    %2766 = vmatpush1.msra.mxu0 0.0
    %2767 = vmatprep.subr.mxu0 0.0
    %2768 = vmatpush1.msra.mxu0 0.0
    %2769 = vmatprep.subr.mxu0 0.0
    %2770 = vmatpush1.msra.mxu0 0.0
    %2771 = vmatprep.subr.mxu0 0.0
    %2772 = vmatpush1.msra.mxu0 0.0
    %2773 = vmatprep.subr.mxu0 0.0
    %2774 = vmatpush1.msra.mxu0 0.0
    %2775 = vmatprep.subr.mxu0 0.0
    %2776 = vmatpush1.msra.mxu0 0.0
    %2777 = vmatprep.subr.mxu0 0.0
    %2778 = vmatpush1.msra.mxu0 0.0
    %2779 = vmatprep.subr.mxu0 0.0
    %2780 = vmatpush1.msra.mxu0 0.0
    %2781 = vmatprep.subr.mxu0 0.0
    %2782 = vmatpush1.msra.mxu0 0.0
    %2783 = vmatprep.subr.mxu0 0.0
    %2784 = vmatpush1.msra.mxu0 0.0
    %2785 = vmatprep.subr.mxu0 0.0
    %2786 = vmatpush1.msra.mxu0 0.0
    %2787 = vmatprep.subr.mxu0 0.0
    %2788 = vmatpush1.msra.mxu0 0.0
    %2789 = vmatprep.subr.mxu0 0.0
    %2790 = vmatpush1.msra.mxu0 0.0
    %2791 = vmatprep.subr.mxu0 0.0
    %2792 = vmatpush1.msra.mxu0 0.0
    %2793 = vmatprep.subr.mxu0 0.0
    %2794 = vmatpush1.msra.mxu0 0.0
    %2795 = vmatprep.subr.mxu0 0.0
    %2796 = vmatpush1.msra.mxu0 0.0
    %2797 = vmatprep.subr.mxu0 0.0
    %2798 = vmatpush1.msra.mxu0 0.0
    %2799 = vmatprep.subr.mxu0 0.0
    %2800 = vmatpush1.msra.mxu0 0.0
    %2801 = vmatprep.subr.mxu0 0.0
    %2802 = vmatpush1.msra.mxu0 0.0
    %2803 = vmatprep.subr.mxu0 0.0
    %2804 = vmatpush1.msra.mxu0 0.0
    %2805 = vmatprep.subr.mxu0 0.0
    %2806 = vmatpush1.msra.mxu0 0.0
    %2807 = vmatprep.subr.mxu0 0.0
    %2808 = vmatpush1.msra.mxu0 0.0
    %2809 = vmatprep.subr.mxu0 0.0
    %2810 = vmatpush1.msra.mxu0 0.0
    %2811 = vmatprep.subr.mxu0 0.0
    %2812 = vmatpush1.msra.mxu0 0.0
    %2813 = vmatprep.mubr.f32.mxu0 0.0
    %2814 = vmatmul.mubr.f32.gmra.mrb[0].mxu0 %v2747
    %v2815 = vpop.f32.mrb[0].mxu0
    %v2816 = vadd.f32 0.0, %v2815
    %v2817 = vpop.f32.mrb[0].mxu0
    %2818 = vdwg.mxu0
    %2819 = vrot.lane.b32.xlu0 %v1960, 112
    %v2820 = vpop.permute.xlu0 %2819
    %v2823 = vsel %vm170, %v2656, 0
    %2825 = vmatprep.subr.mxu0 0.0
    %2826 = vmatpush1.msra.mxu0 %v2820
    %2827 = vmatprep.subr.mxu0 0.0
    %2828 = vmatpush1.msra.mxu0 0.0
    %2829 = vmatprep.subr.mxu0 0.0
    %2830 = vmatpush1.msra.mxu0 0.0
    %2831 = vmatprep.subr.mxu0 0.0
    %2832 = vmatpush1.msra.mxu0 0.0
    %2833 = vmatprep.subr.mxu0 0.0
    %2834 = vmatpush1.msra.mxu0 0.0
    %2835 = vmatprep.subr.mxu0 0.0
    %2836 = vmatpush1.msra.mxu0 0.0
    %2837 = vmatprep.subr.mxu0 0.0
    %2838 = vmatpush1.msra.mxu0 0.0
    %2839 = vmatprep.subr.mxu0 0.0
    %2840 = vmatpush1.msra.mxu0 0.0
    %2841 = vmatprep.subr.mxu0 0.0
    %2842 = vmatpush1.msra.mxu0 0.0
    %2843 = vmatprep.subr.mxu0 0.0
    %2844 = vmatpush1.msra.mxu0 0.0
    %2845 = vmatprep.subr.mxu0 0.0
    %2846 = vmatpush1.msra.mxu0 0.0
    %2847 = vmatprep.subr.mxu0 0.0
    %2848 = vmatpush1.msra.mxu0 0.0
    %2849 = vmatprep.subr.mxu0 0.0
    %2850 = vmatpush1.msra.mxu0 0.0
    %2851 = vmatprep.subr.mxu0 0.0
    %2852 = vmatpush1.msra.mxu0 0.0
    %2853 = vmatprep.subr.mxu0 0.0
    %2854 = vmatpush1.msra.mxu0 0.0
    %2855 = vmatprep.subr.mxu0 0.0
    %2856 = vmatpush1.msra.mxu0 0.0
    %2857 = vmatprep.subr.mxu0 0.0
    %2858 = vmatpush1.msra.mxu0 0.0
    %2859 = vmatprep.subr.mxu0 0.0
    %2860 = vmatpush1.msra.mxu0 0.0
    %2861 = vmatprep.subr.mxu0 0.0
    %2862 = vmatpush1.msra.mxu0 0.0
    %2863 = vmatprep.subr.mxu0 0.0
    %2864 = vmatpush1.msra.mxu0 0.0
    %2865 = vmatprep.subr.mxu0 0.0
    %2866 = vmatpush1.msra.mxu0 0.0
    %2867 = vmatprep.subr.mxu0 0.0
    %2868 = vmatpush1.msra.mxu0 0.0
    %2869 = vmatprep.subr.mxu0 0.0
    %2870 = vmatpush1.msra.mxu0 0.0
    %2871 = vmatprep.subr.mxu0 0.0
    %2872 = vmatpush1.msra.mxu0 0.0
    %2873 = vmatprep.subr.mxu0 0.0
    %2874 = vmatpush1.msra.mxu0 0.0
    %2875 = vmatprep.subr.mxu0 0.0
    %2876 = vmatpush1.msra.mxu0 0.0
    %2877 = vmatprep.subr.mxu0 0.0
    %2878 = vmatpush1.msra.mxu0 0.0
    %2879 = vmatprep.subr.mxu0 0.0
    %2880 = vmatpush1.msra.mxu0 0.0
    %2881 = vmatprep.subr.mxu0 0.0
    %2882 = vmatpush1.msra.mxu0 0.0
    %2883 = vmatprep.subr.mxu0 0.0
    %2884 = vmatpush1.msra.mxu0 0.0
    %2885 = vmatprep.subr.mxu0 0.0
    %2886 = vmatpush1.msra.mxu0 0.0
    %2887 = vmatprep.subr.mxu0 0.0
    %2888 = vmatpush1.msra.mxu0 0.0
    %2889 = vmatprep.mubr.f32.mxu0 0.0
    %2890 = vmatmul.mubr.f32.gmra.mrb[0].mxu0 %v2823
    %v2891 = vpop.f32.mrb[0].mxu0
    %v2892 = vadd.f32 0.0, %v2891
    %v2893 = vpop.f32.mrb[0].mxu0
    %2894 = vdwg.mxu0
    %2895 = vrot.lane.b32.xlu0 %v1962, 112
    %v2896 = vpop.permute.xlu0 %2895
    %v2899 = vsel %vm170, %v2658, 0
    %2901 = vmatprep.subr.mxu0 0.0
    %2902 = vmatpush1.msra.mxu0 %v2896
    %2903 = vmatprep.subr.mxu0 0.0
    %2904 = vmatpush1.msra.mxu0 0.0
    %2905 = vmatprep.subr.mxu0 0.0
    %2906 = vmatpush1.msra.mxu0 0.0
    %2907 = vmatprep.subr.mxu0 0.0
    %2908 = vmatpush1.msra.mxu0 0.0
    %2909 = vmatprep.subr.mxu0 0.0
    %2910 = vmatpush1.msra.mxu0 0.0
    %2911 = vmatprep.subr.mxu0 0.0
    %2912 = vmatpush1.msra.mxu0 0.0
    %2913 = vmatprep.subr.mxu0 0.0
    %2914 = vmatpush1.msra.mxu0 0.0
    %2915 = vmatprep.subr.mxu0 0.0
    %2916 = vmatpush1.msra.mxu0 0.0
    %2917 = vmatprep.subr.mxu0 0.0
    %2918 = vmatpush1.msra.mxu0 0.0
    %2919 = vmatprep.subr.mxu0 0.0
    %2920 = vmatpush1.msra.mxu0 0.0
    %2921 = vmatprep.subr.mxu0 0.0
    %2922 = vmatpush1.msra.mxu0 0.0
    %2923 = vmatprep.subr.mxu0 0.0
    %2924 = vmatpush1.msra.mxu0 0.0
    %2925 = vmatprep.subr.mxu0 0.0
    %2926 = vmatpush1.msra.mxu0 0.0
    %2927 = vmatprep.subr.mxu0 0.0
    %2928 = vmatpush1.msra.mxu0 0.0
    %2929 = vmatprep.subr.mxu0 0.0
    %2930 = vmatpush1.msra.mxu0 0.0
    %2931 = vmatprep.subr.mxu0 0.0
    %2932 = vmatpush1.msra.mxu0 0.0
    %2933 = vmatprep.subr.mxu0 0.0
    %2934 = vmatpush1.msra.mxu0 0.0
    %2935 = vmatprep.subr.mxu0 0.0
    %2936 = vmatpush1.msra.mxu0 0.0
    %2937 = vmatprep.subr.mxu0 0.0
    %2938 = vmatpush1.msra.mxu0 0.0
    %2939 = vmatprep.subr.mxu0 0.0
    %2940 = vmatpush1.msra.mxu0 0.0
    %2941 = vmatprep.subr.mxu0 0.0
    %2942 = vmatpush1.msra.mxu0 0.0
    %2943 = vmatprep.subr.mxu0 0.0
    %2944 = vmatpush1.msra.mxu0 0.0
    %2945 = vmatprep.subr.mxu0 0.0
    %2946 = vmatpush1.msra.mxu0 0.0
    %2947 = vmatprep.subr.mxu0 0.0
    %2948 = vmatpush1.msra.mxu0 0.0
    %2949 = vmatprep.subr.mxu0 0.0
    %2950 = vmatpush1.msra.mxu0 0.0
    %2951 = vmatprep.subr.mxu0 0.0
    %2952 = vmatpush1.msra.mxu0 0.0
    %2953 = vmatprep.subr.mxu0 0.0
    %2954 = vmatpush1.msra.mxu0 0.0
    %2955 = vmatprep.subr.mxu0 0.0
    %2956 = vmatpush1.msra.mxu0 0.0
    %2957 = vmatprep.subr.mxu0 0.0
    %2958 = vmatpush1.msra.mxu0 0.0
    %2959 = vmatprep.subr.mxu0 0.0
    %2960 = vmatpush1.msra.mxu0 0.0
    %2961 = vmatprep.subr.mxu0 0.0
    %2962 = vmatpush1.msra.mxu0 0.0
    %2963 = vmatprep.subr.mxu0 0.0
    %2964 = vmatpush1.msra.mxu0 0.0
    %2965 = vmatprep.mubr.f32.mxu0 0.0
    %2966 = vmatmul.mubr.f32.gmra.mrb[0].mxu0 %v2899
    %v2967 = vpop.f32.mrb[0].mxu0
    %v2968 = vadd.f32 0.0, %v2967
    %v2969 = vpop.f32.mrb[0].mxu0
    %2970 = vdwg.mxu0
    %2971 = vrot.lane.b32.xlu0 %v1964, 112
    %v2972 = vpop.permute.xlu0 %2971
    %v2975 = vsel %vm170, %v2660, 0
    %2977 = vmatprep.subr.mxu0 0.0
    %2978 = vmatpush1.msra.mxu0 %v2972
    %2979 = vmatprep.subr.mxu0 0.0
    %2980 = vmatpush1.msra.mxu0 0.0
    %2981 = vmatprep.subr.mxu0 0.0
    %2982 = vmatpush1.msra.mxu0 0.0
    %2983 = vmatprep.subr.mxu0 0.0
    %2984 = vmatpush1.msra.mxu0 0.0
    %2985 = vmatprep.subr.mxu0 0.0
    %2986 = vmatpush1.msra.mxu0 0.0
    %2987 = vmatprep.subr.mxu0 0.0
    %2988 = vmatpush1.msra.mxu0 0.0
    %2989 = vmatprep.subr.mxu0 0.0
    %2990 = vmatpush1.msra.mxu0 0.0
    %2991 = vmatprep.subr.mxu0 0.0
    %2992 = vmatpush1.msra.mxu0 0.0
    %2993 = vmatprep.subr.mxu0 0.0
    %2994 = vmatpush1.msra.mxu0 0.0
    %2995 = vmatprep.subr.mxu0 0.0
    %2996 = vmatpush1.msra.mxu0 0.0
    %2997 = vmatprep.subr.mxu0 0.0
    %2998 = vmatpush1.msra.mxu0 0.0
    %2999 = vmatprep.subr.mxu0 0.0
    %3000 = vmatpush1.msra.mxu0 0.0
    %3001 = vmatprep.subr.mxu0 0.0
    %3002 = vmatpush1.msra.mxu0 0.0
    %3003 = vmatprep.subr.mxu0 0.0
    %3004 = vmatpush1.msra.mxu0 0.0
    %3005 = vmatprep.subr.mxu0 0.0
    %3006 = vmatpush1.msra.mxu0 0.0
    %3007 = vmatprep.subr.mxu0 0.0
    %3008 = vmatpush1.msra.mxu0 0.0
    %3009 = vmatprep.subr.mxu0 0.0
    %3010 = vmatpush1.msra.mxu0 0.0
    %3011 = vmatprep.subr.mxu0 0.0
    %3012 = vmatpush1.msra.mxu0 0.0
    %3013 = vmatprep.subr.mxu0 0.0
    %3014 = vmatpush1.msra.mxu0 0.0
    %3015 = vmatprep.subr.mxu0 0.0
    %3016 = vmatpush1.msra.mxu0 0.0
    %3017 = vmatprep.subr.mxu0 0.0
    %3018 = vmatpush1.msra.mxu0 0.0
    %3019 = vmatprep.subr.mxu0 0.0
    %3020 = vmatpush1.msra.mxu0 0.0
    %3021 = vmatprep.subr.mxu0 0.0
    %3022 = vmatpush1.msra.mxu0 0.0
    %3023 = vmatprep.subr.mxu0 0.0
    %3024 = vmatpush1.msra.mxu0 0.0
    %3025 = vmatprep.subr.mxu0 0.0
    %3026 = vmatpush1.msra.mxu0 0.0
    %3027 = vmatprep.subr.mxu0 0.0
    %3028 = vmatpush1.msra.mxu0 0.0
    %3029 = vmatprep.subr.mxu0 0.0
    %3030 = vmatpush1.msra.mxu0 0.0
    %3031 = vmatprep.subr.mxu0 0.0
    %3032 = vmatpush1.msra.mxu0 0.0
    %3033 = vmatprep.subr.mxu0 0.0
    %3034 = vmatpush1.msra.mxu0 0.0
    %3035 = vmatprep.subr.mxu0 0.0
    %3036 = vmatpush1.msra.mxu0 0.0
    %3037 = vmatprep.subr.mxu0 0.0
    %3038 = vmatpush1.msra.mxu0 0.0
    %3039 = vmatprep.subr.mxu0 0.0
    %3040 = vmatpush1.msra.mxu0 0.0
    %3041 = vmatprep.mubr.f32.mxu0 0.0
    %3042 = vmatmul.mubr.f32.gmra.mrb[0].mxu0 %v2975
    %v3043 = vpop.f32.mrb[0].mxu0
    %v3044 = vadd.f32 0.0, %v3043
    %v3045 = vpop.f32.mrb[0].mxu0
    %3046 = vdwg.mxu0
    %3047 = vrot.lane.b32.xlu0 %v1966, 112
    %v3048 = vpop.permute.xlu0 %3047
    %v3051 = vsel %vm170, %v2662, 0
    %3053 = vmatprep.subr.mxu0 0.0
    %3054 = vmatpush1.msra.mxu0 %v3048
    %3055 = vmatprep.subr.mxu0 0.0
    %3056 = vmatpush1.msra.mxu0 0.0
    %3057 = vmatprep.subr.mxu0 0.0
    %3058 = vmatpush1.msra.mxu0 0.0
    %3059 = vmatprep.subr.mxu0 0.0
    %3060 = vmatpush1.msra.mxu0 0.0
    %3061 = vmatprep.subr.mxu0 0.0
    %3062 = vmatpush1.msra.mxu0 0.0
    %3063 = vmatprep.subr.mxu0 0.0
    %3064 = vmatpush1.msra.mxu0 0.0
    %3065 = vmatprep.subr.mxu0 0.0
    %3066 = vmatpush1.msra.mxu0 0.0
    %3067 = vmatprep.subr.mxu0 0.0
    %3068 = vmatpush1.msra.mxu0 0.0
    %3069 = vmatprep.subr.mxu0 0.0
    %3070 = vmatpush1.msra.mxu0 0.0
    %3071 = vmatprep.subr.mxu0 0.0
    %3072 = vmatpush1.msra.mxu0 0.0
    %3073 = vmatprep.subr.mxu0 0.0
    %3074 = vmatpush1.msra.mxu0 0.0
    %3075 = vmatprep.subr.mxu0 0.0
    %3076 = vmatpush1.msra.mxu0 0.0
    %3077 = vmatprep.subr.mxu0 0.0
    %3078 = vmatpush1.msra.mxu0 0.0
    %3079 = vmatprep.subr.mxu0 0.0
    %3080 = vmatpush1.msra.mxu0 0.0
    %3081 = vmatprep.subr.mxu0 0.0
    %3082 = vmatpush1.msra.mxu0 0.0
    %3083 = vmatprep.subr.mxu0 0.0
    %3084 = vmatpush1.msra.mxu0 0.0
    %3085 = vmatprep.subr.mxu0 0.0
    %3086 = vmatpush1.msra.mxu0 0.0
    %3087 = vmatprep.subr.mxu0 0.0
    %3088 = vmatpush1.msra.mxu0 0.0
    %3089 = vmatprep.subr.mxu0 0.0
    %3090 = vmatpush1.msra.mxu0 0.0
    %3091 = vmatprep.subr.mxu0 0.0
    %3092 = vmatpush1.msra.mxu0 0.0
    %3093 = vmatprep.subr.mxu0 0.0
    %3094 = vmatpush1.msra.mxu0 0.0
    %3095 = vmatprep.subr.mxu0 0.0
    %3096 = vmatpush1.msra.mxu0 0.0
    %3097 = vmatprep.subr.mxu0 0.0
    %3098 = vmatpush1.msra.mxu0 0.0
    %3099 = vmatprep.subr.mxu0 0.0
    %3100 = vmatpush1.msra.mxu0 0.0
    %3101 = vmatprep.subr.mxu0 0.0
    %3102 = vmatpush1.msra.mxu0 0.0
    %3103 = vmatprep.subr.mxu0 0.0
    %3104 = vmatpush1.msra.mxu0 0.0
    %3105 = vmatprep.subr.mxu0 0.0
    %3106 = vmatpush1.msra.mxu0 0.0
    %3107 = vmatprep.subr.mxu0 0.0
    %3108 = vmatpush1.msra.mxu0 0.0
    %3109 = vmatprep.subr.mxu0 0.0
    %3110 = vmatpush1.msra.mxu0 0.0
    %3111 = vmatprep.subr.mxu0 0.0
    %3112 = vmatpush1.msra.mxu0 0.0
    %3113 = vmatprep.subr.mxu0 0.0
    %3114 = vmatpush1.msra.mxu0 0.0
    %3115 = vmatprep.subr.mxu0 0.0
    %3116 = vmatpush1.msra.mxu0 0.0
    %3117 = vmatprep.mubr.f32.mxu0 0.0
    %3118 = vmatmul.mubr.f32.gmra.mrb[0].mxu0 %v3051
    %v3119 = vpop.f32.mrb[0].mxu0
    %v3120 = vadd.f32 0.0, %v3119
    %v3121 = vpop.f32.mrb[0].mxu0
    %3122 = vdwg.mxu0
    %3123 = vrot.lane.b32.xlu0 %v1968, 112
    %v3124 = vpop.permute.xlu0 %3123
    %v3127 = vsel %vm170, %v2664, 0
    %3129 = vmatprep.subr.mxu0 0.0
    %3130 = vmatpush1.msra.mxu0 %v3124
    %3131 = vmatprep.subr.mxu0 0.0
    %3132 = vmatpush1.msra.mxu0 0.0
    %3133 = vmatprep.subr.mxu0 0.0
    %3134 = vmatpush1.msra.mxu0 0.0
    %3135 = vmatprep.subr.mxu0 0.0
    %3136 = vmatpush1.msra.mxu0 0.0
    %3137 = vmatprep.subr.mxu0 0.0
    %3138 = vmatpush1.msra.mxu0 0.0
    %3139 = vmatprep.subr.mxu0 0.0
    %3140 = vmatpush1.msra.mxu0 0.0
    %3141 = vmatprep.subr.mxu0 0.0
    %3142 = vmatpush1.msra.mxu0 0.0
    %3143 = vmatprep.subr.mxu0 0.0
    %3144 = vmatpush1.msra.mxu0 0.0
    %3145 = vmatprep.subr.mxu0 0.0
    %3146 = vmatpush1.msra.mxu0 0.0
    %3147 = vmatprep.subr.mxu0 0.0
    %3148 = vmatpush1.msra.mxu0 0.0
    %3149 = vmatprep.subr.mxu0 0.0
    %3150 = vmatpush1.msra.mxu0 0.0
    %3151 = vmatprep.subr.mxu0 0.0
    %3152 = vmatpush1.msra.mxu0 0.0
    %3153 = vmatprep.subr.mxu0 0.0
    %3154 = vmatpush1.msra.mxu0 0.0
    %3155 = vmatprep.subr.mxu0 0.0
    %3156 = vmatpush1.msra.mxu0 0.0
    %3157 = vmatprep.subr.mxu0 0.0
    %3158 = vmatpush1.msra.mxu0 0.0
    %3159 = vmatprep.subr.mxu0 0.0
    %3160 = vmatpush1.msra.mxu0 0.0
    %3161 = vmatprep.subr.mxu0 0.0
    %3162 = vmatpush1.msra.mxu0 0.0
    %3163 = vmatprep.subr.mxu0 0.0
    %3164 = vmatpush1.msra.mxu0 0.0
    %3165 = vmatprep.subr.mxu0 0.0
    %3166 = vmatpush1.msra.mxu0 0.0
    %3167 = vmatprep.subr.mxu0 0.0
    %3168 = vmatpush1.msra.mxu0 0.0
    %3169 = vmatprep.subr.mxu0 0.0
    %3170 = vmatpush1.msra.mxu0 0.0
    %3171 = vmatprep.subr.mxu0 0.0
    %3172 = vmatpush1.msra.mxu0 0.0
    %3173 = vmatprep.subr.mxu0 0.0
    %3174 = vmatpush1.msra.mxu0 0.0
    %3175 = vmatprep.subr.mxu0 0.0
    %3176 = vmatpush1.msra.mxu0 0.0
    %3177 = vmatprep.subr.mxu0 0.0
    %3178 = vmatpush1.msra.mxu0 0.0
    %3179 = vmatprep.subr.mxu0 0.0
    %3180 = vmatpush1.msra.mxu0 0.0
    %3181 = vmatprep.subr.mxu0 0.0
    %3182 = vmatpush1.msra.mxu0 0.0
    %3183 = vmatprep.subr.mxu0 0.0
    %3184 = vmatpush1.msra.mxu0 0.0
    %3185 = vmatprep.subr.mxu0 0.0
    %3186 = vmatpush1.msra.mxu0 0.0
    %3187 = vmatprep.subr.mxu0 0.0
    %3188 = vmatpush1.msra.mxu0 0.0
    %3189 = vmatprep.subr.mxu0 0.0
    %3190 = vmatpush1.msra.mxu0 0.0
    %3191 = vmatprep.subr.mxu0 0.0
    %3192 = vmatpush1.msra.mxu0 0.0
    %3193 = vmatprep.mubr.f32.mxu0 0.0
    %3194 = vmatmul.mubr.f32.gmra.mrb[0].mxu0 %v3127
    %v3195 = vpop.f32.mrb[0].mxu0
    %v3196 = vadd.f32 0.0, %v3195
    %v3197 = vpop.f32.mrb[0].mxu0
    %3198 = vdwg.mxu0
    %3199 = vrot.lane.b32.xlu0 %v1970, 112
    %v3200 = vpop.permute.xlu0 %3199
    %v3203 = vsel %vm170, %v2666, 0
    %3205 = vmatprep.subr.mxu0 0.0
    %3206 = vmatpush1.msra.mxu0 %v3200
    %3207 = vmatprep.subr.mxu0 0.0
    %3208 = vmatpush1.msra.mxu0 0.0
    %3209 = vmatprep.subr.mxu0 0.0
    %3210 = vmatpush1.msra.mxu0 0.0
    %3211 = vmatprep.subr.mxu0 0.0
    %3212 = vmatpush1.msra.mxu0 0.0
    %3213 = vmatprep.subr.mxu0 0.0
    %3214 = vmatpush1.msra.mxu0 0.0
    %3215 = vmatprep.subr.mxu0 0.0
    %3216 = vmatpush1.msra.mxu0 0.0
    %3217 = vmatprep.subr.mxu0 0.0
    %3218 = vmatpush1.msra.mxu0 0.0
    %3219 = vmatprep.subr.mxu0 0.0
    %3220 = vmatpush1.msra.mxu0 0.0
    %3221 = vmatprep.subr.mxu0 0.0
    %3222 = vmatpush1.msra.mxu0 0.0
    %3223 = vmatprep.subr.mxu0 0.0
    %3224 = vmatpush1.msra.mxu0 0.0
    %3225 = vmatprep.subr.mxu0 0.0
    %3226 = vmatpush1.msra.mxu0 0.0
    %3227 = vmatprep.subr.mxu0 0.0
    %3228 = vmatpush1.msra.mxu0 0.0
    %3229 = vmatprep.subr.mxu0 0.0
    %3230 = vmatpush1.msra.mxu0 0.0
    %3231 = vmatprep.subr.mxu0 0.0
    %3232 = vmatpush1.msra.mxu0 0.0
    %3233 = vmatprep.subr.mxu0 0.0
    %3234 = vmatpush1.msra.mxu0 0.0
    %3235 = vmatprep.subr.mxu0 0.0
    %3236 = vmatpush1.msra.mxu0 0.0
    %3237 = vmatprep.subr.mxu0 0.0
    %3238 = vmatpush1.msra.mxu0 0.0
    %3239 = vmatprep.subr.mxu0 0.0
    %3240 = vmatpush1.msra.mxu0 0.0
    %3241 = vmatprep.subr.mxu0 0.0
    %3242 = vmatpush1.msra.mxu0 0.0
    %3243 = vmatprep.subr.mxu0 0.0
    %3244 = vmatpush1.msra.mxu0 0.0
    %3245 = vmatprep.subr.mxu0 0.0
    %3246 = vmatpush1.msra.mxu0 0.0
    %3247 = vmatprep.subr.mxu0 0.0
    %3248 = vmatpush1.msra.mxu0 0.0
    %3249 = vmatprep.subr.mxu0 0.0
    %3250 = vmatpush1.msra.mxu0 0.0
    %3251 = vmatprep.subr.mxu0 0.0
    %3252 = vmatpush1.msra.mxu0 0.0
    %3253 = vmatprep.subr.mxu0 0.0
    %3254 = vmatpush1.msra.mxu0 0.0
    %3255 = vmatprep.subr.mxu0 0.0
    %3256 = vmatpush1.msra.mxu0 0.0
    %3257 = vmatprep.subr.mxu0 0.0
    %3258 = vmatpush1.msra.mxu0 0.0
    %3259 = vmatprep.subr.mxu0 0.0
    %3260 = vmatpush1.msra.mxu0 0.0
    %3261 = vmatprep.subr.mxu0 0.0
    %3262 = vmatpush1.msra.mxu0 0.0
    %3263 = vmatprep.subr.mxu0 0.0
    %3264 = vmatpush1.msra.mxu0 0.0
    %3265 = vmatprep.subr.mxu0 0.0
    %3266 = vmatpush1.msra.mxu0 0.0
    %3267 = vmatprep.subr.mxu0 0.0
    %3268 = vmatpush1.msra.mxu0 0.0
    %3269 = vmatprep.mubr.f32.mxu0 0.0
    %3270 = vmatmul.mubr.f32.gmra.mrb[0].mxu0 %v3203
    %v3271 = vpop.f32.mrb[0].mxu0
    %v3272 = vadd.f32 0.0, %v3271
    %v3273 = vpop.f32.mrb[0].mxu0
    %3274 = vdwg.mxu0
    %3277 = vrot.lane.b32.xlu0 %v2892, 8
    %v3278 = vpop.permute.xlu0 %3277
    %3279 = vrot.lane.b32.xlu0 %v2968, 8
    %v3280 = vpop.permute.xlu0 %3279
    %3285 = vrot.lane.b32.xlu0 %v3044, 16
    %v3286 = vpop.permute.xlu0 %3285
    %3287 = vrot.lane.b32.xlu0 %v3120, 16
    %v3288 = vpop.permute.xlu0 %3287
    %3293 = vrot.lane.b32.xlu0 %v3196, 24
    %v3294 = vpop.permute.xlu0 %3293
    %3295 = vrot.lane.b32.xlu0 %v3272, 24
    %v3296 = vpop.permute.xlu0 %3295
    %v3299 = vsel %vm170, %v2740, %v3278
    %v3300 = vsel %vm170, %v2816, %v3280
    %v3301 = vsel %vm1499, %v3299, %v3286
    %v3302 = vsel %vm1499, %v3300, %v3288
    %v3303 = vsel %vm1502, %v3301, %v3294
    %v3304 = vsel %vm1502, %v3302, %v3296
    %v3305 = vlaneseq
    %v3306 = vshrl.u32 %v3305, 7
    %v3307 = vsub.s32 0, %v3306
    %v3308 = vrot.slane %v1865, %v3307
    %v3310 = vsel %vm72, %v3303, 0
    %v3313 = vsel %vm72, %v3304, 0
    %3315 = vmatprep.subr.mxu0 0.0
    %3316 = vmatpush1.msra.mxu0 %v1848
    %3317 = vmatprep.subr.mxu0 0.0
    %3318 = vmatpush1.msra.mxu0 %v1849
    %3319 = vmatprep.subr.mxu0 0.0
    %3320 = vmatpush1.msra.mxu0 %v1850
    %3321 = vmatprep.subr.mxu0 0.0
    %3322 = vmatpush1.msra.mxu0 %v1851
    %3323 = vmatprep.subr.mxu0 0.0
    %3324 = vmatpush1.msra.mxu0 0.0
    %3325 = vmatprep.subr.mxu0 0.0
    %3326 = vmatpush1.msra.mxu0 0.0
    %3327 = vmatprep.subr.mxu0 0.0
    %3328 = vmatpush1.msra.mxu0 0.0
    %3329 = vmatprep.subr.mxu0 0.0
    %3330 = vmatpush1.msra.mxu0 0.0
    %3331 = vmatprep.subr.mxu0 0.0
    %3332 = vmatpush1.msra.mxu0 0.0
    %3333 = vmatprep.subr.mxu0 0.0
    %3334 = vmatpush1.msra.mxu0 0.0
    %3335 = vmatprep.subr.mxu0 0.0
    %3336 = vmatpush1.msra.mxu0 0.0
    %3337 = vmatprep.subr.mxu0 0.0
    %3338 = vmatpush1.msra.mxu0 0.0
    %3339 = vmatprep.subr.mxu0 0.0
    %3340 = vmatpush1.msra.mxu0 0.0
    %3341 = vmatprep.subr.mxu0 0.0
    %3342 = vmatpush1.msra.mxu0 0.0
    %3343 = vmatprep.subr.mxu0 0.0
    %3344 = vmatpush1.msra.mxu0 0.0
    %3345 = vmatprep.subr.mxu0 0.0
    %3346 = vmatpush1.msra.mxu0 0.0
    %3347 = vmatprep.subr.mxu0 0.0
    %3348 = vmatpush1.msra.mxu0 0.0
    %3349 = vmatprep.subr.mxu0 0.0
    %3350 = vmatpush1.msra.mxu0 0.0
    %3351 = vmatprep.subr.mxu0 0.0
    %3352 = vmatpush1.msra.mxu0 0.0
    %3353 = vmatprep.subr.mxu0 0.0
    %3354 = vmatpush1.msra.mxu0 0.0
    %3355 = vmatprep.subr.mxu0 0.0
    %3356 = vmatpush1.msra.mxu0 0.0
    %3357 = vmatprep.subr.mxu0 0.0
    %3358 = vmatpush1.msra.mxu0 0.0
    %3359 = vmatprep.subr.mxu0 0.0
    %3360 = vmatpush1.msra.mxu0 0.0
    %3361 = vmatprep.subr.mxu0 0.0
    %3362 = vmatpush1.msra.mxu0 0.0
    %3363 = vmatprep.subr.mxu0 0.0
    %3364 = vmatpush1.msra.mxu0 0.0
    %3365 = vmatprep.subr.mxu0 0.0
    %3366 = vmatpush1.msra.mxu0 0.0
    %3367 = vmatprep.subr.mxu0 0.0
    %3368 = vmatpush1.msra.mxu0 0.0
    %3369 = vmatprep.subr.mxu0 0.0
    %3370 = vmatpush1.msra.mxu0 0.0
    %3371 = vmatprep.subr.mxu0 0.0
    %3372 = vmatpush1.msra.mxu0 0.0
    %3373 = vmatprep.subr.mxu0 0.0
    %3374 = vmatpush1.msra.mxu0 0.0
    %3375 = vmatprep.subr.mxu0 0.0
    %3376 = vmatpush1.msra.mxu0 0.0
    %3377 = vmatprep.subr.mxu0 0.0
    %3378 = vmatpush1.msra.mxu0 0.0
    %3379 = vmatprep.mubr.f32.mxu0 0.0
    %3380 = vmatmul.mubr.f32.gmra.mrb[0].mxu0 %v3310
    %v3381 = vpop.f32.mrb[0].mxu0
    %v3382 = vadd.f32 %v3308, %v3381
    %v3383 = vpop.f32.mrb[0].mxu0
    %3384 = vmatprep.mubr.f32.mxu0 0.0
    %3385 = vmatmul.mubr.f32.gmra.mrb[0].mxu0 %v3313
    %v3386 = vpop.f32.mrb[0].mxu0
    %v3387 = vadd.f32 %v3308, %v3386
    %v3388 = vpop.f32.mrb[0].mxu0
    %3389 = vdwg.mxu0
    %v3390 = vadd.f32 %v1842, %v3382
    %v3391 = vadd.f32 %v1843, %v3387
    %v3392 = vsel %vm72, %v3390, 0.0
    %3393 = vadd.xlane.f32.xlu0 %v3392
    %v3394 = vpop.xlane.xlu0 %3393
    %v3395 = vsel %vm72, %v3391, 0.0
    %3396 = vadd.xlane.f32.xlu0 %v3395
    %v3397 = vpop.xlane.xlu0 %3396
    %v3398 = vmul.f32 %v3394, %v1598
    %v3399 = vmul.f32 %v3397, %v1598
    %v3400 = vsub.f32 %v3390, %v3398
    %v3401 = vsub.f32 %v3391, %v3399
    %v3402 = vmul.f32 %v3400, %v3400
    %v3403 = vmul.f32 %v3401, %v3401
    %v3404 = vsel %vm72, %v3402, 0.0
    %3405 = vadd.xlane.f32.xlu0 %v3404
    %v3406 = vpop.xlane.xlu0 %3405
    %v3407 = vsel %vm72, %v3403, 0.0
    %3408 = vadd.xlane.f32.xlu0 %v3407
    %v3409 = vpop.xlane.xlu0 %3408
    %v3410 = vmul.f32 %v3406, %v1598
    %v3411 = vmul.f32 %v3409, %v1598
    %v3412 = vadd.f32 %v3410, 1e-05
    %v3413 = vadd.f32 %v3411, 1e-05
    %v3414 = vrsqrt.pop %v3412
    %v3415 = vrsqrt.pop %v3413
    %v3416 = vmul.f32 %v3400, %v3414
    %v3417 = vmul.f32 %v3401, %v3415
    %v3418 = vlaneseq
    %v3419 = vshrl.u32 %v3418, 7
    %v3420 = vsub.s32 0, %v3419
    %v3421 = vrot.slane %v1868, %v3420
    %v3422 = vmul.f32 %v3416, %v3421
    %v3423 = vmul.f32 %v3417, %v3421
    %v3424 = vlaneseq
    %v3425 = vshrl.u32 %v3424, 7
    %v3426 = vsub.s32 0, %v3425
    %v3427 = vrot.slane %v1869, %v3426
    %v3428 = vadd.f32 %v3422, %v3427
    %v3429 = vadd.f32 %v3423, %v3427
    %v3430 = vlaneseq
    %v3431 = vshrl.u32 %v3430, 7
    %v3432 = vsub.s32 0, %v3431
    %v3433 = vrot.slane %v1866, %v3432
    %v3435 = vsel %vm72, %v3428, 0
    %v3438 = vsel %vm72, %v3429, 0
    %3440 = vmatprep.subr.mxu0 0.0
    %3441 = vmatpush1.msra.mxu0 %v1852
    %3442 = vmatprep.subr.mxu0 0.0
    %3443 = vmatpush1.msra.mxu0 %v1853
    %3444 = vmatprep.subr.mxu0 0.0
    %3445 = vmatpush1.msra.mxu0 %v1854
    %3446 = vmatprep.subr.mxu0 0.0
    %3447 = vmatpush1.msra.mxu0 %v1855
    %3448 = vmatprep.subr.mxu0 0.0
    %3449 = vmatpush1.msra.mxu0 0.0
    %3450 = vmatprep.subr.mxu0 0.0
    %3451 = vmatpush1.msra.mxu0 0.0
    %3452 = vmatprep.subr.mxu0 0.0
    %3453 = vmatpush1.msra.mxu0 0.0
    %3454 = vmatprep.subr.mxu0 0.0
    %3455 = vmatpush1.msra.mxu0 0.0
    %3456 = vmatprep.subr.mxu0 0.0
    %3457 = vmatpush1.msra.mxu0 0.0
    %3458 = vmatprep.subr.mxu0 0.0
    %3459 = vmatpush1.msra.mxu0 0.0
    %3460 = vmatprep.subr.mxu0 0.0
    %3461 = vmatpush1.msra.mxu0 0.0
    %3462 = vmatprep.subr.mxu0 0.0
    %3463 = vmatpush1.msra.mxu0 0.0
    %3464 = vmatprep.subr.mxu0 0.0
    %3465 = vmatpush1.msra.mxu0 0.0
    %3466 = vmatprep.subr.mxu0 0.0
    %3467 = vmatpush1.msra.mxu0 0.0
    %3468 = vmatprep.subr.mxu0 0.0
    %3469 = vmatpush1.msra.mxu0 0.0
    %3470 = vmatprep.subr.mxu0 0.0
    %3471 = vmatpush1.msra.mxu0 0.0
    %3472 = vmatprep.subr.mxu0 0.0
    %3473 = vmatpush1.msra.mxu0 0.0
    %3474 = vmatprep.subr.mxu0 0.0
    %3475 = vmatpush1.msra.mxu0 0.0
    %3476 = vmatprep.subr.mxu0 0.0
    %3477 = vmatpush1.msra.mxu0 0.0
    %3478 = vmatprep.subr.mxu0 0.0
    %3479 = vmatpush1.msra.mxu0 0.0
    %3480 = vmatprep.subr.mxu0 0.0
    %3481 = vmatpush1.msra.mxu0 0.0
    %3482 = vmatprep.subr.mxu0 0.0
    %3483 = vmatpush1.msra.mxu0 0.0
    %3484 = vmatprep.subr.mxu0 0.0
    %3485 = vmatpush1.msra.mxu0 0.0
    %3486 = vmatprep.subr.mxu0 0.0
    %3487 = vmatpush1.msra.mxu0 0.0
    %3488 = vmatprep.subr.mxu0 0.0
    %3489 = vmatpush1.msra.mxu0 0.0
    %3490 = vmatprep.subr.mxu0 0.0
    %3491 = vmatpush1.msra.mxu0 0.0
    %3492 = vmatprep.subr.mxu0 0.0
    %3493 = vmatpush1.msra.mxu0 0.0
    %3494 = vmatprep.subr.mxu0 0.0
    %3495 = vmatpush1.msra.mxu0 0.0
    %3496 = vmatprep.subr.mxu0 0.0
    %3497 = vmatpush1.msra.mxu0 0.0
    %3498 = vmatprep.subr.mxu0 0.0
    %3499 = vmatpush1.msra.mxu0 0.0
    %3500 = vmatprep.subr.mxu0 0.0
    %3501 = vmatpush1.msra.mxu0 0.0
    %3502 = vmatprep.subr.mxu0 0.0
    %3503 = vmatpush1.msra.mxu0 0.0
    %3504 = vmatprep.mubr.f32.mxu0 0.0
    %3505 = vmatmul.mubr.f32.gmra.mrb[0].mxu0 %v3435
    %v3506 = vpop.f32.mrb[0].mxu0
    %v3507 = vadd.f32 %v3433, %v3506
    %v3508 = vpop.f32.mrb[0].mxu0
    %3509 = vmatprep.mubr.f32.mxu0 0.0
    %3510 = vmatmul.mubr.f32.gmra.mrb[0].mxu0 %v3438
    %v3511 = vpop.f32.mrb[0].mxu0
    %v3512 = vadd.f32 %v3433, %v3511
    %v3513 = vpop.f32.mrb[0].mxu0
    %3514 = vdwg.mxu0
    %v3515 = vmax.f32 %v3507, 0.0
    %v3516 = vmax.f32 %v3512, 0.0
    %v3517 = vlaneseq
    %v3518 = vshrl.u32 %v3517, 7
    %v3519 = vsub.s32 0, %v3518
    %v3520 = vrot.slane %v1867, %v3519
    %v3522 = vsel %vm1722, %v3515, 0
    %v3525 = vsel %vm1722, %v3516, 0
    %3527 = vmatprep.subr.mxu0 0.0
    %3528 = vmatpush1.msra.mxu0 %v1856
    %3529 = vmatprep.subr.mxu0 0.0
    %3530 = vmatpush1.msra.mxu0 %v1857
    %3531 = vmatprep.subr.mxu0 0.0
    %3532 = vmatpush1.msra.mxu0 %v1858
    %3533 = vmatprep.subr.mxu0 0.0
    %3534 = vmatpush1.msra.mxu0 %v1859
    %3535 = vmatprep.subr.mxu0 0.0
    %3536 = vmatpush1.msra.mxu0 %v1860
    %3537 = vmatprep.subr.mxu0 0.0
    %3538 = vmatpush1.msra.mxu0 %v1861
    %3539 = vmatprep.subr.mxu0 0.0
    %3540 = vmatpush1.msra.mxu0 %v1862
    %3541 = vmatprep.subr.mxu0 0.0
    %3542 = vmatpush1.msra.mxu0 %v1863
    %3543 = vmatprep.subr.mxu0 0.0
    %3544 = vmatpush1.msra.mxu0 0.0
    %3545 = vmatprep.subr.mxu0 0.0
    %3546 = vmatpush1.msra.mxu0 0.0
    %3547 = vmatprep.subr.mxu0 0.0
    %3548 = vmatpush1.msra.mxu0 0.0
    %3549 = vmatprep.subr.mxu0 0.0
    %3550 = vmatpush1.msra.mxu0 0.0
    %3551 = vmatprep.subr.mxu0 0.0
    %3552 = vmatpush1.msra.mxu0 0.0
    %3553 = vmatprep.subr.mxu0 0.0
    %3554 = vmatpush1.msra.mxu0 0.0
    %3555 = vmatprep.subr.mxu0 0.0
    %3556 = vmatpush1.msra.mxu0 0.0
    %3557 = vmatprep.subr.mxu0 0.0
    %3558 = vmatpush1.msra.mxu0 0.0
    %3559 = vmatprep.subr.mxu0 0.0
    %3560 = vmatpush1.msra.mxu0 0.0
    %3561 = vmatprep.subr.mxu0 0.0
    %3562 = vmatpush1.msra.mxu0 0.0
    %3563 = vmatprep.subr.mxu0 0.0
    %3564 = vmatpush1.msra.mxu0 0.0
    %3565 = vmatprep.subr.mxu0 0.0
    %3566 = vmatpush1.msra.mxu0 0.0
    %3567 = vmatprep.subr.mxu0 0.0
    %3568 = vmatpush1.msra.mxu0 0.0
    %3569 = vmatprep.subr.mxu0 0.0
    %3570 = vmatpush1.msra.mxu0 0.0
    %3571 = vmatprep.subr.mxu0 0.0
    %3572 = vmatpush1.msra.mxu0 0.0
    %3573 = vmatprep.subr.mxu0 0.0
    %3574 = vmatpush1.msra.mxu0 0.0
    %3575 = vmatprep.subr.mxu0 0.0
    %3576 = vmatpush1.msra.mxu0 0.0
    %3577 = vmatprep.subr.mxu0 0.0
    %3578 = vmatpush1.msra.mxu0 0.0
    %3579 = vmatprep.subr.mxu0 0.0
    %3580 = vmatpush1.msra.mxu0 0.0
    %3581 = vmatprep.subr.mxu0 0.0
    %3582 = vmatpush1.msra.mxu0 0.0
    %3583 = vmatprep.subr.mxu0 0.0
    %3584 = vmatpush1.msra.mxu0 0.0
    %3585 = vmatprep.subr.mxu0 0.0
    %3586 = vmatpush1.msra.mxu0 0.0
    %3587 = vmatprep.subr.mxu0 0.0
    %3588 = vmatpush1.msra.mxu0 0.0
    %3589 = vmatprep.subr.mxu0 0.0
    %3590 = vmatpush1.msra.mxu0 0.0
    %3591 = vmatprep.mubr.f32.mxu0 0.0
    %3592 = vmatmul.mubr.f32.gmra.mrb[0].mxu0 %v3522
    %v3593 = vpop.f32.mrb[0].mxu0
    %v3594 = vadd.f32 %v3520, %v3593
    %v3595 = vpop.f32.mrb[0].mxu0
    %3596 = vmatprep.mubr.f32.mxu0 0.0
    %3597 = vmatmul.mubr.f32.gmra.mrb[0].mxu0 %v3525
    %v3598 = vpop.f32.mrb[0].mxu0
    %v3599 = vadd.f32 %v3520, %v3598
    %v3600 = vpop.f32.mrb[0].mxu0
    %3601 = vdwg.mxu0
    %v3602 = vadd.f32 %v3428, %v3594
    %v3603 = vadd.f32 %v3429, %v3599
    %v3604 = vsel %vm72, %v3602, 0.0
    %3605 = vadd.xlane.f32.xlu0 %v3604
    %v3606 = vpop.xlane.xlu0 %3605
    %v3607 = vsel %vm72, %v3603, 0.0
    %3608 = vadd.xlane.f32.xlu0 %v3607
    %v3609 = vpop.xlane.xlu0 %3608
    %v3610 = vmul.f32 %v3606, %v1598
    %v3611 = vmul.f32 %v3609, %v1598
    %v3612 = vsub.f32 %v3602, %v3610
    %v3613 = vsub.f32 %v3603, %v3611
    %v3614 = vmul.f32 %v3612, %v3612
    %v3615 = vmul.f32 %v3613, %v3613
    %v3616 = vsel %vm72, %v3614, 0.0
    %3617 = vadd.xlane.f32.xlu0 %v3616
    %v3618 = vpop.xlane.xlu0 %3617
    %v3619 = vsel %vm72, %v3615, 0.0
    %3620 = vadd.xlane.f32.xlu0 %v3619
    %v3621 = vpop.xlane.xlu0 %3620
    %v3622 = vmul.f32 %v3618, %v1598
    %v3623 = vmul.f32 %v3621, %v1598
    %v3624 = vadd.f32 %v3622, 1e-05
    %v3625 = vadd.f32 %v3623, 1e-05
    %v3626 = vrsqrt.pop %v3624
    %v3627 = vrsqrt.pop %v3625
    %v3628 = vmul.f32 %v3612, %v3626
    %v3629 = vmul.f32 %v3613, %v3627
    %v3630 = vlaneseq
    %v3631 = vshrl.u32 %v3630, 7
    %v3632 = vsub.s32 0, %v3631
    %v3633 = vrot.slane %v1870, %v3632
    %v3634 = vmul.f32 %v3628, %v3633
    %v3635 = vmul.f32 %v3629, %v3633
    %v3636 = vlaneseq
    %v3637 = vshrl.u32 %v3636, 7
    %v3638 = vsub.s32 0, %v3637
    %v3639 = vrot.slane %v1871, %v3638
    %v3640 = vadd.f32 %v3634, %v3639
    %v3641 = vadd.f32 %v3635, %v3639
    %v3642 = vld [vmem:[#allocation2 + $0x150] sm:$0x1]
    %v3643 = vld [vmem:[#allocation2 + $0x151] sm:$0x1]
    %v3644 = vsel %vm72, %v3640, 0.0
    %3645 = vadd.xlane.f32.xlu0 %v3644
    %v3646 = vpop.xlane.xlu0 %3645
    %v3647 = vsel %vm72, %v3641, 0.0
    %3648 = vadd.xlane.f32.xlu0 %v3647
    %v3649 = vpop.xlane.xlu0 %3648
    %v3650 = vmul.f32 %v3646, %v1598
    %v3651 = vmul.f32 %v3649, %v1598
    %v3652 = vsub.f32 %v3640, %v3650
    %v3653 = vsub.f32 %v3641, %v3651
    %v3654 = vmul.f32 %v3652, %v3652
    %v3655 = vmul.f32 %v3653, %v3653
    %v3656 = vsel %vm72, %v3654, 0.0
    %3657 = vadd.xlane.f32.xlu0 %v3656
    %v3658 = vpop.xlane.xlu0 %3657
    %v3659 = vsel %vm72, %v3655, 0.0
    %3660 = vadd.xlane.f32.xlu0 %v3659
    %v3661 = vpop.xlane.xlu0 %3660
    %v3662 = vmul.f32 %v3658, %v1598
    %v3663 = vmul.f32 %v3661, %v1598
    %v3664 = vadd.f32 %v3662, 1e-05
    %v3665 = vadd.f32 %v3663, 1e-05
    %v3666 = vrsqrt.pop %v3664
    %v3667 = vrsqrt.pop %v3665
    %v3668 = vmul.f32 %v3652, %v3666
    %v3669 = vmul.f32 %v3653, %v3667
    %v3670 = vlaneseq
    %v3671 = vshrl.u32 %v3670, 7
    %v3672 = vsub.s32 0, %v3671
    %v3673 = vrot.slane %v3642, %v3672
    %v3674 = vmul.f32 %v3668, %v3673
    %v3675 = vmul.f32 %v3669, %v3673
    %v3676 = vlaneseq
    %v3677 = vshrl.u32 %v3676, 7
    %v3678 = vsub.s32 0, %v3677
    %v3679 = vrot.slane %v3643, %v3678
    %v3680 = vadd.f32 %v3674, %v3679
    %v3681 = vadd.f32 %v3675, %v3679
    %v3683 = vrot.slane %v3680, 4
    %3684 = vrot.lane.b32.xlu0 %v3683, 32
    %v3685 = vpop.permute.xlu0 %3684
    %3688 = vrot.lane.b32.xlu0 %v3681, 64
    %v3689 = vpop.permute.xlu0 %3688
    %v3691 = vrot.slane %v3681, 4
    %3692 = vrot.lane.b32.xlu0 %v3691, 96
    %v3693 = vpop.permute.xlu0 %3692
    %v3695 = vsel %vm72, %v3680, %v3685
    %v3696 = vsel %vm1722, %v3695, %v3689
    %vm3697 = vcmask 785408
    %v3698 = vsel %vm3697, %v3696, %v3693
    %3699 = vst [vmem:[%s2] sm:$0xf] %v3698
    // Predicated region
    $region14: #{encoder_forward_pallas.1} parent=1 // pred_check
      _
    $region15: #{encoder_forward_pallas.1} parent=1 // pred_check_branch
      %3701 = sbr.rel (0) target = $region17
    $region16: #{encoder_forward_pallas.1} parent=1 // pred_region
      _
    $region17: #{encoder_forward_pallas.1} parent=1 // pred_fallthru
      _
    // Predicated region
    $region18: #{encoder_forward_pallas.1} parent=1 // pred_check
      _
    $region19: #{encoder_forward_pallas.1} parent=1 // pred_check_branch
      %3703 = sbr.rel (0) target = $region21
    $region20: #{encoder_forward_pallas.1} parent=1 // pred_region
      _
    $region21: #{encoder_forward_pallas.1} parent=1 // pred_fallthru
      _
    %3704 = vsyncpa [#allocation3], 1

</llo_original>
